<compile_context>
chip_gen: v6e
topology: v6e:2x2x1
jax: 0.10.0
libtpu: 0.0.40
codegen_flags: <defaults>
</compile_context>

<pallas_src>
import functools

import jax
import jax.numpy as jnp
from jax import lax
from jax.experimental import pallas as pl
from jax.experimental.pallas import tpu as pltpu


def _silu(v):
    return v * jax.nn.sigmoid(v)


def _layernorm(v, gamma, beta, eps=1e-5):
    mu = jnp.mean(v, axis=-1, keepdims=True)
    var = jnp.mean((v - mu) ** 2, axis=-1, keepdims=True)
    return (v - mu) * lax.rsqrt(var + eps) * gamma + beta


def _update_e_kernel(
    # data refs
    x1_ref, rbf0_ref, sbf_ref, t_ref, idx_kj_ref, idx_ji_ref,
    # packed weight slabs
    wa_ref,   # [H + I + 2*(nb+na)*H, H]  : w_lin | w_up | res_before | res_after
    wb_ref,   # [H + NR, 2H]              : (w_ji|w_kj) | (w_rbf_fused|w_rbf)
    wc_ref,   # [n_sbf + n_t + H, I]      : w_sbf_fused | w_t_fused | w_down
    d_ref,    # [7 + 2*nb + 2*na, H]      : biases + LayerNorm params
    # output
    out_ref,  # [E, 2H] = (layernorm(e1) | layernorm(e2))
    *, H, I, NR, n_sbf, n_t, nb, na, T, E,
):
    f32 = jnp.float32

    def dot(a, b):
        return jnp.dot(a, b, preferred_element_type=f32)

    x1 = x1_ref[...]
    rbf0 = rbf0_ref[...]
    d = d_ref[...]  # small bias/LN slab, loaded once

    # Static row offsets into the slabs (all multiples of 8 for H, I >= 8).
    o_lin, o_up = 0, H
    o_resb = H + I
    o_resa = o_resb + 2 * nb * H
    o_sbf, o_t, o_down = 0, n_sbf, n_sbf + n_t
    b_ji, b_kj, b_lin = d[0:1, :], d[1:2, :], d[2:3, :]
    g0, be0, g1, be1 = d[3:4, :], d[4:5, :], d[5:6, :], d[6:7, :]

    # --- edge stage (fused, wider matmuls) ---
    y = dot(x1, wb_ref[0:H, :])                          # [E, 2H] -> x_ji | x_kj
    rbf_both = dot(rbf0, wb_ref[H:H + NR, :])            # [E, 2H] -> rbf | rbf_e2
    x_ji = _silu(y[:, 0:H] + b_ji)
    x_kj = _silu(y[:, H:2 * H] + b_kj)
    x_kj = x_kj * rbf_both[:, 0:H]
    x_kj = _silu(dot(x_kj, wc_ref[o_down:o_down + H, :]))          # [E, I]

    # --- triplet stage (weight chains pre-fused in the wrapper) ---
    sbf = dot(sbf_ref[...], wc_ref[o_sbf:o_sbf + n_sbf, :])        # [T, I]
    tor = dot(t_ref[...], wc_ref[o_t:o_t + n_t, :])                # [T, I]
    w_ts = sbf * tor                                               # [T, I]

    # gather x_kj[idx_kj] via one-hot [T, E] @ [E, I] on the MXU (exact in f32)
    col_ids = lax.broadcasted_iota(jnp.int32, (T, E), 1)
    onehot_g = (idx_kj_ref[...] == col_ids).astype(f32)
    x_kj_t = dot(onehot_g, x_kj) * w_ts                            # [T, I]

    # scatter-add over idx_ji via one-hot [E, T] @ [T, I]
    row_ids = lax.broadcasted_iota(jnp.int32, (E, T), 0)
    onehot_s = (row_ids == idx_ji_ref[...]).astype(f32)
    x_scat = dot(onehot_s, x_kj_t)                                 # [E, I]

    # --- back to edge stage ---
    e1 = x_ji + _silu(dot(x_scat, wa_ref[o_up:o_up + I, :]))       # [E, H]

    def residual(v, w_off, b_off, l):
        w1 = wa_ref[w_off + 2 * l * H:w_off + (2 * l + 1) * H, :]
        w2 = wa_ref[w_off + (2 * l + 1) * H:w_off + (2 * l + 2) * H, :]
        bb1 = d[b_off + 2 * l:b_off + 2 * l + 1, :]
        bb2 = d[b_off + 2 * l + 1:b_off + 2 * l + 2, :]
        h = _silu(dot(v, w1) + bb1)
        h = _silu(dot(h, w2) + bb2)
        return v + h

    for l in range(nb):
        e1 = residual(e1, o_resb, 7, l)
    e1 = _silu(dot(e1, wa_ref[o_lin:o_lin + H, :]) + b_lin) + x1
    for l in range(na):
        e1 = residual(e1, o_resa, 7 + 2 * nb, l)

    e2 = rbf_both[:, H:2 * H] * e1

    # Single lane-packed output slab: (LN(e1) | LN(e2)) -> one store DMA.
    out_ref[...] = jnp.concatenate(
        [_layernorm(e1, g0, be0), _layernorm(e2, g1, be1)], axis=-1)


def pack_params(p, nb, na):
    """One-time algebraic fusion + slab packing of the UpdateE parameters."""
    H = p["w_kj"].shape[0]
    I = p["w_down"].shape[1]
    NR = p["w_rbf1"].shape[0]
    n_sbf = p["w_sbf1"].shape[0]
    n_t = p["w_t1"].shape[0]

    # Exact fusions of bias-free linear chains.
    w_rbf_f = p["w_rbf1"] @ p["w_rbf2"]              # [NR, H]
    w_sbf_f = p["w_sbf1"] @ p["w_sbf2"]              # [n_sbf, I]
    w_t_f = p["w_t1"] @ p["w_t2"]                    # [n_t, I]
    # Concatenate parallel weights consuming the same input.
    w_jikj = jnp.concatenate([p["w_ji"], p["w_kj"]], axis=1)      # [H, 2H]
    w_rbf_both = jnp.concatenate([w_rbf_f, p["w_rbf"]], axis=1)   # [NR, 2H]

    slab_a = jnp.concatenate([
        p["w_lin"],                                  # rows [0, H)
        p["w_up"],                                   # rows [H, H+I)
        p["res_b_w"].reshape(2 * nb * H, H),         # rows [H+I, H+I+2nb*H)
        p["res_a_w"].reshape(2 * na * H, H),         # rows [..., +2na*H)
    ], axis=0)
    slab_b = jnp.concatenate([w_jikj, w_rbf_both], axis=0)        # [H+NR, 2H]
    slab_c = jnp.concatenate([w_sbf_f, w_t_f, p["w_down"]], axis=0)
    slab_d = jnp.concatenate([
        p["b_ji"], p["b_kj"], p["b_lin"],
        p["g0"], p["be0"], p["g1"], p["be1"],
        p["res_b_b"], p["res_a_b"],
    ], axis=0)                                       # [7 + 2nb + 2na, H]

    return dict(slab_a=slab_a, slab_b=slab_b, slab_c=slab_c, slab_d=slab_d,
                H=H, I=I, NR=NR, n_sbf=n_sbf, n_t=n_t)


def update_e_pallas(x1, rbf0, sbf, t, idx_kj, idx_ji, packed, nb, na):
    E, H = x1.shape
    T = idx_kj.shape[0]
    I, NR = packed["I"], packed["NR"]
    n_sbf, n_t = packed["n_sbf"], packed["n_t"]

    inputs = [
        x1, rbf0, sbf, t,
        idx_kj.astype(jnp.int32).reshape(T, 1),
        idx_ji.astype(jnp.int32).reshape(1, T),
        packed["slab_a"], packed["slab_b"], packed["slab_c"], packed["slab_d"],
    ]

    kernel = functools.partial(
        _update_e_kernel,
        H=H, I=I, NR=NR, n_sbf=n_sbf, n_t=n_t, nb=nb, na=na, T=T, E=E,
    )

    # Advisory cost estimate for XLA scheduling around the custom call.
    flops = 2 * (E * H * 2 * H + E * NR * 2 * H + T * n_sbf * I + T * n_t * I
                 + E * H * I + T * E * I + E * T * I + E * I * H + E * H * H
                 + (nb + na) * 2 * E * H * H)
    transcendentals = E * H * (4 + 2 * (nb + na)) + E * I + 2 * E
    bytes_accessed = 4 * (sum(int(a.size) for a in inputs) + E * 2 * H)

    vmem = lambda: pl.BlockSpec(memory_space=pltpu.MemorySpace.VMEM)
    out = pl.pallas_call(
        kernel,
        out_shape=jax.ShapeDtypeStruct((E, 2 * H), jnp.float32),
        in_specs=[vmem() for _ in inputs],
        out_specs=vmem(),
        compiler_params=pltpu.CompilerParams(vmem_limit_bytes=32 * 1024 * 1024),
        cost_estimate=pl.CostEstimate(
            flops=int(flops),
            transcendentals=int(transcendentals),
            bytes_accessed=int(bytes_accessed)),
    )(*inputs)
    return out[:, :H], out[:, H:]


def update_e_ref(x1, rbf0, sbf, t, idx_kj, idx_ji, p, nb, na):
    """Pure-JAX reference of the PyTorch forward, for verification."""
    silu = jax.nn.silu

    def ln(v, g, b, eps=1e-5):
        mu = v.mean(-1, keepdims=True)
        var = ((v - mu) ** 2).mean(-1, keepdims=True)
        return (v - mu) / jnp.sqrt(var + eps) * g + b

    x_ji = silu(x1 @ p["w_ji"] + p["b_ji"])
    x_kj = silu(x1 @ p["w_kj"] + p["b_kj"])
    rbf = (rbf0 @ p["w_rbf1"]) @ p["w_rbf2"]
    x_kj = x_kj * rbf
    x_kj = silu(x_kj @ p["w_down"])
    sbf_p = (sbf @ p["w_sbf1"]) @ p["w_sbf2"]
    t_p = (t @ p["w_t1"]) @ p["w_t2"]
    x_kj = x_kj[idx_kj] * sbf_p
    x_kj = x_kj * t_p
    x_kj = jax.ops.segment_sum(x_kj, idx_ji, num_segments=x1.shape[0])
    x_kj = silu(x_kj @ p["w_up"])
    e1 = x_ji + x_kj
    for l in range(nb):
        h = silu(e1 @ p["res_b_w"][2 * l] + p["res_b_b"][2 * l])
        h = silu(h @ p["res_b_w"][2 * l + 1] + p["res_b_b"][2 * l + 1])
        e1 = e1 + h
    e1 = silu(e1 @ p["w_lin"] + p["b_lin"]) + x1
    for l in range(na):
        h = silu(e1 @ p["res_a_w"][2 * l] + p["res_a_b"][2 * l])
        h = silu(h @ p["res_a_w"][2 * l + 1] + p["res_a_b"][2 * l + 1])
        e1 = e1 + h
    e2 = (rbf0 @ p["w_rbf"]) * e1
    return ln(e1, p["g0"], p["be0"]), ln(e2, p["g1"], p["be1"])


def init_params(key, H, I, BD, BA, BT, NS, NR, nb, na):
    keys = jax.random.split(key, 16)
    it = iter(keys)

    def w(shape, scale=0.2):
        return jax.random.normal(next(it), shape, jnp.float32) * scale

    zeros = lambda s: jnp.zeros(s, jnp.float32)
    ones = lambda s: jnp.ones(s, jnp.float32)
    # TODO(synk): glorot_orthogonal init is approximated with scaled normals;
    # only the init distribution differs, forward semantics are identical.
    return dict(
        w_rbf1=w((NR, BD)), w_rbf2=w((BD, H)),
        w_sbf1=w((NS * NR, BA)), w_sbf2=w((BA, I)),
        w_t1=w((NS * NS * NR, BT)), w_t2=w((BT, I)),
        w_rbf=w((NR, H)),
        w_kj=w((H, H)), b_kj=zeros((1, H)),
        w_ji=w((H, H)), b_ji=zeros((1, H)),
        w_down=w((H, I)), w_up=w((I, H)),
        res_b_w=w((2 * nb, H, H)), res_b_b=zeros((2 * nb, H)),
        w_lin=w((H, H)), b_lin=zeros((1, H)),
        res_a_w=w((2 * na, H, H)), res_a_b=zeros((2 * na, H)),
        g0=ones((1, H)), be0=zeros((1, H)),
        g1=ones((1, H)), be1=zeros((1, H)),
    )


if __name__ == "__main__":
    # small DimeNet++-style config
    H, I = 32, 16                       # hidden_channels, int_emb_size
    BD, BA, BT = 8, 8, 8                # basis_emb sizes (dist / angle / torsion)
    NS, NR = 4, 8                       # num_spherical, num_radial
    NB, NA = 1, 2                       # num_before_skip, num_after_skip
    E, T = 64, 96                       # num edges, num triplets

    key = jax.random.PRNGKey(0)
    k1, k2, k3, k4, k5, k6, kp = jax.random.split(key, 7)
    x1 = jax.random.normal(k1, (E, H), jnp.float32)
    rbf0 = jax.random.normal(k2, (E, NR), jnp.float32)
    sbf = jax.random.normal(k3, (T, NS * NR), jnp.float32)
    t = jax.random.normal(k4, (T, NS * NS * NR), jnp.float32)
    idx_kj = jax.random.randint(k5, (T,), 0, E, jnp.int32)
    idx_ji = jax.random.randint(k6, (T,), 0, E, jnp.int32)

    params = init_params(kp, H, I, BD, BA, BT, NS, NR, NB, NA)
    packed = pack_params(params, NB, NA)   # one-time fusion + slab packing

    e1, e2 = update_e_pallas(x1, rbf0, sbf, t, idx_kj, idx_ji, packed, NB, NA)
    jax.block_until_ready((e1, e2))

    r1, r2 = update_e_ref(x1, rbf0, sbf, t, idx_kj, idx_ji, params, NB, NA)
    assert jnp.allclose(e1, r1, atol=1e-3, rtol=1e-3), "e1 mismatch"
    assert jnp.allclose(e2, r2, atol=1e-3, rtol=1e-3), "e2 mismatch"
    print("KERNEL_OK")
</pallas_src>

<mosaic_0001>
module attributes {stable_mosaic.version = 11 : i64} {
  func.func @_update_e_kernel(%arg0: memref<64x32xf32, #tpu.memory_space<vmem>>, %arg1: memref<64x8xf32, #tpu.memory_space<vmem>>, %arg2: memref<96x32xf32, #tpu.memory_space<vmem>>, %arg3: memref<96x128xf32, #tpu.memory_space<vmem>>, %arg4: memref<96x1xi32, #tpu.memory_space<vmem>>, %arg5: memref<1x96xi32, #tpu.memory_space<vmem>>, %arg6: memref<240x32xf32, #tpu.memory_space<vmem>>, %arg7: memref<40x64xf32, #tpu.memory_space<vmem>>, %arg8: memref<192x16xf32, #tpu.memory_space<vmem>>, %arg9: memref<13x32xf32, #tpu.memory_space<vmem>>, %arg10: memref<64x64xf32, #tpu.memory_space<vmem>>) attributes {dimension_semantics = [], scalar_prefetch = 0 : i64, scratch_operands = 0 : i64, tpu.core_type = #tpu.core_type<tc>} {
    %c0 = arith.constant 0 : index
    %c0_0 = arith.constant 0 : index
    %0 = vector.load %arg0[%c0, %c0_0] : memref<64x32xf32, #tpu.memory_space<vmem>>, vector<64x32xf32>
    %c0_1 = arith.constant 0 : index
    %c0_2 = arith.constant 0 : index
    %1 = vector.load %arg1[%c0_1, %c0_2] : memref<64x8xf32, #tpu.memory_space<vmem>>, vector<64x8xf32>
    %c0_3 = arith.constant 0 : index
    %c0_4 = arith.constant 0 : index
    %2 = vector.load %arg9[%c0_3, %c0_4] : memref<13x32xf32, #tpu.memory_space<vmem>>, vector<13x32xf32>
    %3 = vector.extract_strided_slice %2 {offsets = [0, 0], sizes = [1, 32], strides = [1, 1]} : vector<13x32xf32> to vector<1x32xf32>
    %4 = vector.extract_strided_slice %2 {offsets = [1, 0], sizes = [1, 32], strides = [1, 1]} : vector<13x32xf32> to vector<1x32xf32>
    %5 = vector.extract_strided_slice %2 {offsets = [2, 0], sizes = [1, 32], strides = [1, 1]} : vector<13x32xf32> to vector<1x32xf32>
    %6 = vector.extract_strided_slice %2 {offsets = [3, 0], sizes = [1, 32], strides = [1, 1]} : vector<13x32xf32> to vector<1x32xf32>
    %7 = vector.extract_strided_slice %2 {offsets = [4, 0], sizes = [1, 32], strides = [1, 1]} : vector<13x32xf32> to vector<1x32xf32>
    %8 = vector.extract_strided_slice %2 {offsets = [5, 0], sizes = [1, 32], strides = [1, 1]} : vector<13x32xf32> to vector<1x32xf32>
    %9 = vector.extract_strided_slice %2 {offsets = [6, 0], sizes = [1, 32], strides = [1, 1]} : vector<13x32xf32> to vector<1x32xf32>
    %c0_5 = arith.constant 0 : index
    %c0_6 = arith.constant 0 : index
    %10 = vector.load %arg7[%c0_5, %c0_6] : memref<40x64xf32, #tpu.memory_space<vmem>>, vector<32x64xf32>
    %cst = arith.constant dense<0.000000e+00> : vector<64x64xf32>
    %11 = tpu.matmul %0, %10, %cst {dimension_numbers = #tpu.dot_dimension_numbers<[1], [0], [0], [1], [0, 0, 1, 1], [], []>} : vector<64x32xf32>, vector<32x64xf32>, vector<64x64xf32> -> vector<64x64xf32>
    %c32 = arith.constant 32 : index
    %c0_7 = arith.constant 0 : index
    %12 = vector.load %arg7[%c32, %c0_7] : memref<40x64xf32, #tpu.memory_space<vmem>>, vector<8x64xf32>
    %cst_8 = arith.constant dense<0.000000e+00> : vector<64x64xf32>
    %13 = tpu.matmul %1, %12, %cst_8 {dimension_numbers = #tpu.dot_dimension_numbers<[1], [0], [0], [1], [0, 0, 1, 1], [], []>} : vector<64x8xf32>, vector<8x64xf32>, vector<64x64xf32> -> vector<64x64xf32>
    %14 = vector.extract_strided_slice %11 {offsets = [0, 0], sizes = [64, 32], strides = [1, 1]} : vector<64x64xf32> to vector<64x32xf32>
    %15 = vector.broadcast %3 : vector<1x32xf32> to vector<64x32xf32>
    %16 = arith.addf %14, %15 : vector<64x32xf32>
    %17 = arith.negf %16 : vector<64x32xf32>
    %18 = math.exp %17 : vector<64x32xf32>
    %cst_9 = arith.constant 1.000000e+00 : f32
    %19 = vector.broadcast %cst_9 : f32 to vector<64x32xf32>
    %20 = arith.addf %19, %18 : vector<64x32xf32>
    %21 = arith.divf %19, %20 : vector<64x32xf32>
    %22 = arith.mulf %16, %21 : vector<64x32xf32>
    %23 = vector.extract_strided_slice %11 {offsets = [0, 32], sizes = [64, 32], strides = [1, 1]} : vector<64x64xf32> to vector<64x32xf32>
    %24 = vector.broadcast %4 : vector<1x32xf32> to vector<64x32xf32>
    %25 = arith.addf %23, %24 : vector<64x32xf32>
    %26 = arith.negf %25 : vector<64x32xf32>
    %27 = math.exp %26 : vector<64x32xf32>
    %cst_10 = arith.constant 1.000000e+00 : f32
    %28 = vector.broadcast %cst_10 : f32 to vector<64x32xf32>
    %29 = arith.addf %28, %27 : vector<64x32xf32>
    %30 = arith.divf %28, %29 : vector<64x32xf32>
    %31 = arith.mulf %25, %30 : vector<64x32xf32>
    %32 = vector.extract_strided_slice %13 {offsets = [0, 0], sizes = [64, 32], strides = [1, 1]} : vector<64x64xf32> to vector<64x32xf32>
    %33 = arith.mulf %31, %32 : vector<64x32xf32>
    %c160 = arith.constant 160 : index
    %c0_11 = arith.constant 0 : index
    %34 = vector.load %arg8[%c160, %c0_11] : memref<192x16xf32, #tpu.memory_space<vmem>>, vector<32x16xf32>
    %cst_12 = arith.constant dense<0.000000e+00> : vector<64x16xf32>
    %35 = tpu.matmul %33, %34, %cst_12 {dimension_numbers = #tpu.dot_dimension_numbers<[1], [0], [0], [1], [0, 0, 1, 1], [], []>} : vector<64x32xf32>, vector<32x16xf32>, vector<64x16xf32> -> vector<64x16xf32>
    %36 = arith.negf %35 : vector<64x16xf32>
    %37 = math.exp %36 : vector<64x16xf32>
    %cst_13 = arith.constant 1.000000e+00 : f32
    %38 = vector.broadcast %cst_13 : f32 to vector<64x16xf32>
    %39 = arith.addf %38, %37 : vector<64x16xf32>
    %40 = arith.divf %38, %39 : vector<64x16xf32>
    %41 = arith.mulf %35, %40 : vector<64x16xf32>
    %c0_14 = arith.constant 0 : index
    %c0_15 = arith.constant 0 : index
    %42 = vector.load %arg2[%c0_14, %c0_15] : memref<96x32xf32, #tpu.memory_space<vmem>>, vector<96x32xf32>
    %c0_16 = arith.constant 0 : index
    %c0_17 = arith.constant 0 : index
    %43 = vector.load %arg8[%c0_16, %c0_17] : memref<192x16xf32, #tpu.memory_space<vmem>>, vector<32x16xf32>
    %cst_18 = arith.constant dense<0.000000e+00> : vector<96x16xf32>
    %44 = tpu.matmul %42, %43, %cst_18 {dimension_numbers = #tpu.dot_dimension_numbers<[1], [0], [0], [1], [0, 0, 1, 1], [], []>} : vector<96x32xf32>, vector<32x16xf32>, vector<96x16xf32> -> vector<96x16xf32>
    %c0_19 = arith.constant 0 : index
    %c0_20 = arith.constant 0 : index
    %45 = vector.load %arg3[%c0_19, %c0_20] : memref<96x128xf32, #tpu.memory_space<vmem>>, vector<96x128xf32>
    %c32_21 = arith.constant 32 : index
    %c0_22 = arith.constant 0 : index
    %46 = vector.load %arg8[%c32_21, %c0_22] : memref<192x16xf32, #tpu.memory_space<vmem>>, vector<128x16xf32>
    %cst_23 = arith.constant dense<0.000000e+00> : vector<96x16xf32>
    %47 = tpu.matmul %45, %46, %cst_23 {dimension_numbers = #tpu.dot_dimension_numbers<[1], [0], [0], [1], [0, 0, 1, 1], [], []>} : vector<96x128xf32>, vector<128x16xf32>, vector<96x16xf32> -> vector<96x16xf32>
    %48 = arith.mulf %44, %47 : vector<96x16xf32>
    %49 = tpu.iota {dimensions = array<i32: 1>} : vector<96x64xi32>
    %c0_24 = arith.constant 0 : index
    %c0_25 = arith.constant 0 : index
    %50 = vector.load %arg4[%c0_24, %c0_25] : memref<96x1xi32, #tpu.memory_space<vmem>>, vector<96x1xi32>
    %51 = vector.broadcast %50 : vector<96x1xi32> to vector<96x64xi32>
    %52 = arith.cmpi eq, %51, %49 : vector<96x64xi32>
    %53 = arith.extui %52 : vector<96x64xi1> to vector<96x64xi32>
    %54 = arith.sitofp %53 : vector<96x64xi32> to vector<96x64xf32>
    %cst_26 = arith.constant dense<0.000000e+00> : vector<96x16xf32>
    %55 = tpu.matmul %54, %41, %cst_26 {dimension_numbers = #tpu.dot_dimension_numbers<[1], [0], [0], [1], [0, 0, 1, 1], [], []>} : vector<96x64xf32>, vector<64x16xf32>, vector<96x16xf32> -> vector<96x16xf32>
    %56 = arith.mulf %55, %48 : vector<96x16xf32>
    %57 = tpu.iota {dimensions = array<i32: 0>} : vector<64x96xi32>
    %c0_27 = arith.constant 0 : index
    %c0_28 = arith.constant 0 : index
    %58 = vector.load %arg5[%c0_27, %c0_28] : memref<1x96xi32, #tpu.memory_space<vmem>>, vector<1x96xi32>
    %59 = vector.broadcast %58 : vector<1x96xi32> to vector<64x96xi32>
    %60 = arith.cmpi eq, %57, %59 : vector<64x96xi32>
    %61 = arith.extui %60 : vector<64x96xi1> to vector<64x96xi32>
    %62 = arith.sitofp %61 : vector<64x96xi32> to vector<64x96xf32>
    %cst_29 = arith.constant dense<0.000000e+00> : vector<64x16xf32>
    %63 = tpu.matmul %62, %56, %cst_29 {dimension_numbers = #tpu.dot_dimension_numbers<[1], [0], [0], [1], [0, 0, 1, 1], [], []>} : vector<64x96xf32>, vector<96x16xf32>, vector<64x16xf32> -> vector<64x16xf32>
    %c32_30 = arith.constant 32 : index
    %c0_31 = arith.constant 0 : index
    %64 = vector.load %arg6[%c32_30, %c0_31] : memref<240x32xf32, #tpu.memory_space<vmem>>, vector<16x32xf32>
    %cst_32 = arith.constant dense<0.000000e+00> : vector<64x32xf32>
    %65 = tpu.matmul %63, %64, %cst_32 {dimension_numbers = #tpu.dot_dimension_numbers<[1], [0], [0], [1], [0, 0, 1, 1], [], []>} : vector<64x16xf32>, vector<16x32xf32>, vector<64x32xf32> -> vector<64x32xf32>
    %66 = arith.negf %65 : vector<64x32xf32>
    %67 = math.exp %66 : vector<64x32xf32>
    %cst_33 = arith.constant 1.000000e+00 : f32
    %68 = vector.broadcast %cst_33 : f32 to vector<64x32xf32>
    %69 = arith.addf %68, %67 : vector<64x32xf32>
    %70 = arith.divf %68, %69 : vector<64x32xf32>
    %71 = arith.mulf %65, %70 : vector<64x32xf32>
    %72 = arith.addf %22, %71 : vector<64x32xf32>
    %c48 = arith.constant 48 : index
    %c0_34 = arith.constant 0 : index
    %73 = vector.load %arg6[%c48, %c0_34] : memref<240x32xf32, #tpu.memory_space<vmem>>, vector<32x32xf32>
    %c80 = arith.constant 80 : index
    %c0_35 = arith.constant 0 : index
    %74 = vector.load %arg6[%c80, %c0_35] : memref<240x32xf32, #tpu.memory_space<vmem>>, vector<32x32xf32>
    %75 = vector.extract_strided_slice %2 {offsets = [7, 0], sizes = [1, 32], strides = [1, 1]} : vector<13x32xf32> to vector<1x32xf32>
    %76 = vector.extract_strided_slice %2 {offsets = [8, 0], sizes = [1, 32], strides = [1, 1]} : vector<13x32xf32> to vector<1x32xf32>
    %cst_36 = arith.constant dense<0.000000e+00> : vector<64x32xf32>
    %77 = tpu.matmul %72, %73, %cst_36 {dimension_numbers = #tpu.dot_dimension_numbers<[1], [0], [0], [1], [0, 0, 1, 1], [], []>} : vector<64x32xf32>, vector<32x32xf32>, vector<64x32xf32> -> vector<64x32xf32>
    %78 = vector.broadcast %75 : vector<1x32xf32> to vector<64x32xf32>
    %79 = arith.addf %77, %78 : vector<64x32xf32>
    %80 = arith.negf %79 : vector<64x32xf32>
    %81 = math.exp %80 : vector<64x32xf32>
    %cst_37 = arith.constant 1.000000e+00 : f32
    %82 = vector.broadcast %cst_37 : f32 to vector<64x32xf32>
    %83 = arith.addf %82, %81 : vector<64x32xf32>
    %84 = arith.divf %82, %83 : vector<64x32xf32>
    %85 = arith.mulf %79, %84 : vector<64x32xf32>
    %cst_38 = arith.constant dense<0.000000e+00> : vector<64x32xf32>
    %86 = tpu.matmul %85, %74, %cst_38 {dimension_numbers = #tpu.dot_dimension_numbers<[1], [0], [0], [1], [0, 0, 1, 1], [], []>} : vector<64x32xf32>, vector<32x32xf32>, vector<64x32xf32> -> vector<64x32xf32>
    %87 = vector.broadcast %76 : vector<1x32xf32> to vector<64x32xf32>
    %88 = arith.addf %86, %87 : vector<64x32xf32>
    %89 = arith.negf %88 : vector<64x32xf32>
    %90 = math.exp %89 : vector<64x32xf32>
    %cst_39 = arith.constant 1.000000e+00 : f32
    %91 = vector.broadcast %cst_39 : f32 to vector<64x32xf32>
    %92 = arith.addf %91, %90 : vector<64x32xf32>
    %93 = arith.divf %91, %92 : vector<64x32xf32>
    %94 = arith.mulf %88, %93 : vector<64x32xf32>
    %95 = arith.addf %72, %94 : vector<64x32xf32>
    %c0_40 = arith.constant 0 : index
    %c0_41 = arith.constant 0 : index
    %96 = vector.load %arg6[%c0_40, %c0_41] : memref<240x32xf32, #tpu.memory_space<vmem>>, vector<32x32xf32>
    %cst_42 = arith.constant dense<0.000000e+00> : vector<64x32xf32>
    %97 = tpu.matmul %95, %96, %cst_42 {dimension_numbers = #tpu.dot_dimension_numbers<[1], [0], [0], [1], [0, 0, 1, 1], [], []>} : vector<64x32xf32>, vector<32x32xf32>, vector<64x32xf32> -> vector<64x32xf32>
    %98 = vector.broadcast %5 : vector<1x32xf32> to vector<64x32xf32>
    %99 = arith.addf %97, %98 : vector<64x32xf32>
    %100 = arith.negf %99 : vector<64x32xf32>
    %101 = math.exp %100 : vector<64x32xf32>
    %cst_43 = arith.constant 1.000000e+00 : f32
    %102 = vector.broadcast %cst_43 : f32 to vector<64x32xf32>
    %103 = arith.addf %102, %101 : vector<64x32xf32>
    %104 = arith.divf %102, %103 : vector<64x32xf32>
    %105 = arith.mulf %99, %104 : vector<64x32xf32>
    %106 = arith.addf %105, %0 : vector<64x32xf32>
    %c112 = arith.constant 112 : index
    %c0_44 = arith.constant 0 : index
    %107 = vector.load %arg6[%c112, %c0_44] : memref<240x32xf32, #tpu.memory_space<vmem>>, vector<32x32xf32>
    %c144 = arith.constant 144 : index
    %c0_45 = arith.constant 0 : index
    %108 = vector.load %arg6[%c144, %c0_45] : memref<240x32xf32, #tpu.memory_space<vmem>>, vector<32x32xf32>
    %109 = vector.extract_strided_slice %2 {offsets = [9, 0], sizes = [1, 32], strides = [1, 1]} : vector<13x32xf32> to vector<1x32xf32>
    %110 = vector.extract_strided_slice %2 {offsets = [10, 0], sizes = [1, 32], strides = [1, 1]} : vector<13x32xf32> to vector<1x32xf32>
    %cst_46 = arith.constant dense<0.000000e+00> : vector<64x32xf32>
    %111 = tpu.matmul %106, %107, %cst_46 {dimension_numbers = #tpu.dot_dimension_numbers<[1], [0], [0], [1], [0, 0, 1, 1], [], []>} : vector<64x32xf32>, vector<32x32xf32>, vector<64x32xf32> -> vector<64x32xf32>
    %112 = vector.broadcast %109 : vector<1x32xf32> to vector<64x32xf32>
    %113 = arith.addf %111, %112 : vector<64x32xf32>
    %114 = arith.negf %113 : vector<64x32xf32>
    %115 = math.exp %114 : vector<64x32xf32>
    %cst_47 = arith.constant 1.000000e+00 : f32
    %116 = vector.broadcast %cst_47 : f32 to vector<64x32xf32>
    %117 = arith.addf %116, %115 : vector<64x32xf32>
    %118 = arith.divf %116, %117 : vector<64x32xf32>
    %119 = arith.mulf %113, %118 : vector<64x32xf32>
    %cst_48 = arith.constant dense<0.000000e+00> : vector<64x32xf32>
    %120 = tpu.matmul %119, %108, %cst_48 {dimension_numbers = #tpu.dot_dimension_numbers<[1], [0], [0], [1], [0, 0, 1, 1], [], []>} : vector<64x32xf32>, vector<32x32xf32>, vector<64x32xf32> -> vector<64x32xf32>
    %121 = vector.broadcast %110 : vector<1x32xf32> to vector<64x32xf32>
    %122 = arith.addf %120, %121 : vector<64x32xf32>
    %123 = arith.negf %122 : vector<64x32xf32>
    %124 = math.exp %123 : vector<64x32xf32>
    %cst_49 = arith.constant 1.000000e+00 : f32
    %125 = vector.broadcast %cst_49 : f32 to vector<64x32xf32>
    %126 = arith.addf %125, %124 : vector<64x32xf32>
    %127 = arith.divf %125, %126 : vector<64x32xf32>
    %128 = arith.mulf %122, %127 : vector<64x32xf32>
    %129 = arith.addf %106, %128 : vector<64x32xf32>
    %c176 = arith.constant 176 : index
    %c0_50 = arith.constant 0 : index
    %130 = vector.load %arg6[%c176, %c0_50] : memref<240x32xf32, #tpu.memory_space<vmem>>, vector<32x32xf32>
    %c208 = arith.constant 208 : index
    %c0_51 = arith.constant 0 : index
    %131 = vector.load %arg6[%c208, %c0_51] : memref<240x32xf32, #tpu.memory_space<vmem>>, vector<32x32xf32>
    %132 = vector.extract_strided_slice %2 {offsets = [11, 0], sizes = [1, 32], strides = [1, 1]} : vector<13x32xf32> to vector<1x32xf32>
    %133 = vector.extract_strided_slice %2 {offsets = [12, 0], sizes = [1, 32], strides = [1, 1]} : vector<13x32xf32> to vector<1x32xf32>
    %cst_52 = arith.constant dense<0.000000e+00> : vector<64x32xf32>
    %134 = tpu.matmul %129, %130, %cst_52 {dimension_numbers = #tpu.dot_dimension_numbers<[1], [0], [0], [1], [0, 0, 1, 1], [], []>} : vector<64x32xf32>, vector<32x32xf32>, vector<64x32xf32> -> vector<64x32xf32>
    %135 = vector.broadcast %132 : vector<1x32xf32> to vector<64x32xf32>
    %136 = arith.addf %134, %135 : vector<64x32xf32>
    %137 = arith.negf %136 : vector<64x32xf32>
    %138 = math.exp %137 : vector<64x32xf32>
    %cst_53 = arith.constant 1.000000e+00 : f32
    %139 = vector.broadcast %cst_53 : f32 to vector<64x32xf32>
    %140 = arith.addf %139, %138 : vector<64x32xf32>
    %141 = arith.divf %139, %140 : vector<64x32xf32>
    %142 = arith.mulf %136, %141 : vector<64x32xf32>
    %cst_54 = arith.constant dense<0.000000e+00> : vector<64x32xf32>
    %143 = tpu.matmul %142, %131, %cst_54 {dimension_numbers = #tpu.dot_dimension_numbers<[1], [0], [0], [1], [0, 0, 1, 1], [], []>} : vector<64x32xf32>, vector<32x32xf32>, vector<64x32xf32> -> vector<64x32xf32>
    %144 = vector.broadcast %133 : vector<1x32xf32> to vector<64x32xf32>
    %145 = arith.addf %143, %144 : vector<64x32xf32>
    %146 = arith.negf %145 : vector<64x32xf32>
    %147 = math.exp %146 : vector<64x32xf32>
    %cst_55 = arith.constant 1.000000e+00 : f32
    %148 = vector.broadcast %cst_55 : f32 to vector<64x32xf32>
    %149 = arith.addf %148, %147 : vector<64x32xf32>
    %150 = arith.divf %148, %149 : vector<64x32xf32>
    %151 = arith.mulf %145, %150 : vector<64x32xf32>
    %152 = arith.addf %129, %151 : vector<64x32xf32>
    %153 = vector.extract_strided_slice %13 {offsets = [0, 32], sizes = [64, 32], strides = [1, 1]} : vector<64x64xf32> to vector<64x32xf32>
    %154 = arith.mulf %153, %152 : vector<64x32xf32>
    %cst_56 = arith.constant dense<0.000000e+00> : vector<64xf32>
    %155 = vector.multi_reduction <add>, %152, %cst_56 [1] : vector<64x32xf32> to vector<64xf32>
    %156 = vector.shape_cast %155 : vector<64xf32> to vector<64x1xf32>
    %cst_57 = arith.constant 3.200000e+01 : f32
    %157 = vector.broadcast %cst_57 : f32 to vector<64x1xf32>
    %158 = arith.divf %156, %157 : vector<64x1xf32>
    %159 = vector.broadcast %158 : vector<64x1xf32> to vector<64x32xf32>
    %160 = arith.subf %152, %159 : vector<64x32xf32>
    %161 = arith.mulf %160, %160 : vector<64x32xf32>
    %cst_58 = arith.constant dense<0.000000e+00> : vector<64xf32>
    %162 = vector.multi_reduction <add>, %161, %cst_58 [1] : vector<64x32xf32> to vector<64xf32>
    %163 = vector.shape_cast %162 : vector<64xf32> to vector<64x1xf32>
    %cst_59 = arith.constant 3.200000e+01 : f32
    %164 = vector.broadcast %cst_59 : f32 to vector<64x1xf32>
    %165 = arith.divf %163, %164 : vector<64x1xf32>
    %166 = vector.broadcast %158 : vector<64x1xf32> to vector<64x32xf32>
    %167 = arith.subf %152, %166 : vector<64x32xf32>
    %cst_60 = arith.constant 9.99999974E-6 : f32
    %168 = vector.broadcast %cst_60 : f32 to vector<64x1xf32>
    %169 = arith.addf %165, %168 : vector<64x1xf32>
    %170 = math.rsqrt %169 : vector<64x1xf32>
    %171 = vector.broadcast %170 : vector<64x1xf32> to vector<64x32xf32>
    %172 = arith.mulf %167, %171 : vector<64x32xf32>
    %173 = vector.broadcast %6 : vector<1x32xf32> to vector<64x32xf32>
    %174 = arith.mulf %172, %173 : vector<64x32xf32>
    %175 = vector.broadcast %7 : vector<1x32xf32> to vector<64x32xf32>
    %176 = arith.addf %174, %175 : vector<64x32xf32>
    %cst_61 = arith.constant dense<0.000000e+00> : vector<64xf32>
    %177 = vector.multi_reduction <add>, %154, %cst_61 [1] : vector<64x32xf32> to vector<64xf32>
    %178 = vector.shape_cast %177 : vector<64xf32> to vector<64x1xf32>
    %cst_62 = arith.constant 3.200000e+01 : f32
    %179 = vector.broadcast %cst_62 : f32 to vector<64x1xf32>
    %180 = arith.divf %178, %179 : vector<64x1xf32>
    %181 = vector.broadcast %180 : vector<64x1xf32> to vector<64x32xf32>
    %182 = arith.subf %154, %181 : vector<64x32xf32>
    %183 = arith.mulf %182, %182 : vector<64x32xf32>
    %cst_63 = arith.constant dense<0.000000e+00> : vector<64xf32>
    %184 = vector.multi_reduction <add>, %183, %cst_63 [1] : vector<64x32xf32> to vector<64xf32>
    %185 = vector.shape_cast %184 : vector<64xf32> to vector<64x1xf32>
    %cst_64 = arith.constant 3.200000e+01 : f32
    %186 = vector.broadcast %cst_64 : f32 to vector<64x1xf32>
    %187 = arith.divf %185, %186 : vector<64x1xf32>
    %188 = vector.broadcast %180 : vector<64x1xf32> to vector<64x32xf32>
    %189 = arith.subf %154, %188 : vector<64x32xf32>
    %cst_65 = arith.constant 9.99999974E-6 : f32
    %190 = vector.broadcast %cst_65 : f32 to vector<64x1xf32>
    %191 = arith.addf %187, %190 : vector<64x1xf32>
    %192 = math.rsqrt %191 : vector<64x1xf32>
    %193 = vector.broadcast %192 : vector<64x1xf32> to vector<64x32xf32>
    %194 = arith.mulf %189, %193 : vector<64x32xf32>
    %195 = vector.broadcast %8 : vector<1x32xf32> to vector<64x32xf32>
    %196 = arith.mulf %194, %195 : vector<64x32xf32>
    %197 = vector.broadcast %9 : vector<1x32xf32> to vector<64x32xf32>
    %198 = arith.addf %196, %197 : vector<64x32xf32>
    %199 = tpu.concatenate %176, %198 in 1 : vector<64x32xf32>, vector<64x32xf32> -> vector<64x64xf32>
    %c0_66 = arith.constant 0 : index
    %c0_67 = arith.constant 0 : index
    %200 = vector.load %arg10[%c0_66, %c0_67] : memref<64x64xf32, #tpu.memory_space<vmem>>, vector<64x64xf32>
    tpu.vector_store %arg10[%c0_66, %c0_67], %199 {strides = array<i32>} : memref<64x64xf32, #tpu.memory_space<vmem>>, vector<64x64xf32>,
    return
  }
}

</mosaic_0001>

<llo_original>
// kernel: tpu_custom_call.1
$region0: #{tpu_custom_call.1}
  #allocation0 [shape = 'u32[]', space=smem, size = 0x4, offset = 0x4, fixed_abs, tag = 'smem constant byte address 0x4 - core index']
  #allocation1 [shape = 'u32[144,128]{1,0:T(1,128)}', space=vmem, size = 0x12000, scoped, tag = 'internal scratch']
  %s0 = inlined_call_operand.vmem [shape: f32[64,32], index: 0, kind: input, shape index: {}]
  %s1 = inlined_call_operand.vmem [shape: f32[64,8], index: 1, kind: input, shape index: {}]
  %s2 = inlined_call_operand.vmem [shape: f32[96,32], index: 2, kind: input, shape index: {}]
  %s3 = inlined_call_operand.vmem [shape: f32[96,128], index: 3, kind: input, shape index: {}]
  %s4 = inlined_call_operand.vmem [shape: s32[96,1], index: 4, kind: input, shape index: {}]
  %s5 = inlined_call_operand.vmem [shape: s32[1,96], index: 5, kind: input, shape index: {}]
  %s6 = inlined_call_operand.vmem [shape: f32[240,32], index: 6, kind: input, shape index: {}]
  %s7 = inlined_call_operand.vmem [shape: f32[40,64], index: 7, kind: input, shape index: {}]
  %s8 = inlined_call_operand.vmem [shape: f32[192,16], index: 8, kind: input, shape index: {}]
  %s9 = inlined_call_operand.vmem [shape: f32[13,32], index: 9, kind: input, shape index: {}]
  %s10 = inlined_call_operand.hbm [shape: f32[64,64], index: 10, kind: output, shape index: {}]
  %s11 = sld [smem:[#allocation0]]
  $region50: #{tpu_custom_call.1} parent=0
    _
  %s13 = ssub.s32 1, %s11
  %s14 = scalar_select 0, %s13, %s11
  $region1: #{tpu_custom_call.1} parent=0
    #allocation2 [shape = 'u8[32768]{0}', space=vmem, size = 0x8000, scoped, tag = 'output window, operand 0, single buffered']
    #allocation3 [shape = 's32[1]{0}', space=sflag, size = 0x4, scoped, tag = 'scoped memory for tpu_custom_call.1']
    %15 = vsyncpa [#allocation3], 0
    // Predicated region
    $region2: #{tpu_custom_call.1} parent=1 // pred_check
      _
    $region3: #{tpu_custom_call.1} parent=1 // pred_check_branch
      %17 = sbr.rel (0) target = $region5
    $region4: #{tpu_custom_call.1} parent=1 // pred_region
      _
    $region5: #{tpu_custom_call.1} parent=1 // pred_fallthru
      _
    // Predicated region
    $region6: #{tpu_custom_call.1} parent=1 // pred_check
      _
    $region7: #{tpu_custom_call.1} parent=1 // pred_check_branch
      %19 = sbr.rel (0) target = $region9
    $region8: #{tpu_custom_call.1} parent=1 // pred_region
      _
    $region9: #{tpu_custom_call.1} parent=1 // pred_fallthru
      _
    // Predicated region
    $region10: #{tpu_custom_call.1} parent=1 // pred_check
      _
    $region11: #{tpu_custom_call.1} parent=1 // pred_check_branch
      %21 = sbr.rel (0) target = $region13
    $region12: #{tpu_custom_call.1} parent=1 // pred_region
      _
    $region13: #{tpu_custom_call.1} parent=1 // pred_fallthru
      _
    // Predicated region
    $region14: #{tpu_custom_call.1} parent=1 // pred_check
      _
    $region15: #{tpu_custom_call.1} parent=1 // pred_check_branch
      %23 = sbr.rel (0) target = $region17
    $region16: #{tpu_custom_call.1} parent=1 // pred_region
      _
    $region17: #{tpu_custom_call.1} parent=1 // pred_fallthru
      _
    // Predicated region
    $region18: #{tpu_custom_call.1} parent=1 // pred_check
      _
    $region19: #{tpu_custom_call.1} parent=1 // pred_check_branch
      %25 = sbr.rel (0) target = $region21
    $region20: #{tpu_custom_call.1} parent=1 // pred_region
      _
    $region21: #{tpu_custom_call.1} parent=1 // pred_fallthru
      _
    // Predicated region
    $region22: #{tpu_custom_call.1} parent=1 // pred_check
      _
    $region23: #{tpu_custom_call.1} parent=1 // pred_check_branch
      %27 = sbr.rel (0) target = $region25
    $region24: #{tpu_custom_call.1} parent=1 // pred_region
      _
    $region25: #{tpu_custom_call.1} parent=1 // pred_fallthru
      _
    // Predicated region
    $region26: #{tpu_custom_call.1} parent=1 // pred_check
      _
    $region27: #{tpu_custom_call.1} parent=1 // pred_check_branch
      %29 = sbr.rel (0) target = $region29
    $region28: #{tpu_custom_call.1} parent=1 // pred_region
      _
    $region29: #{tpu_custom_call.1} parent=1 // pred_fallthru
      _
    // Predicated region
    $region30: #{tpu_custom_call.1} parent=1 // pred_check
      _
    $region31: #{tpu_custom_call.1} parent=1 // pred_check_branch
      %31 = sbr.rel (0) target = $region33
    $region32: #{tpu_custom_call.1} parent=1 // pred_region
      _
    $region33: #{tpu_custom_call.1} parent=1 // pred_fallthru
      _
    // Predicated region
    $region34: #{tpu_custom_call.1} parent=1 // pred_check
      _
    $region35: #{tpu_custom_call.1} parent=1 // pred_check_branch
      %33 = sbr.rel (0) target = $region37
    $region36: #{tpu_custom_call.1} parent=1 // pred_region
      _
    $region37: #{tpu_custom_call.1} parent=1 // pred_fallthru
      _
    // Predicated region
    $region38: #{tpu_custom_call.1} parent=1 // pred_check
      _
    $region39: #{tpu_custom_call.1} parent=1 // pred_check_branch
      %35 = sbr.rel (0) target = $region41
    $region40: #{tpu_custom_call.1} parent=1 // pred_region
      _
    $region41: #{tpu_custom_call.1} parent=1 // pred_fallthru
      _
    %v36 = vld [vmem:[%s0] sm:$0xff]
    %v37 = vld [vmem:[%s0 + $0x8] sm:$0xff]
    %v38 = vld [vmem:[%s0 + $0x10] sm:$0xff]
    %v39 = vld [vmem:[%s0 + $0x18] sm:$0xff]
    %v40 = vld [vmem:[%s0 + $0x20] sm:$0xff]
    %v41 = vld [vmem:[%s0 + $0x28] sm:$0xff]
    %v42 = vld [vmem:[%s0 + $0x30] sm:$0xff]
    %v43 = vld [vmem:[%s0 + $0x38] sm:$0xff]
    %v44 = vld [vmem:[%s1] sm:$0xff]
    %v45 = vld [vmem:[%s1 + $0x8] sm:$0xff]
    %v46 = vld [vmem:[%s1 + $0x10] sm:$0xff]
    %v47 = vld [vmem:[%s1 + $0x18] sm:$0xff]
    %v48 = vld [vmem:[%s1 + $0x20] sm:$0xff]
    %v49 = vld [vmem:[%s1 + $0x28] sm:$0xff]
    %v50 = vld [vmem:[%s1 + $0x30] sm:$0xff]
    %v51 = vld [vmem:[%s1 + $0x38] sm:$0xff]
    %v52 = vld [vmem:[%s9] sm:$0xff]
    %v53 = vld [vmem:[%s9 + $0x8] sm:$0x1f]
    %v54 = vld [vmem:[%s7] sm:$0xff]
    %v55 = vld [vmem:[%s7 + $0x8] sm:$0xff]
    %v56 = vld [vmem:[%s7 + $0x10] sm:$0xff]
    %v57 = vld [vmem:[%s7 + $0x18] sm:$0xff]
    %vm58 = vcmask 261120
    %v60 = vsel %vm58, %v36, 0
    %v63 = vsel %vm58, %v37, 0
    %v66 = vsel %vm58, %v38, 0
    %v69 = vsel %vm58, %v39, 0
    %v72 = vsel %vm58, %v40, 0
    %v75 = vsel %vm58, %v41, 0
    %v78 = vsel %vm58, %v42, 0
    %v81 = vsel %vm58, %v43, 0
    %83 = vmatprep.subr.mxu0 0.0
    %84 = vmatpush1.msra.mxu0 0.0
    %85 = vmatprep.subr.mxu0 0.0
    %86 = vmatpush1.msra.mxu0 0.0
    %87 = vmatprep.subr.mxu0 0.0
    %88 = vmatpush1.msra.mxu0 0.0
    %89 = vmatprep.subr.mxu0 0.0
    %90 = vmatpush1.msra.mxu0 0.0
    %91 = vmatprep.subr.mxu0 0.0
    %92 = vmatpush1.msra.mxu0 0.0
    %93 = vmatprep.subr.mxu0 0.0
    %94 = vmatpush1.msra.mxu0 0.0
    %95 = vmatprep.subr.mxu0 0.0
    %96 = vmatpush1.msra.mxu0 0.0
    %97 = vmatprep.subr.mxu0 0.0
    %98 = vmatpush1.msra.mxu0 0.0
    %99 = vmatprep.subr.mxu0 0.0
    %100 = vmatpush1.msra.mxu0 0.0
    %101 = vmatprep.subr.mxu0 0.0
    %102 = vmatpush1.msra.mxu0 0.0
    %103 = vmatprep.subr.mxu0 0.0
    %104 = vmatpush1.msra.mxu0 0.0
    %105 = vmatprep.subr.mxu0 0.0
    %106 = vmatpush1.msra.mxu0 0.0
    %107 = vmatprep.subr.mxu0 0.0
    %108 = vmatpush1.msra.mxu0 %v57
    %109 = vmatprep.subr.mxu0 0.0
    %110 = vmatpush1.msra.mxu0 %v56
    %111 = vmatprep.subr.mxu0 0.0
    %112 = vmatpush1.msra.mxu0 %v55
    %113 = vmatprep.subr.mxu0 0.0
    %114 = vmatpush1.msra.mxu0 %v54
    %115 = vmatprep.subr.mxu0 0.0
    %116 = vmatpush2.msra.mxu0 0.0
    %117 = vmatprep.subr.mxu0 0.0
    %118 = vmatpush2.msra.mxu0 0.0
    %119 = vmatprep.subr.mxu0 0.0
    %120 = vmatpush2.msra.mxu0 0.0
    %121 = vmatprep.subr.mxu0 0.0
    %122 = vmatpush2.msra.mxu0 0.0
    %123 = vmatprep.subr.mxu0 0.0
    %124 = vmatpush2.msra.mxu0 0.0
    %125 = vmatprep.subr.mxu0 0.0
    %126 = vmatpush2.msra.mxu0 0.0
    %127 = vmatprep.subr.mxu0 0.0
    %128 = vmatpush2.msra.mxu0 0.0
    %129 = vmatprep.subr.mxu0 0.0
    %130 = vmatpush2.msra.mxu0 0.0
    %131 = vmatprep.subr.mxu0 0.0
    %132 = vmatpush2.msra.mxu0 0.0
    %133 = vmatprep.subr.mxu0 0.0
    %134 = vmatpush2.msra.mxu0 0.0
    %135 = vmatprep.subr.mxu0 0.0
    %136 = vmatpush2.msra.mxu0 0.0
    %137 = vmatprep.subr.mxu0 0.0
    %138 = vmatpush2.msra.mxu0 0.0
    %139 = vmatprep.subr.mxu0 0.0
    %140 = vmatpush2.msra.mxu0 0.0
    %141 = vmatprep.subr.mxu0 0.0
    %142 = vmatpush2.msra.mxu0 0.0
    %143 = vmatprep.subr.mxu0 0.0
    %144 = vmatpush2.msra.mxu0 0.0
    %145 = vmatprep.subr.mxu0 0.0
    %146 = vmatpush2.msra.mxu0 0.0
    %147 = vmatprep.mubr.f32.mxu0 0.0
    %148 = vmatmul.mubr.f32.gmra.mxu0 %v60
    %v149 = vpop.f32.mrf.mxu0
    %v150 = vadd.f32 0.0, %v149
    %v151 = vpop.f32.mrf.mxu0
    %152 = vmatprep.mubr.f32.mxu0 0.0
    %153 = vmatmul.mubr.f32.gmra.mxu0 %v63
    %v154 = vpop.f32.mrf.mxu0
    %v155 = vadd.f32 0.0, %v154
    %v156 = vpop.f32.mrf.mxu0
    %157 = vmatprep.mubr.f32.mxu0 0.0
    %158 = vmatmul.mubr.f32.gmra.mxu0 %v66
    %v159 = vpop.f32.mrf.mxu0
    %v160 = vadd.f32 0.0, %v159
    %v161 = vpop.f32.mrf.mxu0
    %162 = vmatprep.mubr.f32.mxu0 0.0
    %163 = vmatmul.mubr.f32.gmra.mxu0 %v69
    %v164 = vpop.f32.mrf.mxu0
    %v165 = vadd.f32 0.0, %v164
    %v166 = vpop.f32.mrf.mxu0
    %167 = vmatprep.mubr.f32.mxu0 0.0
    %168 = vmatmul.mubr.f32.gmra.mxu0 %v72
    %v169 = vpop.f32.mrf.mxu0
    %v170 = vadd.f32 0.0, %v169
    %v171 = vpop.f32.mrf.mxu0
    %172 = vmatprep.mubr.f32.mxu0 0.0
    %173 = vmatmul.mubr.f32.gmra.mxu0 %v75
    %v174 = vpop.f32.mrf.mxu0
    %v175 = vadd.f32 0.0, %v174
    %v176 = vpop.f32.mrf.mxu0
    %177 = vmatprep.mubr.f32.mxu0 0.0
    %178 = vmatmul.mubr.f32.gmra.mxu0 %v78
    %v179 = vpop.f32.mrf.mxu0
    %v180 = vadd.f32 0.0, %v179
    %v181 = vpop.f32.mrf.mxu0
    %182 = vmatprep.mubr.f32.mxu0 0.0
    %183 = vmatmul.mubr.f32.gmra.mxu0 %v81
    %v184 = vpop.f32.mrf.mxu0
    %v185 = vadd.f32 0.0, %v184
    %v186 = vpop.f32.mrf.mxu0
    %187 = vdwg.mxu0
    %v188 = vld [vmem:[%s7 + $0x20] sm:$0xff]
    %vm189 = vcmask 64512
    %v191 = vsel %vm189, %v44, 0
    %v194 = vsel %vm189, %v45, 0
    %v197 = vsel %vm189, %v46, 0
    %v200 = vsel %vm189, %v47, 0
    %v203 = vsel %vm189, %v48, 0
    %v206 = vsel %vm189, %v49, 0
    %v209 = vsel %vm189, %v50, 0
    %v212 = vsel %vm189, %v51, 0
    %214 = vmatprep.subr.mxu0 0.0
    %215 = vmatpush1.msra.mxu0 0.0
    %216 = vmatprep.subr.mxu0 0.0
    %217 = vmatpush1.msra.mxu0 0.0
    %218 = vmatprep.subr.mxu0 0.0
    %219 = vmatpush1.msra.mxu0 0.0
    %220 = vmatprep.subr.mxu0 0.0
    %221 = vmatpush1.msra.mxu0 0.0
    %222 = vmatprep.subr.mxu0 0.0
    %223 = vmatpush1.msra.mxu0 0.0
    %224 = vmatprep.subr.mxu0 0.0
    %225 = vmatpush1.msra.mxu0 0.0
    %226 = vmatprep.subr.mxu0 0.0
    %227 = vmatpush1.msra.mxu0 0.0
    %228 = vmatprep.subr.mxu0 0.0
    %229 = vmatpush1.msra.mxu0 0.0
    %230 = vmatprep.subr.mxu0 0.0
    %231 = vmatpush1.msra.mxu0 0.0
    %232 = vmatprep.subr.mxu0 0.0
    %233 = vmatpush1.msra.mxu0 0.0
    %234 = vmatprep.subr.mxu0 0.0
    %235 = vmatpush1.msra.mxu0 0.0
    %236 = vmatprep.subr.mxu0 0.0
    %237 = vmatpush1.msra.mxu0 0.0
    %238 = vmatprep.subr.mxu0 0.0
    %239 = vmatpush1.msra.mxu0 0.0
    %240 = vmatprep.subr.mxu0 0.0
    %241 = vmatpush1.msra.mxu0 0.0
    %242 = vmatprep.subr.mxu0 0.0
    %243 = vmatpush1.msra.mxu0 0.0
    %244 = vmatprep.subr.mxu0 0.0
    %245 = vmatpush1.msra.mxu0 %v188
    %246 = vmatprep.subr.mxu0 0.0
    %247 = vmatpush2.msra.mxu0 0.0
    %248 = vmatprep.subr.mxu0 0.0
    %249 = vmatpush2.msra.mxu0 0.0
    %250 = vmatprep.subr.mxu0 0.0
    %251 = vmatpush2.msra.mxu0 0.0
    %252 = vmatprep.subr.mxu0 0.0
    %253 = vmatpush2.msra.mxu0 0.0
    %254 = vmatprep.subr.mxu0 0.0
    %255 = vmatpush2.msra.mxu0 0.0
    %256 = vmatprep.subr.mxu0 0.0
    %257 = vmatpush2.msra.mxu0 0.0
    %258 = vmatprep.subr.mxu0 0.0
    %259 = vmatpush2.msra.mxu0 0.0
    %260 = vmatprep.subr.mxu0 0.0
    %261 = vmatpush2.msra.mxu0 0.0
    %262 = vmatprep.subr.mxu0 0.0
    %263 = vmatpush2.msra.mxu0 0.0
    %264 = vmatprep.subr.mxu0 0.0
    %265 = vmatpush2.msra.mxu0 0.0
    %266 = vmatprep.subr.mxu0 0.0
    %267 = vmatpush2.msra.mxu0 0.0
    %268 = vmatprep.subr.mxu0 0.0
    %269 = vmatpush2.msra.mxu0 0.0
    %270 = vmatprep.subr.mxu0 0.0
    %271 = vmatpush2.msra.mxu0 0.0
    %272 = vmatprep.subr.mxu0 0.0
    %273 = vmatpush2.msra.mxu0 0.0
    %274 = vmatprep.subr.mxu0 0.0
    %275 = vmatpush2.msra.mxu0 0.0
    %276 = vmatprep.subr.mxu0 0.0
    %277 = vmatpush2.msra.mxu0 0.0
    %278 = vmatprep.mubr.f32.mxu0 0.0
    %279 = vmatmul.mubr.f32.gmra.mxu0 %v191
    %v280 = vpop.f32.mrf.mxu0
    %v281 = vadd.f32 0.0, %v280
    %v282 = vpop.f32.mrf.mxu0
    %283 = vmatprep.mubr.f32.mxu0 0.0
    %284 = vmatmul.mubr.f32.gmra.mxu0 %v194
    %v285 = vpop.f32.mrf.mxu0
    %v286 = vadd.f32 0.0, %v285
    %v287 = vpop.f32.mrf.mxu0
    %288 = vmatprep.mubr.f32.mxu0 0.0
    %289 = vmatmul.mubr.f32.gmra.mxu0 %v197
    %v290 = vpop.f32.mrf.mxu0
    %v291 = vadd.f32 0.0, %v290
    %v292 = vpop.f32.mrf.mxu0
    %293 = vmatprep.mubr.f32.mxu0 0.0
    %294 = vmatmul.mubr.f32.gmra.mxu0 %v200
    %v295 = vpop.f32.mrf.mxu0
    %v296 = vadd.f32 0.0, %v295
    %v297 = vpop.f32.mrf.mxu0
    %298 = vmatprep.mubr.f32.mxu0 0.0
    %299 = vmatmul.mubr.f32.gmra.mxu0 %v203
    %v300 = vpop.f32.mrf.mxu0
    %v301 = vadd.f32 0.0, %v300
    %v302 = vpop.f32.mrf.mxu0
    %303 = vmatprep.mubr.f32.mxu0 0.0
    %304 = vmatmul.mubr.f32.gmra.mxu0 %v206
    %v305 = vpop.f32.mrf.mxu0
    %v306 = vadd.f32 0.0, %v305
    %v307 = vpop.f32.mrf.mxu0
    %308 = vmatprep.mubr.f32.mxu0 0.0
    %309 = vmatmul.mubr.f32.gmra.mxu0 %v209
    %v310 = vpop.f32.mrf.mxu0
    %v311 = vadd.f32 0.0, %v310
    %v312 = vpop.f32.mrf.mxu0
    %313 = vmatprep.mubr.f32.mxu0 0.0
    %314 = vmatmul.mubr.f32.gmra.mxu0 %v212
    %v315 = vpop.f32.mrf.mxu0
    %v316 = vadd.f32 0.0, %v315
    %v317 = vpop.f32.mrf.mxu0
    %318 = vdwg.mxu0
    %v319 = vlaneseq
    %v320 = vshrl.u32 %v319, 7
    %v321 = vsub.s32 0, %v320
    %v322 = vrot.slane %v52, %v321
    %v323 = vadd.f32 %v150, %v322
    %v324 = vadd.f32 %v155, %v322
    %v325 = vadd.f32 %v160, %v322
    %v326 = vadd.f32 %v165, %v322
    %v327 = vadd.f32 %v170, %v322
    %v328 = vadd.f32 %v175, %v322
    %v329 = vadd.f32 %v180, %v322
    %v330 = vadd.f32 %v185, %v322
    %v331 = vxor.u32 %v323, 2147483648
    %v332 = vxor.u32 %v324, 2147483648
    %v333 = vxor.u32 %v325, 2147483648
    %v334 = vxor.u32 %v326, 2147483648
    %v335 = vxor.u32 %v327, 2147483648
    %v336 = vxor.u32 %v328, 2147483648
    %v337 = vxor.u32 %v329, 2147483648
    %v338 = vxor.u32 %v330, 2147483648
    %v339 = vmul.f32 %v331, 1.442695
    %v340 = vpow.pop %v339
    %v341 = vmul.f32 %v332, 1.442695
    %v342 = vpow.pop %v341
    %v343 = vmul.f32 %v333, 1.442695
    %v344 = vpow.pop %v343
    %v345 = vmul.f32 %v334, 1.442695
    %v346 = vpow.pop %v345
    %v347 = vmul.f32 %v335, 1.442695
    %v348 = vpow.pop %v347
    %v349 = vmul.f32 %v336, 1.442695
    %v350 = vpow.pop %v349
    %v351 = vmul.f32 %v337, 1.442695
    %v352 = vpow.pop %v351
    %v353 = vmul.f32 %v338, 1.442695
    %v354 = vpow.pop %v353
    %v355 = vadd.f32 %v340, 1.0
    %v356 = vadd.f32 %v342, 1.0
    %v357 = vadd.f32 %v344, 1.0
    %v358 = vadd.f32 %v346, 1.0
    %v359 = vadd.f32 %v348, 1.0
    %v360 = vadd.f32 %v350, 1.0
    %v361 = vadd.f32 %v352, 1.0
    %v362 = vadd.f32 %v354, 1.0
    %v363 = vrcp.pop %v355
    %v364 = vmul.f32 1.0, %v363
    %v365 = vrcp.pop %v356
    %v366 = vmul.f32 1.0, %v365
    %v367 = vrcp.pop %v357
    %v368 = vmul.f32 1.0, %v367
    %v369 = vrcp.pop %v358
    %v370 = vmul.f32 1.0, %v369
    %v371 = vrcp.pop %v359
    %v372 = vmul.f32 1.0, %v371
    %v373 = vrcp.pop %v360
    %v374 = vmul.f32 1.0, %v373
    %v375 = vrcp.pop %v361
    %v376 = vmul.f32 1.0, %v375
    %v377 = vrcp.pop %v362
    %v378 = vmul.f32 1.0, %v377
    %v379 = vmul.f32 %v323, %v364
    %v380 = vmul.f32 %v324, %v366
    %v381 = vmul.f32 %v325, %v368
    %v382 = vmul.f32 %v326, %v370
    %v383 = vmul.f32 %v327, %v372
    %v384 = vmul.f32 %v328, %v374
    %v385 = vmul.f32 %v329, %v376
    %v386 = vmul.f32 %v330, %v378
    %v387 = vlaneseq
    %v388 = vshrl.u32 %v387, 7
    %v389 = vsub.s32 1, %v388
    %v390 = vrot.slane %v52, %v389
    %392 = vrot.lane.b32.xlu0 %v390, 32
    %v393 = vpop.permute.xlu0 %392
    %v395 = vadd.f32 %v150, %v393
    %v396 = vadd.f32 %v155, %v393
    %v397 = vadd.f32 %v160, %v393
    %v398 = vadd.f32 %v165, %v393
    %v399 = vadd.f32 %v170, %v393
    %v400 = vadd.f32 %v175, %v393
    %v401 = vadd.f32 %v180, %v393
    %v402 = vadd.f32 %v185, %v393
    %v403 = vxor.u32 %v395, 2147483648
    %v404 = vxor.u32 %v396, 2147483648
    %v405 = vxor.u32 %v397, 2147483648
    %v406 = vxor.u32 %v398, 2147483648
    %v407 = vxor.u32 %v399, 2147483648
    %v408 = vxor.u32 %v400, 2147483648
    %v409 = vxor.u32 %v401, 2147483648
    %v410 = vxor.u32 %v402, 2147483648
    %v411 = vmul.f32 %v403, 1.442695
    %v412 = vpow.pop %v411
    %v413 = vmul.f32 %v404, 1.442695
    %v414 = vpow.pop %v413
    %v415 = vmul.f32 %v405, 1.442695
    %v416 = vpow.pop %v415
    %v417 = vmul.f32 %v406, 1.442695
    %v418 = vpow.pop %v417
    %v419 = vmul.f32 %v407, 1.442695
    %v420 = vpow.pop %v419
    %v421 = vmul.f32 %v408, 1.442695
    %v422 = vpow.pop %v421
    %v423 = vmul.f32 %v409, 1.442695
    %v424 = vpow.pop %v423
    %v425 = vmul.f32 %v410, 1.442695
    %v426 = vpow.pop %v425
    %v427 = vadd.f32 %v412, 1.0
    %v428 = vadd.f32 %v414, 1.0
    %v429 = vadd.f32 %v416, 1.0
    %v430 = vadd.f32 %v418, 1.0
    %v431 = vadd.f32 %v420, 1.0
    %v432 = vadd.f32 %v422, 1.0
    %v433 = vadd.f32 %v424, 1.0
    %v434 = vadd.f32 %v426, 1.0
    %v435 = vrcp.pop %v427
    %v436 = vmul.f32 1.0, %v435
    %v437 = vrcp.pop %v428
    %v438 = vmul.f32 1.0, %v437
    %v439 = vrcp.pop %v429
    %v440 = vmul.f32 1.0, %v439
    %v441 = vrcp.pop %v430
    %v442 = vmul.f32 1.0, %v441
    %v443 = vrcp.pop %v431
    %v444 = vmul.f32 1.0, %v443
    %v445 = vrcp.pop %v432
    %v446 = vmul.f32 1.0, %v445
    %v447 = vrcp.pop %v433
    %v448 = vmul.f32 1.0, %v447
    %v449 = vrcp.pop %v434
    %v450 = vmul.f32 1.0, %v449
    %v451 = vmul.f32 %v395, %v436
    %v452 = vmul.f32 %v396, %v438
    %v453 = vmul.f32 %v397, %v440
    %v454 = vmul.f32 %v398, %v442
    %v455 = vmul.f32 %v399, %v444
    %v456 = vmul.f32 %v400, %v446
    %v457 = vmul.f32 %v401, %v448
    %v458 = vmul.f32 %v402, %v450
    %467 = vrot.lane.b32.xlu0 %v281, 32
    %v468 = vpop.permute.xlu0 %467
    %469 = vrot.lane.b32.xlu0 %v286, 32
    %v470 = vpop.permute.xlu0 %469
    %471 = vrot.lane.b32.xlu0 %v291, 32
    %v472 = vpop.permute.xlu0 %471
    %473 = vrot.lane.b32.xlu0 %v296, 32
    %v474 = vpop.permute.xlu0 %473
    %475 = vrot.lane.b32.xlu0 %v301, 32
    %v476 = vpop.permute.xlu0 %475
    %477 = vrot.lane.b32.xlu0 %v306, 32
    %v478 = vpop.permute.xlu0 %477
    %479 = vrot.lane.b32.xlu0 %v311, 32
    %v480 = vpop.permute.xlu0 %479
    %481 = vrot.lane.b32.xlu0 %v316, 32
    %v482 = vpop.permute.xlu0 %481
    %v491 = vmul.f32 %v451, %v468
    %v492 = vmul.f32 %v452, %v470
    %v493 = vmul.f32 %v453, %v472
    %v494 = vmul.f32 %v454, %v474
    %v495 = vmul.f32 %v455, %v476
    %v496 = vmul.f32 %v456, %v478
    %v497 = vmul.f32 %v457, %v480
    %v498 = vmul.f32 %v458, %v482
    %v499 = vld [vmem:[%s8 + $0xa0] sm:$0xff]
    %v500 = vld [vmem:[%s8 + $0xa8] sm:$0xff]
    %v501 = vld [vmem:[%s8 + $0xb0] sm:$0xff]
    %v502 = vld [vmem:[%s8 + $0xb8] sm:$0xff]
    %511 = vrot.lane.b32.xlu0 %v491, 96
    %v512 = vpop.permute.xlu0 %511
    %513 = vrot.lane.b32.xlu0 %v492, 96
    %v514 = vpop.permute.xlu0 %513
    %515 = vrot.lane.b32.xlu0 %v493, 96
    %v516 = vpop.permute.xlu0 %515
    %517 = vrot.lane.b32.xlu0 %v494, 96
    %v518 = vpop.permute.xlu0 %517
    %519 = vrot.lane.b32.xlu0 %v495, 96
    %v520 = vpop.permute.xlu0 %519
    %521 = vrot.lane.b32.xlu0 %v496, 96
    %v522 = vpop.permute.xlu0 %521
    %523 = vrot.lane.b32.xlu0 %v497, 96
    %v524 = vpop.permute.xlu0 %523
    %525 = vrot.lane.b32.xlu0 %v498, 96
    %v526 = vpop.permute.xlu0 %525
    %v527 = vsel %vm58, %v512, 0
    %v529 = vsel %vm58, %v514, 0
    %v531 = vsel %vm58, %v516, 0
    %v533 = vsel %vm58, %v518, 0
    %v535 = vsel %vm58, %v520, 0
    %v537 = vsel %vm58, %v522, 0
    %v539 = vsel %vm58, %v524, 0
    %v541 = vsel %vm58, %v526, 0
    %543 = vmatprep.subr.mxu0 0.0
    %544 = vmatpush1.msra.mxu0 0.0
    %545 = vmatprep.subr.mxu0 0.0
    %546 = vmatpush1.msra.mxu0 0.0
    %547 = vmatprep.subr.mxu0 0.0
    %548 = vmatpush1.msra.mxu0 0.0
    %549 = vmatprep.subr.mxu0 0.0
    %550 = vmatpush1.msra.mxu0 0.0
    %551 = vmatprep.subr.mxu0 0.0
    %552 = vmatpush1.msra.mxu0 0.0
    %553 = vmatprep.subr.mxu0 0.0
    %554 = vmatpush1.msra.mxu0 0.0
    %555 = vmatprep.subr.mxu0 0.0
    %556 = vmatpush1.msra.mxu0 0.0
    %557 = vmatprep.subr.mxu0 0.0
    %558 = vmatpush1.msra.mxu0 0.0
    %559 = vmatprep.subr.mxu0 0.0
    %560 = vmatpush1.msra.mxu0 0.0
    %561 = vmatprep.subr.mxu0 0.0
    %562 = vmatpush1.msra.mxu0 0.0
    %563 = vmatprep.subr.mxu0 0.0
    %564 = vmatpush1.msra.mxu0 0.0
    %565 = vmatprep.subr.mxu0 0.0
    %566 = vmatpush1.msra.mxu0 0.0
    %567 = vmatprep.subr.mxu0 0.0
    %568 = vmatpush1.msra.mxu0 %v502
    %569 = vmatprep.subr.mxu0 0.0
    %570 = vmatpush1.msra.mxu0 %v501
    %571 = vmatprep.subr.mxu0 0.0
    %572 = vmatpush1.msra.mxu0 %v500
    %573 = vmatprep.subr.mxu0 0.0
    %574 = vmatpush1.msra.mxu0 %v499
    %575 = vmatprep.subr.mxu0 0.0
    %576 = vmatpush2.msra.mxu0 0.0
    %577 = vmatprep.subr.mxu0 0.0
    %578 = vmatpush2.msra.mxu0 0.0
    %579 = vmatprep.subr.mxu0 0.0
    %580 = vmatpush2.msra.mxu0 0.0
    %581 = vmatprep.subr.mxu0 0.0
    %582 = vmatpush2.msra.mxu0 0.0
    %583 = vmatprep.subr.mxu0 0.0
    %584 = vmatpush2.msra.mxu0 0.0
    %585 = vmatprep.subr.mxu0 0.0
    %586 = vmatpush2.msra.mxu0 0.0
    %587 = vmatprep.subr.mxu0 0.0
    %588 = vmatpush2.msra.mxu0 0.0
    %589 = vmatprep.subr.mxu0 0.0
    %590 = vmatpush2.msra.mxu0 0.0
    %591 = vmatprep.subr.mxu0 0.0
    %592 = vmatpush2.msra.mxu0 0.0
    %593 = vmatprep.subr.mxu0 0.0
    %594 = vmatpush2.msra.mxu0 0.0
    %595 = vmatprep.subr.mxu0 0.0
    %596 = vmatpush2.msra.mxu0 0.0
    %597 = vmatprep.subr.mxu0 0.0
    %598 = vmatpush2.msra.mxu0 0.0
    %599 = vmatprep.subr.mxu0 0.0
    %600 = vmatpush2.msra.mxu0 0.0
    %601 = vmatprep.subr.mxu0 0.0
    %602 = vmatpush2.msra.mxu0 0.0
    %603 = vmatprep.subr.mxu0 0.0
    %604 = vmatpush2.msra.mxu0 0.0
    %605 = vmatprep.subr.mxu0 0.0
    %606 = vmatpush2.msra.mxu0 0.0
    %607 = vmatprep.mubr.f32.mxu0 0.0
    %608 = vmatmul.mubr.f32.gmra.mxu0 %v527
    %v609 = vpop.f32.mrf.mxu0
    %v610 = vadd.f32 0.0, %v609
    %v611 = vpop.f32.mrf.mxu0
    %612 = vmatprep.mubr.f32.mxu0 0.0
    %613 = vmatmul.mubr.f32.gmra.mxu0 %v529
    %v614 = vpop.f32.mrf.mxu0
    %v615 = vadd.f32 0.0, %v614
    %v616 = vpop.f32.mrf.mxu0
    %617 = vmatprep.mubr.f32.mxu0 0.0
    %618 = vmatmul.mubr.f32.gmra.mxu0 %v531
    %v619 = vpop.f32.mrf.mxu0
    %v620 = vadd.f32 0.0, %v619
    %v621 = vpop.f32.mrf.mxu0
    %622 = vmatprep.mubr.f32.mxu0 0.0
    %623 = vmatmul.mubr.f32.gmra.mxu0 %v533
    %v624 = vpop.f32.mrf.mxu0
    %v625 = vadd.f32 0.0, %v624
    %v626 = vpop.f32.mrf.mxu0
    %627 = vmatprep.mubr.f32.mxu0 0.0
    %628 = vmatmul.mubr.f32.gmra.mxu0 %v535
    %v629 = vpop.f32.mrf.mxu0
    %v630 = vadd.f32 0.0, %v629
    %v631 = vpop.f32.mrf.mxu0
    %632 = vmatprep.mubr.f32.mxu0 0.0
    %633 = vmatmul.mubr.f32.gmra.mxu0 %v537
    %v634 = vpop.f32.mrf.mxu0
    %v635 = vadd.f32 0.0, %v634
    %v636 = vpop.f32.mrf.mxu0
    %637 = vmatprep.mubr.f32.mxu0 0.0
    %638 = vmatmul.mubr.f32.gmra.mxu0 %v539
    %v639 = vpop.f32.mrf.mxu0
    %v640 = vadd.f32 0.0, %v639
    %v641 = vpop.f32.mrf.mxu0
    %642 = vmatprep.mubr.f32.mxu0 0.0
    %643 = vmatmul.mubr.f32.gmra.mxu0 %v541
    %v644 = vpop.f32.mrf.mxu0
    %v645 = vadd.f32 0.0, %v644
    %v646 = vpop.f32.mrf.mxu0
    %647 = vdwg.mxu0
    %v648 = vxor.u32 %v610, 2147483648
    %v649 = vxor.u32 %v615, 2147483648
    %v650 = vxor.u32 %v620, 2147483648
    %v651 = vxor.u32 %v625, 2147483648
    %v652 = vxor.u32 %v630, 2147483648
    %v653 = vxor.u32 %v635, 2147483648
    %v654 = vxor.u32 %v640, 2147483648
    %v655 = vxor.u32 %v645, 2147483648
    %v656 = vmul.f32 %v648, 1.442695
    %v657 = vpow.pop %v656
    %v658 = vmul.f32 %v649, 1.442695
    %v659 = vpow.pop %v658
    %v660 = vmul.f32 %v650, 1.442695
    %v661 = vpow.pop %v660
    %v662 = vmul.f32 %v651, 1.442695
    %v663 = vpow.pop %v662
    %v664 = vmul.f32 %v652, 1.442695
    %v665 = vpow.pop %v664
    %v666 = vmul.f32 %v653, 1.442695
    %v667 = vpow.pop %v666
    %v668 = vmul.f32 %v654, 1.442695
    %v669 = vpow.pop %v668
    %v670 = vmul.f32 %v655, 1.442695
    %v671 = vpow.pop %v670
    %v672 = vadd.f32 %v657, 1.0
    %v673 = vadd.f32 %v659, 1.0
    %v674 = vadd.f32 %v661, 1.0
    %v675 = vadd.f32 %v663, 1.0
    %v676 = vadd.f32 %v665, 1.0
    %v677 = vadd.f32 %v667, 1.0
    %v678 = vadd.f32 %v669, 1.0
    %v679 = vadd.f32 %v671, 1.0
    %v680 = vrcp.pop %v672
    %v681 = vmul.f32 1.0, %v680
    %v682 = vrcp.pop %v673
    %v683 = vmul.f32 1.0, %v682
    %v684 = vrcp.pop %v674
    %v685 = vmul.f32 1.0, %v684
    %v686 = vrcp.pop %v675
    %v687 = vmul.f32 1.0, %v686
    %v688 = vrcp.pop %v676
    %v689 = vmul.f32 1.0, %v688
    %v690 = vrcp.pop %v677
    %v691 = vmul.f32 1.0, %v690
    %v692 = vrcp.pop %v678
    %v693 = vmul.f32 1.0, %v692
    %v694 = vrcp.pop %v679
    %v695 = vmul.f32 1.0, %v694
    %v696 = vmul.f32 %v610, %v681
    %v697 = vmul.f32 %v615, %v683
    %v698 = vmul.f32 %v620, %v685
    %v699 = vmul.f32 %v625, %v687
    %v700 = vmul.f32 %v630, %v689
    %v701 = vmul.f32 %v635, %v691
    %v702 = vmul.f32 %v640, %v693
    %v703 = vmul.f32 %v645, %v695
    %v704 = vld [vmem:[%s2] sm:$0xff]
    %v705 = vld [vmem:[%s2 + $0x8] sm:$0xff]
    %v706 = vld [vmem:[%s2 + $0x10] sm:$0xff]
    %v707 = vld [vmem:[%s2 + $0x18] sm:$0xff]
    %v708 = vld [vmem:[%s2 + $0x20] sm:$0xff]
    %v709 = vld [vmem:[%s2 + $0x28] sm:$0xff]
    %v710 = vld [vmem:[%s2 + $0x30] sm:$0xff]
    %v711 = vld [vmem:[%s2 + $0x38] sm:$0xff]
    %v712 = vld [vmem:[%s2 + $0x40] sm:$0xff]
    %v713 = vld [vmem:[%s2 + $0x48] sm:$0xff]
    %v714 = vld [vmem:[%s2 + $0x50] sm:$0xff]
    %v715 = vld [vmem:[%s2 + $0x58] sm:$0xff]
    %v716 = vld [vmem:[%s8] sm:$0xff]
    %v717 = vld [vmem:[%s8 + $0x8] sm:$0xff]
    %v718 = vld [vmem:[%s8 + $0x10] sm:$0xff]
    %v719 = vld [vmem:[%s8 + $0x18] sm:$0xff]
    %v721 = vsel %vm58, %v704, 0
    %v724 = vsel %vm58, %v705, 0
    %v727 = vsel %vm58, %v706, 0
    %v730 = vsel %vm58, %v707, 0
    %v733 = vsel %vm58, %v708, 0
    %v736 = vsel %vm58, %v709, 0
    %v739 = vsel %vm58, %v710, 0
    %v742 = vsel %vm58, %v711, 0
    %v745 = vsel %vm58, %v712, 0
    %v748 = vsel %vm58, %v713, 0
    %v751 = vsel %vm58, %v714, 0
    %v754 = vsel %vm58, %v715, 0
    %756 = vmatprep.subr.mxu0 0.0
    %757 = vmatpush1.msra.mxu0 0.0
    %758 = vmatprep.subr.mxu0 0.0
    %759 = vmatpush1.msra.mxu0 0.0
    %760 = vmatprep.subr.mxu0 0.0
    %761 = vmatpush1.msra.mxu0 0.0
    %762 = vmatprep.subr.mxu0 0.0
    %763 = vmatpush1.msra.mxu0 0.0
    %764 = vmatprep.subr.mxu0 0.0
    %765 = vmatpush1.msra.mxu0 0.0
    %766 = vmatprep.subr.mxu0 0.0
    %767 = vmatpush1.msra.mxu0 0.0
    %768 = vmatprep.subr.mxu0 0.0
    %769 = vmatpush1.msra.mxu0 0.0
    %770 = vmatprep.subr.mxu0 0.0
    %771 = vmatpush1.msra.mxu0 0.0
    %772 = vmatprep.subr.mxu0 0.0
    %773 = vmatpush1.msra.mxu0 0.0
    %774 = vmatprep.subr.mxu0 0.0
    %775 = vmatpush1.msra.mxu0 0.0
    %776 = vmatprep.subr.mxu0 0.0
    %777 = vmatpush1.msra.mxu0 0.0
    %778 = vmatprep.subr.mxu0 0.0
    %779 = vmatpush1.msra.mxu0 0.0
    %780 = vmatprep.subr.mxu0 0.0
    %781 = vmatpush1.msra.mxu0 %v719
    %782 = vmatprep.subr.mxu0 0.0
    %783 = vmatpush1.msra.mxu0 %v718
    %784 = vmatprep.subr.mxu0 0.0
    %785 = vmatpush1.msra.mxu0 %v717
    %786 = vmatprep.subr.mxu0 0.0
    %787 = vmatpush1.msra.mxu0 %v716
    %788 = vmatprep.subr.mxu0 0.0
    %789 = vmatpush2.msra.mxu0 0.0
    %790 = vmatprep.subr.mxu0 0.0
    %791 = vmatpush2.msra.mxu0 0.0
    %792 = vmatprep.subr.mxu0 0.0
    %793 = vmatpush2.msra.mxu0 0.0
    %794 = vmatprep.subr.mxu0 0.0
    %795 = vmatpush2.msra.mxu0 0.0
    %796 = vmatprep.subr.mxu0 0.0
    %797 = vmatpush2.msra.mxu0 0.0
    %798 = vmatprep.subr.mxu0 0.0
    %799 = vmatpush2.msra.mxu0 0.0
    %800 = vmatprep.subr.mxu0 0.0
    %801 = vmatpush2.msra.mxu0 0.0
    %802 = vmatprep.subr.mxu0 0.0
    %803 = vmatpush2.msra.mxu0 0.0
    %804 = vmatprep.subr.mxu0 0.0
    %805 = vmatpush2.msra.mxu0 0.0
    %806 = vmatprep.subr.mxu0 0.0
    %807 = vmatpush2.msra.mxu0 0.0
    %808 = vmatprep.subr.mxu0 0.0
    %809 = vmatpush2.msra.mxu0 0.0
    %810 = vmatprep.subr.mxu0 0.0
    %811 = vmatpush2.msra.mxu0 0.0
    %812 = vmatprep.subr.mxu0 0.0
    %813 = vmatpush2.msra.mxu0 0.0
    %814 = vmatprep.subr.mxu0 0.0
    %815 = vmatpush2.msra.mxu0 0.0
    %816 = vmatprep.subr.mxu0 0.0
    %817 = vmatpush2.msra.mxu0 0.0
    %818 = vmatprep.subr.mxu0 0.0
    %819 = vmatpush2.msra.mxu0 0.0
    %820 = vmatprep.mubr.f32.mxu0 0.0
    %821 = vmatmul.mubr.f32.gmra.mxu0 %v721
    %v822 = vpop.f32.mrf.mxu0
    %v823 = vadd.f32 0.0, %v822
    %v824 = vpop.f32.mrf.mxu0
    %825 = vmatprep.mubr.f32.mxu0 0.0
    %826 = vmatmul.mubr.f32.gmra.mxu0 %v724
    %v827 = vpop.f32.mrf.mxu0
    %v828 = vadd.f32 0.0, %v827
    %v829 = vpop.f32.mrf.mxu0
    %830 = vmatprep.mubr.f32.mxu0 0.0
    %831 = vmatmul.mubr.f32.gmra.mxu0 %v727
    %v832 = vpop.f32.mrf.mxu0
    %v833 = vadd.f32 0.0, %v832
    %v834 = vpop.f32.mrf.mxu0
    %835 = vmatprep.mubr.f32.mxu0 0.0
    %836 = vmatmul.mubr.f32.gmra.mxu0 %v730
    %v837 = vpop.f32.mrf.mxu0
    %v838 = vadd.f32 0.0, %v837
    %v839 = vpop.f32.mrf.mxu0
    %840 = vmatprep.mubr.f32.mxu0 0.0
    %841 = vmatmul.mubr.f32.gmra.mxu0 %v733
    %v842 = vpop.f32.mrf.mxu0
    %v843 = vadd.f32 0.0, %v842
    %v844 = vpop.f32.mrf.mxu0
    %845 = vmatprep.mubr.f32.mxu0 0.0
    %846 = vmatmul.mubr.f32.gmra.mxu0 %v736
    %v847 = vpop.f32.mrf.mxu0
    %v848 = vadd.f32 0.0, %v847
    %v849 = vpop.f32.mrf.mxu0
    %850 = vmatprep.mubr.f32.mxu0 0.0
    %851 = vmatmul.mubr.f32.gmra.mxu0 %v739
    %v852 = vpop.f32.mrf.mxu0
    %v853 = vadd.f32 0.0, %v852
    %v854 = vpop.f32.mrf.mxu0
    %855 = vmatprep.mubr.f32.mxu0 0.0
    %856 = vmatmul.mubr.f32.gmra.mxu0 %v742
    %v857 = vpop.f32.mrf.mxu0
    %v858 = vadd.f32 0.0, %v857
    %v859 = vpop.f32.mrf.mxu0
    %860 = vmatprep.mubr.f32.mxu0 0.0
    %861 = vmatmul.mubr.f32.gmra.mxu0 %v745
    %v862 = vpop.f32.mrf.mxu0
    %v863 = vadd.f32 0.0, %v862
    %v864 = vpop.f32.mrf.mxu0
    %865 = vmatprep.mubr.f32.mxu0 0.0
    %866 = vmatmul.mubr.f32.gmra.mxu0 %v748
    %v867 = vpop.f32.mrf.mxu0
    %v868 = vadd.f32 0.0, %v867
    %v869 = vpop.f32.mrf.mxu0
    %870 = vmatprep.mubr.f32.mxu0 0.0
    %871 = vmatmul.mubr.f32.gmra.mxu0 %v751
    %v872 = vpop.f32.mrf.mxu0
    %v873 = vadd.f32 0.0, %v872
    %v874 = vpop.f32.mrf.mxu0
    %875 = vmatprep.mubr.f32.mxu0 0.0
    %876 = vmatmul.mubr.f32.gmra.mxu0 %v754
    %v877 = vpop.f32.mrf.mxu0
    %v878 = vadd.f32 0.0, %v877
    %v879 = vpop.f32.mrf.mxu0
    %880 = vdwg.mxu0
    %v881 = vld [vmem:[%s3] sm:$0xff]
    %v882 = vld [vmem:[%s3 + $0x8] sm:$0xff]
    %v883 = vld [vmem:[%s3 + $0x10] sm:$0xff]
    %v884 = vld [vmem:[%s3 + $0x18] sm:$0xff]
    %v885 = vld [vmem:[%s3 + $0x20] sm:$0xff]
    %v886 = vld [vmem:[%s3 + $0x28] sm:$0xff]
    %v887 = vld [vmem:[%s3 + $0x30] sm:$0xff]
    %v888 = vld [vmem:[%s3 + $0x38] sm:$0xff]
    %v889 = vld [vmem:[%s3 + $0x40] sm:$0xff]
    %v890 = vld [vmem:[%s3 + $0x48] sm:$0xff]
    %v891 = vld [vmem:[%s3 + $0x50] sm:$0xff]
    %v892 = vld [vmem:[%s3 + $0x58] sm:$0xff]
    %v893 = vld [vmem:[%s8 + $0x20] sm:$0xff]
    %v894 = vld [vmem:[%s8 + $0x28] sm:$0xff]
    %v895 = vld [vmem:[%s8 + $0x30] sm:$0xff]
    %v896 = vld [vmem:[%s8 + $0x38] sm:$0xff]
    %v897 = vld [vmem:[%s8 + $0x40] sm:$0xff]
    %v898 = vld [vmem:[%s8 + $0x48] sm:$0xff]
    %v899 = vld [vmem:[%s8 + $0x50] sm:$0xff]
    %v900 = vld [vmem:[%s8 + $0x58] sm:$0xff]
    %v901 = vld [vmem:[%s8 + $0x60] sm:$0xff]
    %v902 = vld [vmem:[%s8 + $0x68] sm:$0xff]
    %v903 = vld [vmem:[%s8 + $0x70] sm:$0xff]
    %v904 = vld [vmem:[%s8 + $0x78] sm:$0xff]
    %v905 = vld [vmem:[%s8 + $0x80] sm:$0xff]
    %v906 = vld [vmem:[%s8 + $0x88] sm:$0xff]
    %v907 = vld [vmem:[%s8 + $0x90] sm:$0xff]
    %v908 = vld [vmem:[%s8 + $0x98] sm:$0xff]
    %909 = vmatprep.subr.mxu0 0.0
    %910 = vmatpush1.msra.mxu0 %v908
    %911 = vmatprep.subr.mxu0 0.0
    %912 = vmatpush1.msra.mxu0 %v907
    %913 = vmatprep.subr.mxu0 0.0
    %914 = vmatpush1.msra.mxu0 %v906
    %915 = vmatprep.subr.mxu0 0.0
    %916 = vmatpush1.msra.mxu0 %v905
    %917 = vmatprep.subr.mxu0 0.0
    %918 = vmatpush1.msra.mxu0 %v904
    %919 = vmatprep.subr.mxu0 0.0
    %920 = vmatpush1.msra.mxu0 %v903
    %921 = vmatprep.subr.mxu0 0.0
    %922 = vmatpush1.msra.mxu0 %v902
    %923 = vmatprep.subr.mxu0 0.0
    %924 = vmatpush1.msra.mxu0 %v901
    %925 = vmatprep.subr.mxu0 0.0
    %926 = vmatpush1.msra.mxu0 %v900
    %927 = vmatprep.subr.mxu0 0.0
    %928 = vmatpush1.msra.mxu0 %v899
    %929 = vmatprep.subr.mxu0 0.0
    %930 = vmatpush1.msra.mxu0 %v898
    %931 = vmatprep.subr.mxu0 0.0
    %932 = vmatpush1.msra.mxu0 %v897
    %933 = vmatprep.subr.mxu0 0.0
    %934 = vmatpush1.msra.mxu0 %v896
    %935 = vmatprep.subr.mxu0 0.0
    %936 = vmatpush1.msra.mxu0 %v895
    %937 = vmatprep.subr.mxu0 0.0
    %938 = vmatpush1.msra.mxu0 %v894
    %939 = vmatprep.subr.mxu0 0.0
    %940 = vmatpush1.msra.mxu0 %v893
    %941 = vmatprep.subr.mxu0 0.0
    %942 = vmatpush2.msra.mxu0 0.0
    %943 = vmatprep.subr.mxu0 0.0
    %944 = vmatpush2.msra.mxu0 0.0
    %945 = vmatprep.subr.mxu0 0.0
    %946 = vmatpush2.msra.mxu0 0.0
    %947 = vmatprep.subr.mxu0 0.0
    %948 = vmatpush2.msra.mxu0 0.0
    %949 = vmatprep.subr.mxu0 0.0
    %950 = vmatpush2.msra.mxu0 0.0
    %951 = vmatprep.subr.mxu0 0.0
    %952 = vmatpush2.msra.mxu0 0.0
    %953 = vmatprep.subr.mxu0 0.0
    %954 = vmatpush2.msra.mxu0 0.0
    %955 = vmatprep.subr.mxu0 0.0
    %956 = vmatpush2.msra.mxu0 0.0
    %957 = vmatprep.subr.mxu0 0.0
    %958 = vmatpush2.msra.mxu0 0.0
    %959 = vmatprep.subr.mxu0 0.0
    %960 = vmatpush2.msra.mxu0 0.0
    %961 = vmatprep.subr.mxu0 0.0
    %962 = vmatpush2.msra.mxu0 0.0
    %963 = vmatprep.subr.mxu0 0.0
    %964 = vmatpush2.msra.mxu0 0.0
    %965 = vmatprep.subr.mxu0 0.0
    %966 = vmatpush2.msra.mxu0 0.0
    %967 = vmatprep.subr.mxu0 0.0
    %968 = vmatpush2.msra.mxu0 0.0
    %969 = vmatprep.subr.mxu0 0.0
    %970 = vmatpush2.msra.mxu0 0.0
    %971 = vmatprep.subr.mxu0 0.0
    %972 = vmatpush2.msra.mxu0 0.0
    %973 = vmatprep.mubr.f32.mxu0 0.0
    %974 = vmatmul.mubr.f32.gmra.mxu0 %v881
    %v975 = vpop.f32.mrf.mxu0
    %v976 = vadd.f32 0.0, %v975
    %v977 = vpop.f32.mrf.mxu0
    %978 = vmatprep.mubr.f32.mxu0 0.0
    %979 = vmatmul.mubr.f32.gmra.mxu0 %v882
    %v980 = vpop.f32.mrf.mxu0
    %v981 = vadd.f32 0.0, %v980
    %v982 = vpop.f32.mrf.mxu0
    %983 = vmatprep.mubr.f32.mxu0 0.0
    %984 = vmatmul.mubr.f32.gmra.mxu0 %v883
    %v985 = vpop.f32.mrf.mxu0
    %v986 = vadd.f32 0.0, %v985
    %v987 = vpop.f32.mrf.mxu0
    %988 = vmatprep.mubr.f32.mxu0 0.0
    %989 = vmatmul.mubr.f32.gmra.mxu0 %v884
    %v990 = vpop.f32.mrf.mxu0
    %v991 = vadd.f32 0.0, %v990
    %v992 = vpop.f32.mrf.mxu0
    %993 = vmatprep.mubr.f32.mxu0 0.0
    %994 = vmatmul.mubr.f32.gmra.mxu0 %v885
    %v995 = vpop.f32.mrf.mxu0
    %v996 = vadd.f32 0.0, %v995
    %v997 = vpop.f32.mrf.mxu0
    %998 = vmatprep.mubr.f32.mxu0 0.0
    %999 = vmatmul.mubr.f32.gmra.mxu0 %v886
    %v1000 = vpop.f32.mrf.mxu0
    %v1001 = vadd.f32 0.0, %v1000
    %v1002 = vpop.f32.mrf.mxu0
    %1003 = vmatprep.mubr.f32.mxu0 0.0
    %1004 = vmatmul.mubr.f32.gmra.mxu0 %v887
    %v1005 = vpop.f32.mrf.mxu0
    %v1006 = vadd.f32 0.0, %v1005
    %v1007 = vpop.f32.mrf.mxu0
    %1008 = vmatprep.mubr.f32.mxu0 0.0
    %1009 = vmatmul.mubr.f32.gmra.mxu0 %v888
    %v1010 = vpop.f32.mrf.mxu0
    %v1011 = vadd.f32 0.0, %v1010
    %v1012 = vpop.f32.mrf.mxu0
    %1013 = vmatprep.mubr.f32.mxu0 0.0
    %1014 = vmatmul.mubr.f32.gmra.mxu0 %v889
    %v1015 = vpop.f32.mrf.mxu0
    %v1016 = vadd.f32 0.0, %v1015
    %v1017 = vpop.f32.mrf.mxu0
    %1018 = vmatprep.mubr.f32.mxu0 0.0
    %1019 = vmatmul.mubr.f32.gmra.mxu0 %v890
    %v1020 = vpop.f32.mrf.mxu0
    %v1021 = vadd.f32 0.0, %v1020
    %v1022 = vpop.f32.mrf.mxu0
    %1023 = vmatprep.mubr.f32.mxu0 0.0
    %1024 = vmatmul.mubr.f32.gmra.mxu0 %v891
    %v1025 = vpop.f32.mrf.mxu0
    %v1026 = vadd.f32 0.0, %v1025
    %v1027 = vpop.f32.mrf.mxu0
    %1028 = vmatprep.mubr.f32.mxu0 0.0
    %1029 = vmatmul.mubr.f32.gmra.mxu0 %v892
    %v1030 = vpop.f32.mrf.mxu0
    %v1031 = vadd.f32 0.0, %v1030
    %v1032 = vpop.f32.mrf.mxu0
    %1033 = vdwg.mxu0
    %v1034 = vmul.f32 %v823, %v976
    %v1035 = vmul.f32 %v828, %v981
    %v1036 = vmul.f32 %v833, %v986
    %v1037 = vmul.f32 %v838, %v991
    %v1038 = vmul.f32 %v843, %v996
    %v1039 = vmul.f32 %v848, %v1001
    %v1040 = vmul.f32 %v853, %v1006
    %v1041 = vmul.f32 %v858, %v1011
    %v1042 = vmul.f32 %v863, %v1016
    %v1043 = vmul.f32 %v868, %v1021
    %v1044 = vmul.f32 %v873, %v1026
    %v1045 = vmul.f32 %v878, %v1031
    %v1046 = vlaneseq
    %v1047 = vand.u32 %v1046, 127
    %v1048 = vld [vmem:[%s4] sm:$0xff]
    %v1049 = vld [vmem:[%s4 + $0x8] sm:$0xff]
    %v1050 = vld [vmem:[%s4 + $0x10] sm:$0xff]
    %v1051 = vld [vmem:[%s4 + $0x18] sm:$0xff]
    %v1052 = vld [vmem:[%s4 + $0x20] sm:$0xff]
    %v1053 = vld [vmem:[%s4 + $0x28] sm:$0xff]
    %v1054 = vld [vmem:[%s4 + $0x30] sm:$0xff]
    %v1055 = vld [vmem:[%s4 + $0x38] sm:$0xff]
    %v1056 = vld [vmem:[%s4 + $0x40] sm:$0xff]
    %v1057 = vld [vmem:[%s4 + $0x48] sm:$0xff]
    %v1058 = vld [vmem:[%s4 + $0x50] sm:$0xff]
    %v1059 = vld [vmem:[%s4 + $0x58] sm:$0xff]
    %1060 = vset.pattern.permute.xlu0 0
    %1061 = vperm.xlu0 %1060, %v1048
    %v1062 = vpop.permute.xlu0 %1061
    %1063 = vset.pattern.permute.xlu0 0
    %1064 = vperm.xlu0 %1063, %v1049
    %v1065 = vpop.permute.xlu0 %1064
    %1066 = vset.pattern.permute.xlu0 0
    %1067 = vperm.xlu0 %1066, %v1050
    %v1068 = vpop.permute.xlu0 %1067
    %1069 = vset.pattern.permute.xlu0 0
    %1070 = vperm.xlu0 %1069, %v1051
    %v1071 = vpop.permute.xlu0 %1070
    %1072 = vset.pattern.permute.xlu0 0
    %1073 = vperm.xlu0 %1072, %v1052
    %v1074 = vpop.permute.xlu0 %1073
    %1075 = vset.pattern.permute.xlu0 0
    %1076 = vperm.xlu0 %1075, %v1053
    %v1077 = vpop.permute.xlu0 %1076
    %1078 = vset.pattern.permute.xlu0 0
    %1079 = vperm.xlu0 %1078, %v1054
    %v1080 = vpop.permute.xlu0 %1079
    %1081 = vset.pattern.permute.xlu0 0
    %1082 = vperm.xlu0 %1081, %v1055
    %v1083 = vpop.permute.xlu0 %1082
    %1084 = vset.pattern.permute.xlu0 0
    %1085 = vperm.xlu0 %1084, %v1056
    %v1086 = vpop.permute.xlu0 %1085
    %1087 = vset.pattern.permute.xlu0 0
    %1088 = vperm.xlu0 %1087, %v1057
    %v1089 = vpop.permute.xlu0 %1088
    %1090 = vset.pattern.permute.xlu0 0
    %1091 = vperm.xlu0 %1090, %v1058
    %v1092 = vpop.permute.xlu0 %1091
    %1093 = vset.pattern.permute.xlu0 0
    %1094 = vperm.xlu0 %1093, %v1059
    %v1095 = vpop.permute.xlu0 %1094
    %vm1096 = vcmp.eq.s32.totalorder %v1062, %v1047
    %vm1097 = vcmp.eq.s32.totalorder %v1065, %v1047
    %vm1098 = vcmp.eq.s32.totalorder %v1068, %v1047
    %vm1099 = vcmp.eq.s32.totalorder %v1071, %v1047
    %vm1100 = vcmp.eq.s32.totalorder %v1074, %v1047
    %vm1101 = vcmp.eq.s32.totalorder %v1077, %v1047
    %vm1102 = vcmp.eq.s32.totalorder %v1080, %v1047
    %vm1103 = vcmp.eq.s32.totalorder %v1083, %v1047
    %vm1104 = vcmp.eq.s32.totalorder %v1086, %v1047
    %vm1105 = vcmp.eq.s32.totalorder %v1089, %v1047
    %vm1106 = vcmp.eq.s32.totalorder %v1092, %v1047
    %vm1107 = vcmp.eq.s32.totalorder %v1095, %v1047
    %v1108 = vsel %vm1096, 1, 0
    %v1109 = vsel %vm1097, 1, 0
    %v1110 = vsel %vm1098, 1, 0
    %v1111 = vsel %vm1099, 1, 0
    %v1112 = vsel %vm1100, 1, 0
    %v1113 = vsel %vm1101, 1, 0
    %v1114 = vsel %vm1102, 1, 0
    %v1115 = vsel %vm1103, 1, 0
    %v1116 = vsel %vm1104, 1, 0
    %v1117 = vsel %vm1105, 1, 0
    %v1118 = vsel %vm1106, 1, 0
    %v1119 = vsel %vm1107, 1, 0
    %v1120 = vcvt.s32.f32 %v1108
    %v1121 = vcvt.s32.f32 %v1109
    %v1122 = vcvt.s32.f32 %v1110
    %v1123 = vcvt.s32.f32 %v1111
    %v1124 = vcvt.s32.f32 %v1112
    %v1125 = vcvt.s32.f32 %v1113
    %v1126 = vcvt.s32.f32 %v1114
    %v1127 = vcvt.s32.f32 %v1115
    %v1128 = vcvt.s32.f32 %v1116
    %v1129 = vcvt.s32.f32 %v1117
    %v1130 = vcvt.s32.f32 %v1118
    %v1131 = vcvt.s32.f32 %v1119
    %vm1132 = vcmask 523264
    %v1134 = vsel %vm1132, %v1120, 0
    %v1137 = vsel %vm1132, %v1121, 0
    %v1140 = vsel %vm1132, %v1122, 0
    %v1143 = vsel %vm1132, %v1123, 0
    %v1146 = vsel %vm1132, %v1124, 0
    %v1149 = vsel %vm1132, %v1125, 0
    %v1152 = vsel %vm1132, %v1126, 0
    %v1155 = vsel %vm1132, %v1127, 0
    %v1158 = vsel %vm1132, %v1128, 0
    %v1161 = vsel %vm1132, %v1129, 0
    %v1164 = vsel %vm1132, %v1130, 0
    %v1167 = vsel %vm1132, %v1131, 0
    %1169 = vmatprep.subr.mxu0 0.0
    %1170 = vmatpush1.msra.mxu0 0.0
    %1171 = vmatprep.subr.mxu0 0.0
    %1172 = vmatpush1.msra.mxu0 0.0
    %1173 = vmatprep.subr.mxu0 0.0
    %1174 = vmatpush1.msra.mxu0 0.0
    %1175 = vmatprep.subr.mxu0 0.0
    %1176 = vmatpush1.msra.mxu0 0.0
    %1177 = vmatprep.subr.mxu0 0.0
    %1178 = vmatpush1.msra.mxu0 0.0
    %1179 = vmatprep.subr.mxu0 0.0
    %1180 = vmatpush1.msra.mxu0 0.0
    %1181 = vmatprep.subr.mxu0 0.0
    %1182 = vmatpush1.msra.mxu0 0.0
    %1183 = vmatprep.subr.mxu0 0.0
    %1184 = vmatpush1.msra.mxu0 0.0
    %1185 = vmatprep.subr.mxu0 0.0
    %1186 = vmatpush1.msra.mxu0 %v703
    %1187 = vmatprep.subr.mxu0 0.0
    %1188 = vmatpush1.msra.mxu0 %v702
    %1189 = vmatprep.subr.mxu0 0.0
    %1190 = vmatpush1.msra.mxu0 %v701
    %1191 = vmatprep.subr.mxu0 0.0
    %1192 = vmatpush1.msra.mxu0 %v700
    %1193 = vmatprep.subr.mxu0 0.0
    %1194 = vmatpush1.msra.mxu0 %v699
    %1195 = vmatprep.subr.mxu0 0.0
    %1196 = vmatpush1.msra.mxu0 %v698
    %1197 = vmatprep.subr.mxu0 0.0
    %1198 = vmatpush1.msra.mxu0 %v697
    %1199 = vmatprep.subr.mxu0 0.0
    %1200 = vmatpush1.msra.mxu0 %v696
    %1201 = vmatprep.subr.mxu0 0.0
    %1202 = vmatpush2.msra.mxu0 0.0
    %1203 = vmatprep.subr.mxu0 0.0
    %1204 = vmatpush2.msra.mxu0 0.0
    %1205 = vmatprep.subr.mxu0 0.0
    %1206 = vmatpush2.msra.mxu0 0.0
    %1207 = vmatprep.subr.mxu0 0.0
    %1208 = vmatpush2.msra.mxu0 0.0
    %1209 = vmatprep.subr.mxu0 0.0
    %1210 = vmatpush2.msra.mxu0 0.0
    %1211 = vmatprep.subr.mxu0 0.0
    %1212 = vmatpush2.msra.mxu0 0.0
    %1213 = vmatprep.subr.mxu0 0.0
    %1214 = vmatpush2.msra.mxu0 0.0
    %1215 = vmatprep.subr.mxu0 0.0
    %1216 = vmatpush2.msra.mxu0 0.0
    %1217 = vmatprep.subr.mxu0 0.0
    %1218 = vmatpush2.msra.mxu0 0.0
    %1219 = vmatprep.subr.mxu0 0.0
    %1220 = vmatpush2.msra.mxu0 0.0
    %1221 = vmatprep.subr.mxu0 0.0
    %1222 = vmatpush2.msra.mxu0 0.0
    %1223 = vmatprep.subr.mxu0 0.0
    %1224 = vmatpush2.msra.mxu0 0.0
    %1225 = vmatprep.subr.mxu0 0.0
    %1226 = vmatpush2.msra.mxu0 0.0
    %1227 = vmatprep.subr.mxu0 0.0
    %1228 = vmatpush2.msra.mxu0 0.0
    %1229 = vmatprep.subr.mxu0 0.0
    %1230 = vmatpush2.msra.mxu0 0.0
    %1231 = vmatprep.subr.mxu0 0.0
    %1232 = vmatpush2.msra.mxu0 0.0
    %1233 = vmatprep.mubr.f32.mxu0 0.0
    %1234 = vmatmul.mubr.f32.gmra.mxu0 %v1134
    %v1235 = vpop.f32.mrf.mxu0
    %v1236 = vadd.f32 0.0, %v1235
    %v1237 = vpop.f32.mrf.mxu0
    %1238 = vmatprep.mubr.f32.mxu0 0.0
    %1239 = vmatmul.mubr.f32.gmra.mxu0 %v1137
    %v1240 = vpop.f32.mrf.mxu0
    %v1241 = vadd.f32 0.0, %v1240
    %v1242 = vpop.f32.mrf.mxu0
    %1243 = vmatprep.mubr.f32.mxu0 0.0
    %1244 = vmatmul.mubr.f32.gmra.mxu0 %v1140
    %v1245 = vpop.f32.mrf.mxu0
    %v1246 = vadd.f32 0.0, %v1245
    %v1247 = vpop.f32.mrf.mxu0
    %1248 = vmatprep.mubr.f32.mxu0 0.0
    %1249 = vmatmul.mubr.f32.gmra.mxu0 %v1143
    %v1250 = vpop.f32.mrf.mxu0
    %v1251 = vadd.f32 0.0, %v1250
    %v1252 = vpop.f32.mrf.mxu0
    %1253 = vmatprep.mubr.f32.mxu0 0.0
    %1254 = vmatmul.mubr.f32.gmra.mxu0 %v1146
    %v1255 = vpop.f32.mrf.mxu0
    %v1256 = vadd.f32 0.0, %v1255
    %v1257 = vpop.f32.mrf.mxu0
    %1258 = vmatprep.mubr.f32.mxu0 0.0
    %1259 = vmatmul.mubr.f32.gmra.mxu0 %v1149
    %v1260 = vpop.f32.mrf.mxu0
    %v1261 = vadd.f32 0.0, %v1260
    %v1262 = vpop.f32.mrf.mxu0
    %1263 = vmatprep.mubr.f32.mxu0 0.0
    %1264 = vmatmul.mubr.f32.gmra.mxu0 %v1152
    %v1265 = vpop.f32.mrf.mxu0
    %v1266 = vadd.f32 0.0, %v1265
    %v1267 = vpop.f32.mrf.mxu0
    %1268 = vmatprep.mubr.f32.mxu0 0.0
    %1269 = vmatmul.mubr.f32.gmra.mxu0 %v1155
    %v1270 = vpop.f32.mrf.mxu0
    %v1271 = vadd.f32 0.0, %v1270
    %v1272 = vpop.f32.mrf.mxu0
    %1273 = vmatprep.mubr.f32.mxu0 0.0
    %1274 = vmatmul.mubr.f32.gmra.mxu0 %v1158
    %v1275 = vpop.f32.mrf.mxu0
    %v1276 = vadd.f32 0.0, %v1275
    %v1277 = vpop.f32.mrf.mxu0
    %1278 = vmatprep.mubr.f32.mxu0 0.0
    %1279 = vmatmul.mubr.f32.gmra.mxu0 %v1161
    %v1280 = vpop.f32.mrf.mxu0
    %v1281 = vadd.f32 0.0, %v1280
    %v1282 = vpop.f32.mrf.mxu0
    %1283 = vmatprep.mubr.f32.mxu0 0.0
    %1284 = vmatmul.mubr.f32.gmra.mxu0 %v1164
    %v1285 = vpop.f32.mrf.mxu0
    %v1286 = vadd.f32 0.0, %v1285
    %v1287 = vpop.f32.mrf.mxu0
    %1288 = vmatprep.mubr.f32.mxu0 0.0
    %1289 = vmatmul.mubr.f32.gmra.mxu0 %v1167
    %v1290 = vpop.f32.mrf.mxu0
    %v1291 = vadd.f32 0.0, %v1290
    %v1292 = vpop.f32.mrf.mxu0
    %1293 = vdwg.mxu0
    %v1294 = vmul.f32 %v1236, %v1034
    %v1295 = vmul.f32 %v1241, %v1035
    %v1296 = vmul.f32 %v1246, %v1036
    %v1297 = vmul.f32 %v1251, %v1037
    %v1298 = vmul.f32 %v1256, %v1038
    %v1299 = vmul.f32 %v1261, %v1039
    %v1300 = vmul.f32 %v1266, %v1040
    %v1301 = vmul.f32 %v1271, %v1041
    %v1302 = vmul.f32 %v1276, %v1042
    %v1303 = vmul.f32 %v1281, %v1043
    %v1304 = vmul.f32 %v1286, %v1044
    %v1305 = vmul.f32 %v1291, %v1045
    %v1306 = vlaneseq
    %v1307 = vshrl.u32 %v1306, 7
    %v1308 = vadd.s32 %v1307, 8
    %v1309 = vadd.s32 %v1307, 16
    %v1310 = vadd.s32 %v1307, 24
    %v1311 = vadd.s32 %v1307, 32
    %v1312 = vadd.s32 %v1307, 40
    %v1313 = vadd.s32 %v1307, 48
    %v1314 = vadd.s32 %v1307, 56
    %v1315 = vld [vmem:[%s5] sm:$0x1]
    %v1316 = vlaneseq
    %v1317 = vshrl.u32 %v1316, 7
    %v1318 = vsub.s32 0, %v1317
    %v1319 = vrot.slane %v1315, %v1318
    %vm1320 = vcmp.eq.s32.totalorder %v1307, %v1319
    %vm1321 = vcmp.eq.s32.totalorder %v1308, %v1319
    %vm1322 = vcmp.eq.s32.totalorder %v1309, %v1319
    %vm1323 = vcmp.eq.s32.totalorder %v1310, %v1319
    %vm1324 = vcmp.eq.s32.totalorder %v1311, %v1319
    %vm1325 = vcmp.eq.s32.totalorder %v1312, %v1319
    %vm1326 = vcmp.eq.s32.totalorder %v1313, %v1319
    %vm1327 = vcmp.eq.s32.totalorder %v1314, %v1319
    %v1328 = vsel %vm1320, 1, 0
    %v1329 = vsel %vm1321, 1, 0
    %v1330 = vsel %vm1322, 1, 0
    %v1331 = vsel %vm1323, 1, 0
    %v1332 = vsel %vm1324, 1, 0
    %v1333 = vsel %vm1325, 1, 0
    %v1334 = vsel %vm1326, 1, 0
    %v1335 = vsel %vm1327, 1, 0
    %v1336 = vcvt.s32.f32 %v1328
    %v1337 = vcvt.s32.f32 %v1329
    %v1338 = vcvt.s32.f32 %v1330
    %v1339 = vcvt.s32.f32 %v1331
    %v1340 = vcvt.s32.f32 %v1332
    %v1341 = vcvt.s32.f32 %v1333
    %v1342 = vcvt.s32.f32 %v1334
    %v1343 = vcvt.s32.f32 %v1335
    %vm1344 = vcmask 785408
    %v1346 = vsel %vm1344, %v1336, 0
    %v1349 = vsel %vm1344, %v1337, 0
    %v1352 = vsel %vm1344, %v1338, 0
    %v1355 = vsel %vm1344, %v1339, 0
    %v1358 = vsel %vm1344, %v1340, 0
    %v1361 = vsel %vm1344, %v1341, 0
    %v1364 = vsel %vm1344, %v1342, 0
    %v1367 = vsel %vm1344, %v1343, 0
    %1369 = vmatprep.subr.mxu0 0.0
    %1370 = vmatpush1.msra.mxu0 0.0
    %1371 = vmatprep.subr.mxu0 0.0
    %1372 = vmatpush1.msra.mxu0 0.0
    %1373 = vmatprep.subr.mxu0 0.0
    %1374 = vmatpush1.msra.mxu0 0.0
    %1375 = vmatprep.subr.mxu0 0.0
    %1376 = vmatpush1.msra.mxu0 0.0
    %1377 = vmatprep.subr.mxu0 0.0
    %1378 = vmatpush1.msra.mxu0 %v1305
    %1379 = vmatprep.subr.mxu0 0.0
    %1380 = vmatpush1.msra.mxu0 %v1304
    %1381 = vmatprep.subr.mxu0 0.0
    %1382 = vmatpush1.msra.mxu0 %v1303
    %1383 = vmatprep.subr.mxu0 0.0
    %1384 = vmatpush1.msra.mxu0 %v1302
    %1385 = vmatprep.subr.mxu0 0.0
    %1386 = vmatpush1.msra.mxu0 %v1301
    %1387 = vmatprep.subr.mxu0 0.0
    %1388 = vmatpush1.msra.mxu0 %v1300
    %1389 = vmatprep.subr.mxu0 0.0
    %1390 = vmatpush1.msra.mxu0 %v1299
    %1391 = vmatprep.subr.mxu0 0.0
    %1392 = vmatpush1.msra.mxu0 %v1298
    %1393 = vmatprep.subr.mxu0 0.0
    %1394 = vmatpush1.msra.mxu0 %v1297
    %1395 = vmatprep.subr.mxu0 0.0
    %1396 = vmatpush1.msra.mxu0 %v1296
    %1397 = vmatprep.subr.mxu0 0.0
    %1398 = vmatpush1.msra.mxu0 %v1295
    %1399 = vmatprep.subr.mxu0 0.0
    %1400 = vmatpush1.msra.mxu0 %v1294
    %1401 = vmatprep.subr.mxu0 0.0
    %1402 = vmatpush2.msra.mxu0 0.0
    %1403 = vmatprep.subr.mxu0 0.0
    %1404 = vmatpush2.msra.mxu0 0.0
    %1405 = vmatprep.subr.mxu0 0.0
    %1406 = vmatpush2.msra.mxu0 0.0
    %1407 = vmatprep.subr.mxu0 0.0
    %1408 = vmatpush2.msra.mxu0 0.0
    %1409 = vmatprep.subr.mxu0 0.0
    %1410 = vmatpush2.msra.mxu0 0.0
    %1411 = vmatprep.subr.mxu0 0.0
    %1412 = vmatpush2.msra.mxu0 0.0
    %1413 = vmatprep.subr.mxu0 0.0
    %1414 = vmatpush2.msra.mxu0 0.0
    %1415 = vmatprep.subr.mxu0 0.0
    %1416 = vmatpush2.msra.mxu0 0.0
    %1417 = vmatprep.subr.mxu0 0.0
    %1418 = vmatpush2.msra.mxu0 0.0
    %1419 = vmatprep.subr.mxu0 0.0
    %1420 = vmatpush2.msra.mxu0 0.0
    %1421 = vmatprep.subr.mxu0 0.0
    %1422 = vmatpush2.msra.mxu0 0.0
    %1423 = vmatprep.subr.mxu0 0.0
    %1424 = vmatpush2.msra.mxu0 0.0
    %1425 = vmatprep.subr.mxu0 0.0
    %1426 = vmatpush2.msra.mxu0 0.0
    %1427 = vmatprep.subr.mxu0 0.0
    %1428 = vmatpush2.msra.mxu0 0.0
    %1429 = vmatprep.subr.mxu0 0.0
    %1430 = vmatpush2.msra.mxu0 0.0
    %1431 = vmatprep.subr.mxu0 0.0
    %1432 = vmatpush2.msra.mxu0 0.0
    %1433 = vmatprep.mubr.f32.mxu0 0.0
    %1434 = vmatmul.mubr.f32.gmra.mxu0 %v1346
    %v1435 = vpop.f32.mrf.mxu0
    %v1436 = vadd.f32 0.0, %v1435
    %v1437 = vpop.f32.mrf.mxu0
    %1438 = vmatprep.mubr.f32.mxu0 0.0
    %1439 = vmatmul.mubr.f32.gmra.mxu0 %v1349
    %v1440 = vpop.f32.mrf.mxu0
    %v1441 = vadd.f32 0.0, %v1440
    %v1442 = vpop.f32.mrf.mxu0
    %1443 = vmatprep.mubr.f32.mxu0 0.0
    %1444 = vmatmul.mubr.f32.gmra.mxu0 %v1352
    %v1445 = vpop.f32.mrf.mxu0
    %v1446 = vadd.f32 0.0, %v1445
    %v1447 = vpop.f32.mrf.mxu0
    %1448 = vmatprep.mubr.f32.mxu0 0.0
    %1449 = vmatmul.mubr.f32.gmra.mxu0 %v1355
    %v1450 = vpop.f32.mrf.mxu0
    %v1451 = vadd.f32 0.0, %v1450
    %v1452 = vpop.f32.mrf.mxu0
    %1453 = vmatprep.mubr.f32.mxu0 0.0
    %1454 = vmatmul.mubr.f32.gmra.mxu0 %v1358
    %v1455 = vpop.f32.mrf.mxu0
    %v1456 = vadd.f32 0.0, %v1455
    %v1457 = vpop.f32.mrf.mxu0
    %1458 = vmatprep.mubr.f32.mxu0 0.0
    %1459 = vmatmul.mubr.f32.gmra.mxu0 %v1361
    %v1460 = vpop.f32.mrf.mxu0
    %v1461 = vadd.f32 0.0, %v1460
    %v1462 = vpop.f32.mrf.mxu0
    %1463 = vmatprep.mubr.f32.mxu0 0.0
    %1464 = vmatmul.mubr.f32.gmra.mxu0 %v1364
    %v1465 = vpop.f32.mrf.mxu0
    %v1466 = vadd.f32 0.0, %v1465
    %v1467 = vpop.f32.mrf.mxu0
    %1468 = vmatprep.mubr.f32.mxu0 0.0
    %1469 = vmatmul.mubr.f32.gmra.mxu0 %v1367
    %v1470 = vpop.f32.mrf.mxu0
    %v1471 = vadd.f32 0.0, %v1470
    %v1472 = vpop.f32.mrf.mxu0
    %1473 = vdwg.mxu0
    %v1474 = vld [vmem:[%s6 + $0x20] sm:$0xff]
    %v1475 = vld [vmem:[%s6 + $0x28] sm:$0xff]
    %vm1476 = vcmask 130048
    %v1478 = vsel %vm1476, %v1436, 0
    %v1481 = vsel %vm1476, %v1441, 0
    %v1484 = vsel %vm1476, %v1446, 0
    %v1487 = vsel %vm1476, %v1451, 0
    %v1490 = vsel %vm1476, %v1456, 0
    %v1493 = vsel %vm1476, %v1461, 0
    %v1496 = vsel %vm1476, %v1466, 0
    %v1499 = vsel %vm1476, %v1471, 0
    %1501 = vmatprep.subr.mxu0 0.0
    %1502 = vmatpush1.msra.mxu0 0.0
    %1503 = vmatprep.subr.mxu0 0.0
    %1504 = vmatpush1.msra.mxu0 0.0
    %1505 = vmatprep.subr.mxu0 0.0
    %1506 = vmatpush1.msra.mxu0 0.0
    %1507 = vmatprep.subr.mxu0 0.0
    %1508 = vmatpush1.msra.mxu0 0.0
    %1509 = vmatprep.subr.mxu0 0.0
    %1510 = vmatpush1.msra.mxu0 0.0
    %1511 = vmatprep.subr.mxu0 0.0
    %1512 = vmatpush1.msra.mxu0 0.0
    %1513 = vmatprep.subr.mxu0 0.0
    %1514 = vmatpush1.msra.mxu0 0.0
    %1515 = vmatprep.subr.mxu0 0.0
    %1516 = vmatpush1.msra.mxu0 0.0
    %1517 = vmatprep.subr.mxu0 0.0
    %1518 = vmatpush1.msra.mxu0 0.0
    %1519 = vmatprep.subr.mxu0 0.0
    %1520 = vmatpush1.msra.mxu0 0.0
    %1521 = vmatprep.subr.mxu0 0.0
    %1522 = vmatpush1.msra.mxu0 0.0
    %1523 = vmatprep.subr.mxu0 0.0
    %1524 = vmatpush1.msra.mxu0 0.0
    %1525 = vmatprep.subr.mxu0 0.0
    %1526 = vmatpush1.msra.mxu0 0.0
    %1527 = vmatprep.subr.mxu0 0.0
    %1528 = vmatpush1.msra.mxu0 0.0
    %1529 = vmatprep.subr.mxu0 0.0
    %1530 = vmatpush1.msra.mxu0 %v1475
    %1531 = vmatprep.subr.mxu0 0.0
    %1532 = vmatpush1.msra.mxu0 %v1474
    %1533 = vmatprep.subr.mxu0 0.0
    %1534 = vmatpush2.msra.mxu0 0.0
    %1535 = vmatprep.subr.mxu0 0.0
    %1536 = vmatpush2.msra.mxu0 0.0
    %1537 = vmatprep.subr.mxu0 0.0
    %1538 = vmatpush2.msra.mxu0 0.0
    %1539 = vmatprep.subr.mxu0 0.0
    %1540 = vmatpush2.msra.mxu0 0.0
    %1541 = vmatprep.subr.mxu0 0.0
    %1542 = vmatpush2.msra.mxu0 0.0
    %1543 = vmatprep.subr.mxu0 0.0
    %1544 = vmatpush2.msra.mxu0 0.0
    %1545 = vmatprep.subr.mxu0 0.0
    %1546 = vmatpush2.msra.mxu0 0.0
    %1547 = vmatprep.subr.mxu0 0.0
    %1548 = vmatpush2.msra.mxu0 0.0
    %1549 = vmatprep.subr.mxu0 0.0
    %1550 = vmatpush2.msra.mxu0 0.0
    %1551 = vmatprep.subr.mxu0 0.0
    %1552 = vmatpush2.msra.mxu0 0.0
    %1553 = vmatprep.subr.mxu0 0.0
    %1554 = vmatpush2.msra.mxu0 0.0
    %1555 = vmatprep.subr.mxu0 0.0
    %1556 = vmatpush2.msra.mxu0 0.0
    %1557 = vmatprep.subr.mxu0 0.0
    %1558 = vmatpush2.msra.mxu0 0.0
    %1559 = vmatprep.subr.mxu0 0.0
    %1560 = vmatpush2.msra.mxu0 0.0
    %1561 = vmatprep.subr.mxu0 0.0
    %1562 = vmatpush2.msra.mxu0 0.0
    %1563 = vmatprep.subr.mxu0 0.0
    %1564 = vmatpush2.msra.mxu0 0.0
    %1565 = vmatprep.mubr.f32.mxu0 0.0
    %1566 = vmatmul.mubr.f32.gmra.mxu0 %v1478
    %v1567 = vpop.f32.mrf.mxu0
    %v1568 = vadd.f32 0.0, %v1567
    %v1569 = vpop.f32.mrf.mxu0
    %1570 = vmatprep.mubr.f32.mxu0 0.0
    %1571 = vmatmul.mubr.f32.gmra.mxu0 %v1481
    %v1572 = vpop.f32.mrf.mxu0
    %v1573 = vadd.f32 0.0, %v1572
    %v1574 = vpop.f32.mrf.mxu0
    %1575 = vmatprep.mubr.f32.mxu0 0.0
    %1576 = vmatmul.mubr.f32.gmra.mxu0 %v1484
    %v1577 = vpop.f32.mrf.mxu0
    %v1578 = vadd.f32 0.0, %v1577
    %v1579 = vpop.f32.mrf.mxu0
    %1580 = vmatprep.mubr.f32.mxu0 0.0
    %1581 = vmatmul.mubr.f32.gmra.mxu0 %v1487
    %v1582 = vpop.f32.mrf.mxu0
    %v1583 = vadd.f32 0.0, %v1582
    %v1584 = vpop.f32.mrf.mxu0
    %1585 = vmatprep.mubr.f32.mxu0 0.0
    %1586 = vmatmul.mubr.f32.gmra.mxu0 %v1490
    %v1587 = vpop.f32.mrf.mxu0
    %v1588 = vadd.f32 0.0, %v1587
    %v1589 = vpop.f32.mrf.mxu0
    %1590 = vmatprep.mubr.f32.mxu0 0.0
    %1591 = vmatmul.mubr.f32.gmra.mxu0 %v1493
    %v1592 = vpop.f32.mrf.mxu0
    %v1593 = vadd.f32 0.0, %v1592
    %v1594 = vpop.f32.mrf.mxu0
    %1595 = vmatprep.mubr.f32.mxu0 0.0
    %1596 = vmatmul.mubr.f32.gmra.mxu0 %v1496
    %v1597 = vpop.f32.mrf.mxu0
    %v1598 = vadd.f32 0.0, %v1597
    %v1599 = vpop.f32.mrf.mxu0
    %1600 = vmatprep.mubr.f32.mxu0 0.0
    %1601 = vmatmul.mubr.f32.gmra.mxu0 %v1499
    %v1602 = vpop.f32.mrf.mxu0
    %v1603 = vadd.f32 0.0, %v1602
    %v1604 = vpop.f32.mrf.mxu0
    %1605 = vdwg.mxu0
    %v1606 = vxor.u32 %v1568, 2147483648
    %v1607 = vxor.u32 %v1573, 2147483648
    %v1608 = vxor.u32 %v1578, 2147483648
    %v1609 = vxor.u32 %v1583, 2147483648
    %v1610 = vxor.u32 %v1588, 2147483648
    %v1611 = vxor.u32 %v1593, 2147483648
    %v1612 = vxor.u32 %v1598, 2147483648
    %v1613 = vxor.u32 %v1603, 2147483648
    %v1614 = vmul.f32 %v1606, 1.442695
    %v1615 = vpow.pop %v1614
    %v1616 = vmul.f32 %v1607, 1.442695
    %v1617 = vpow.pop %v1616
    %v1618 = vmul.f32 %v1608, 1.442695
    %v1619 = vpow.pop %v1618
    %v1620 = vmul.f32 %v1609, 1.442695
    %v1621 = vpow.pop %v1620
    %v1622 = vmul.f32 %v1610, 1.442695
    %v1623 = vpow.pop %v1622
    %v1624 = vmul.f32 %v1611, 1.442695
    %v1625 = vpow.pop %v1624
    %v1626 = vmul.f32 %v1612, 1.442695
    %v1627 = vpow.pop %v1626
    %v1628 = vmul.f32 %v1613, 1.442695
    %v1629 = vpow.pop %v1628
    %v1630 = vadd.f32 %v1615, 1.0
    %v1631 = vadd.f32 %v1617, 1.0
    %v1632 = vadd.f32 %v1619, 1.0
    %v1633 = vadd.f32 %v1621, 1.0
    %v1634 = vadd.f32 %v1623, 1.0
    %v1635 = vadd.f32 %v1625, 1.0
    %v1636 = vadd.f32 %v1627, 1.0
    %v1637 = vadd.f32 %v1629, 1.0
    %v1638 = vrcp.pop %v1630
    %v1639 = vmul.f32 1.0, %v1638
    %v1640 = vrcp.pop %v1631
    %v1641 = vmul.f32 1.0, %v1640
    %v1642 = vrcp.pop %v1632
    %v1643 = vmul.f32 1.0, %v1642
    %v1644 = vrcp.pop %v1633
    %v1645 = vmul.f32 1.0, %v1644
    %v1646 = vrcp.pop %v1634
    %v1647 = vmul.f32 1.0, %v1646
    %v1648 = vrcp.pop %v1635
    %v1649 = vmul.f32 1.0, %v1648
    %v1650 = vrcp.pop %v1636
    %v1651 = vmul.f32 1.0, %v1650
    %v1652 = vrcp.pop %v1637
    %v1653 = vmul.f32 1.0, %v1652
    %v1654 = vmul.f32 %v1568, %v1639
    %v1655 = vmul.f32 %v1573, %v1641
    %v1656 = vmul.f32 %v1578, %v1643
    %v1657 = vmul.f32 %v1583, %v1645
    %v1658 = vmul.f32 %v1588, %v1647
    %v1659 = vmul.f32 %v1593, %v1649
    %v1660 = vmul.f32 %v1598, %v1651
    %v1661 = vmul.f32 %v1603, %v1653
    %v1662 = vadd.f32 %v379, %v1654
    %v1663 = vadd.f32 %v380, %v1655
    %v1664 = vadd.f32 %v381, %v1656
    %v1665 = vadd.f32 %v382, %v1657
    %v1666 = vadd.f32 %v383, %v1658
    %v1667 = vadd.f32 %v384, %v1659
    %v1668 = vadd.f32 %v385, %v1660
    %v1669 = vadd.f32 %v386, %v1661
    %v1670 = vld [vmem:[%s6 + $0x30] sm:$0xff]
    %v1671 = vld [vmem:[%s6 + $0x38] sm:$0xff]
    %v1672 = vld [vmem:[%s6 + $0x40] sm:$0xff]
    %v1673 = vld [vmem:[%s6 + $0x48] sm:$0xff]
    %v1674 = vld [vmem:[%s6 + $0x50] sm:$0xff]
    %v1675 = vld [vmem:[%s6 + $0x58] sm:$0xff]
    %v1676 = vld [vmem:[%s6 + $0x60] sm:$0xff]
    %v1677 = vld [vmem:[%s6 + $0x68] sm:$0xff]
    %v1678 = vlaneseq
    %v1679 = vshrl.u32 %v1678, 7
    %v1680 = vsub.s32 7, %v1679
    %v1681 = vrot.slane %v52, %v1680
    %v1683 = vsel %vm58, %v1662, 0
    %v1686 = vsel %vm58, %v1663, 0
    %v1689 = vsel %vm58, %v1664, 0
    %v1692 = vsel %vm58, %v1665, 0
    %v1695 = vsel %vm58, %v1666, 0
    %v1698 = vsel %vm58, %v1667, 0
    %v1701 = vsel %vm58, %v1668, 0
    %v1704 = vsel %vm58, %v1669, 0
    %1706 = vmatprep.subr.mxu0 0.0
    %1707 = vmatpush1.msra.mxu0 0.0
    %1708 = vmatprep.subr.mxu0 0.0
    %1709 = vmatpush1.msra.mxu0 0.0
    %1710 = vmatprep.subr.mxu0 0.0
    %1711 = vmatpush1.msra.mxu0 0.0
    %1712 = vmatprep.subr.mxu0 0.0
    %1713 = vmatpush1.msra.mxu0 0.0
    %1714 = vmatprep.subr.mxu0 0.0
    %1715 = vmatpush1.msra.mxu0 0.0
    %1716 = vmatprep.subr.mxu0 0.0
    %1717 = vmatpush1.msra.mxu0 0.0
    %1718 = vmatprep.subr.mxu0 0.0
    %1719 = vmatpush1.msra.mxu0 0.0
    %1720 = vmatprep.subr.mxu0 0.0
    %1721 = vmatpush1.msra.mxu0 0.0
    %1722 = vmatprep.subr.mxu0 0.0
    %1723 = vmatpush1.msra.mxu0 0.0
    %1724 = vmatprep.subr.mxu0 0.0
    %1725 = vmatpush1.msra.mxu0 0.0
    %1726 = vmatprep.subr.mxu0 0.0
    %1727 = vmatpush1.msra.mxu0 0.0
    %1728 = vmatprep.subr.mxu0 0.0
    %1729 = vmatpush1.msra.mxu0 0.0
    %1730 = vmatprep.subr.mxu0 0.0
    %1731 = vmatpush1.msra.mxu0 %v1673
    %1732 = vmatprep.subr.mxu0 0.0
    %1733 = vmatpush1.msra.mxu0 %v1672
    %1734 = vmatprep.subr.mxu0 0.0
    %1735 = vmatpush1.msra.mxu0 %v1671
    %1736 = vmatprep.subr.mxu0 0.0
    %1737 = vmatpush1.msra.mxu0 %v1670
    %1738 = vmatprep.subr.mxu0 0.0
    %1739 = vmatpush2.msra.mxu0 0.0
    %1740 = vmatprep.subr.mxu0 0.0
    %1741 = vmatpush2.msra.mxu0 0.0
    %1742 = vmatprep.subr.mxu0 0.0
    %1743 = vmatpush2.msra.mxu0 0.0
    %1744 = vmatprep.subr.mxu0 0.0
    %1745 = vmatpush2.msra.mxu0 0.0
    %1746 = vmatprep.subr.mxu0 0.0
    %1747 = vmatpush2.msra.mxu0 0.0
    %1748 = vmatprep.subr.mxu0 0.0
    %1749 = vmatpush2.msra.mxu0 0.0
    %1750 = vmatprep.subr.mxu0 0.0
    %1751 = vmatpush2.msra.mxu0 0.0
    %1752 = vmatprep.subr.mxu0 0.0
    %1753 = vmatpush2.msra.mxu0 0.0
    %1754 = vmatprep.subr.mxu0 0.0
    %1755 = vmatpush2.msra.mxu0 0.0
    %1756 = vmatprep.subr.mxu0 0.0
    %1757 = vmatpush2.msra.mxu0 0.0
    %1758 = vmatprep.subr.mxu0 0.0
    %1759 = vmatpush2.msra.mxu0 0.0
    %1760 = vmatprep.subr.mxu0 0.0
    %1761 = vmatpush2.msra.mxu0 0.0
    %1762 = vmatprep.subr.mxu0 0.0
    %1763 = vmatpush2.msra.mxu0 0.0
    %1764 = vmatprep.subr.mxu0 0.0
    %1765 = vmatpush2.msra.mxu0 0.0
    %1766 = vmatprep.subr.mxu0 0.0
    %1767 = vmatpush2.msra.mxu0 0.0
    %1768 = vmatprep.subr.mxu0 0.0
    %1769 = vmatpush2.msra.mxu0 0.0
    %1770 = vmatprep.mubr.f32.mxu0 0.0
    %1771 = vmatmul.mubr.f32.gmra.mxu0 %v1683
    %v1772 = vpop.f32.mrf.mxu0
    %v1773 = vadd.f32 %v1681, %v1772
    %v1774 = vpop.f32.mrf.mxu0
    %1775 = vmatprep.mubr.f32.mxu0 0.0
    %1776 = vmatmul.mubr.f32.gmra.mxu0 %v1686
    %v1777 = vpop.f32.mrf.mxu0
    %v1778 = vadd.f32 %v1681, %v1777
    %v1779 = vpop.f32.mrf.mxu0
    %1780 = vmatprep.mubr.f32.mxu0 0.0
    %1781 = vmatmul.mubr.f32.gmra.mxu0 %v1689
    %v1782 = vpop.f32.mrf.mxu0
    %v1783 = vadd.f32 %v1681, %v1782
    %v1784 = vpop.f32.mrf.mxu0
    %1785 = vmatprep.mubr.f32.mxu0 0.0
    %1786 = vmatmul.mubr.f32.gmra.mxu0 %v1692
    %v1787 = vpop.f32.mrf.mxu0
    %v1788 = vadd.f32 %v1681, %v1787
    %v1789 = vpop.f32.mrf.mxu0
    %1790 = vmatprep.mubr.f32.mxu0 0.0
    %1791 = vmatmul.mubr.f32.gmra.mxu0 %v1695
    %v1792 = vpop.f32.mrf.mxu0
    %v1793 = vadd.f32 %v1681, %v1792
    %v1794 = vpop.f32.mrf.mxu0
    %1795 = vmatprep.mubr.f32.mxu0 0.0
    %1796 = vmatmul.mubr.f32.gmra.mxu0 %v1698
    %v1797 = vpop.f32.mrf.mxu0
    %v1798 = vadd.f32 %v1681, %v1797
    %v1799 = vpop.f32.mrf.mxu0
    %1800 = vmatprep.mubr.f32.mxu0 0.0
    %1801 = vmatmul.mubr.f32.gmra.mxu0 %v1701
    %v1802 = vpop.f32.mrf.mxu0
    %v1803 = vadd.f32 %v1681, %v1802
    %v1804 = vpop.f32.mrf.mxu0
    %1805 = vmatprep.mubr.f32.mxu0 0.0
    %1806 = vmatmul.mubr.f32.gmra.mxu0 %v1704
    %v1807 = vpop.f32.mrf.mxu0
    %v1808 = vadd.f32 %v1681, %v1807
    %v1809 = vpop.f32.mrf.mxu0
    %1810 = vdwg.mxu0
    %v1811 = vxor.u32 %v1773, 2147483648
    %v1812 = vxor.u32 %v1778, 2147483648
    %v1813 = vxor.u32 %v1783, 2147483648
    %v1814 = vxor.u32 %v1788, 2147483648
    %v1815 = vxor.u32 %v1793, 2147483648
    %v1816 = vxor.u32 %v1798, 2147483648
    %v1817 = vxor.u32 %v1803, 2147483648
    %v1818 = vxor.u32 %v1808, 2147483648
    %v1819 = vmul.f32 %v1811, 1.442695
    %v1820 = vpow.pop %v1819
    %v1821 = vmul.f32 %v1812, 1.442695
    %v1822 = vpow.pop %v1821
    %v1823 = vmul.f32 %v1813, 1.442695
    %v1824 = vpow.pop %v1823
    %v1825 = vmul.f32 %v1814, 1.442695
    %v1826 = vpow.pop %v1825
    %v1827 = vmul.f32 %v1815, 1.442695
    %v1828 = vpow.pop %v1827
    %v1829 = vmul.f32 %v1816, 1.442695
    %v1830 = vpow.pop %v1829
    %v1831 = vmul.f32 %v1817, 1.442695
    %v1832 = vpow.pop %v1831
    %v1833 = vmul.f32 %v1818, 1.442695
    %v1834 = vpow.pop %v1833
    %v1835 = vadd.f32 %v1820, 1.0
    %v1836 = vadd.f32 %v1822, 1.0
    %v1837 = vadd.f32 %v1824, 1.0
    %v1838 = vadd.f32 %v1826, 1.0
    %v1839 = vadd.f32 %v1828, 1.0
    %v1840 = vadd.f32 %v1830, 1.0
    %v1841 = vadd.f32 %v1832, 1.0
    %v1842 = vadd.f32 %v1834, 1.0
    %v1843 = vrcp.pop %v1835
    %v1844 = vmul.f32 1.0, %v1843
    %v1845 = vrcp.pop %v1836
    %v1846 = vmul.f32 1.0, %v1845
    %v1847 = vrcp.pop %v1837
    %v1848 = vmul.f32 1.0, %v1847
    %v1849 = vrcp.pop %v1838
    %v1850 = vmul.f32 1.0, %v1849
    %v1851 = vrcp.pop %v1839
    %v1852 = vmul.f32 1.0, %v1851
    %v1853 = vrcp.pop %v1840
    %v1854 = vmul.f32 1.0, %v1853
    %v1855 = vrcp.pop %v1841
    %v1856 = vmul.f32 1.0, %v1855
    %v1857 = vrcp.pop %v1842
    %v1858 = vmul.f32 1.0, %v1857
    %v1859 = vmul.f32 %v1773, %v1844
    %v1860 = vmul.f32 %v1778, %v1846
    %v1861 = vmul.f32 %v1783, %v1848
    %v1862 = vmul.f32 %v1788, %v1850
    %v1863 = vmul.f32 %v1793, %v1852
    %v1864 = vmul.f32 %v1798, %v1854
    %v1865 = vmul.f32 %v1803, %v1856
    %v1866 = vmul.f32 %v1808, %v1858
    %v1867 = vlaneseq
    %v1868 = vshrl.u32 %v1867, 7
    %v1869 = vsub.s32 0, %v1868
    %v1870 = vrot.slane %v53, %v1869
    %v1872 = vsel %vm58, %v1859, 0
    %v1875 = vsel %vm58, %v1860, 0
    %v1878 = vsel %vm58, %v1861, 0
    %v1881 = vsel %vm58, %v1862, 0
    %v1884 = vsel %vm58, %v1863, 0
    %v1887 = vsel %vm58, %v1864, 0
    %v1890 = vsel %vm58, %v1865, 0
    %v1893 = vsel %vm58, %v1866, 0
    %1895 = vmatprep.subr.mxu0 0.0
    %1896 = vmatpush1.msra.mxu0 0.0
    %1897 = vmatprep.subr.mxu0 0.0
    %1898 = vmatpush1.msra.mxu0 0.0
    %1899 = vmatprep.subr.mxu0 0.0
    %1900 = vmatpush1.msra.mxu0 0.0
    %1901 = vmatprep.subr.mxu0 0.0
    %1902 = vmatpush1.msra.mxu0 0.0
    %1903 = vmatprep.subr.mxu0 0.0
    %1904 = vmatpush1.msra.mxu0 0.0
    %1905 = vmatprep.subr.mxu0 0.0
    %1906 = vmatpush1.msra.mxu0 0.0
    %1907 = vmatprep.subr.mxu0 0.0
    %1908 = vmatpush1.msra.mxu0 0.0
    %1909 = vmatprep.subr.mxu0 0.0
    %1910 = vmatpush1.msra.mxu0 0.0
    %1911 = vmatprep.subr.mxu0 0.0
    %1912 = vmatpush1.msra.mxu0 0.0
    %1913 = vmatprep.subr.mxu0 0.0
    %1914 = vmatpush1.msra.mxu0 0.0
    %1915 = vmatprep.subr.mxu0 0.0
    %1916 = vmatpush1.msra.mxu0 0.0
    %1917 = vmatprep.subr.mxu0 0.0
    %1918 = vmatpush1.msra.mxu0 0.0
    %1919 = vmatprep.subr.mxu0 0.0
    %1920 = vmatpush1.msra.mxu0 %v1677
    %1921 = vmatprep.subr.mxu0 0.0
    %1922 = vmatpush1.msra.mxu0 %v1676
    %1923 = vmatprep.subr.mxu0 0.0
    %1924 = vmatpush1.msra.mxu0 %v1675
    %1925 = vmatprep.subr.mxu0 0.0
    %1926 = vmatpush1.msra.mxu0 %v1674
    %1927 = vmatprep.subr.mxu0 0.0
    %1928 = vmatpush2.msra.mxu0 0.0
    %1929 = vmatprep.subr.mxu0 0.0
    %1930 = vmatpush2.msra.mxu0 0.0
    %1931 = vmatprep.subr.mxu0 0.0
    %1932 = vmatpush2.msra.mxu0 0.0
    %1933 = vmatprep.subr.mxu0 0.0
    %1934 = vmatpush2.msra.mxu0 0.0
    %1935 = vmatprep.subr.mxu0 0.0
    %1936 = vmatpush2.msra.mxu0 0.0
    %1937 = vmatprep.subr.mxu0 0.0
    %1938 = vmatpush2.msra.mxu0 0.0
    %1939 = vmatprep.subr.mxu0 0.0
    %1940 = vmatpush2.msra.mxu0 0.0
    %1941 = vmatprep.subr.mxu0 0.0
    %1942 = vmatpush2.msra.mxu0 0.0
    %1943 = vmatprep.subr.mxu0 0.0
    %1944 = vmatpush2.msra.mxu0 0.0
    %1945 = vmatprep.subr.mxu0 0.0
    %1946 = vmatpush2.msra.mxu0 0.0
    %1947 = vmatprep.subr.mxu0 0.0
    %1948 = vmatpush2.msra.mxu0 0.0
    %1949 = vmatprep.subr.mxu0 0.0
    %1950 = vmatpush2.msra.mxu0 0.0
    %1951 = vmatprep.subr.mxu0 0.0
    %1952 = vmatpush2.msra.mxu0 0.0
    %1953 = vmatprep.subr.mxu0 0.0
    %1954 = vmatpush2.msra.mxu0 0.0
    %1955 = vmatprep.subr.mxu0 0.0
    %1956 = vmatpush2.msra.mxu0 0.0
    %1957 = vmatprep.subr.mxu0 0.0
    %1958 = vmatpush2.msra.mxu0 0.0
    %1959 = vmatprep.mubr.f32.mxu0 0.0
    %1960 = vmatmul.mubr.f32.gmra.mxu0 %v1872
    %v1961 = vpop.f32.mrf.mxu0
    %v1962 = vadd.f32 %v1870, %v1961
    %v1963 = vpop.f32.mrf.mxu0
    %1964 = vmatprep.mubr.f32.mxu0 0.0
    %1965 = vmatmul.mubr.f32.gmra.mxu0 %v1875
    %v1966 = vpop.f32.mrf.mxu0
    %v1967 = vadd.f32 %v1870, %v1966
    %v1968 = vpop.f32.mrf.mxu0
    %1969 = vmatprep.mubr.f32.mxu0 0.0
    %1970 = vmatmul.mubr.f32.gmra.mxu0 %v1878
    %v1971 = vpop.f32.mrf.mxu0
    %v1972 = vadd.f32 %v1870, %v1971
    %v1973 = vpop.f32.mrf.mxu0
    %1974 = vmatprep.mubr.f32.mxu0 0.0
    %1975 = vmatmul.mubr.f32.gmra.mxu0 %v1881
    %v1976 = vpop.f32.mrf.mxu0
    %v1977 = vadd.f32 %v1870, %v1976
    %v1978 = vpop.f32.mrf.mxu0
    %1979 = vmatprep.mubr.f32.mxu0 0.0
    %1980 = vmatmul.mubr.f32.gmra.mxu0 %v1884
    %v1981 = vpop.f32.mrf.mxu0
    %v1982 = vadd.f32 %v1870, %v1981
    %v1983 = vpop.f32.mrf.mxu0
    %1984 = vmatprep.mubr.f32.mxu0 0.0
    %1985 = vmatmul.mubr.f32.gmra.mxu0 %v1887
    %v1986 = vpop.f32.mrf.mxu0
    %v1987 = vadd.f32 %v1870, %v1986
    %v1988 = vpop.f32.mrf.mxu0
    %1989 = vmatprep.mubr.f32.mxu0 0.0
    %1990 = vmatmul.mubr.f32.gmra.mxu0 %v1890
    %v1991 = vpop.f32.mrf.mxu0
    %v1992 = vadd.f32 %v1870, %v1991
    %v1993 = vpop.f32.mrf.mxu0
    %1994 = vmatprep.mubr.f32.mxu0 0.0
    %1995 = vmatmul.mubr.f32.gmra.mxu0 %v1893
    %v1996 = vpop.f32.mrf.mxu0
    %v1997 = vadd.f32 %v1870, %v1996
    %v1998 = vpop.f32.mrf.mxu0
    %1999 = vdwg.mxu0
    %v2000 = vxor.u32 %v1962, 2147483648
    %v2001 = vxor.u32 %v1967, 2147483648
    %v2002 = vxor.u32 %v1972, 2147483648
    %v2003 = vxor.u32 %v1977, 2147483648
    %v2004 = vxor.u32 %v1982, 2147483648
    %v2005 = vxor.u32 %v1987, 2147483648
    %v2006 = vxor.u32 %v1992, 2147483648
    %v2007 = vxor.u32 %v1997, 2147483648
    %v2008 = vmul.f32 %v2000, 1.442695
    %v2009 = vpow.pop %v2008
    %v2010 = vmul.f32 %v2001, 1.442695
    %v2011 = vpow.pop %v2010
    %v2012 = vmul.f32 %v2002, 1.442695
    %v2013 = vpow.pop %v2012
    %v2014 = vmul.f32 %v2003, 1.442695
    %v2015 = vpow.pop %v2014
    %v2016 = vmul.f32 %v2004, 1.442695
    %v2017 = vpow.pop %v2016
    %v2018 = vmul.f32 %v2005, 1.442695
    %v2019 = vpow.pop %v2018
    %v2020 = vmul.f32 %v2006, 1.442695
    %v2021 = vpow.pop %v2020
    %v2022 = vmul.f32 %v2007, 1.442695
    %v2023 = vpow.pop %v2022
    %v2024 = vadd.f32 %v2009, 1.0
    %v2025 = vadd.f32 %v2011, 1.0
    %v2026 = vadd.f32 %v2013, 1.0
    %v2027 = vadd.f32 %v2015, 1.0
    %v2028 = vadd.f32 %v2017, 1.0
    %v2029 = vadd.f32 %v2019, 1.0
    %v2030 = vadd.f32 %v2021, 1.0
    %v2031 = vadd.f32 %v2023, 1.0
    %v2032 = vrcp.pop %v2024
    %v2033 = vmul.f32 1.0, %v2032
    %v2034 = vrcp.pop %v2025
    %v2035 = vmul.f32 1.0, %v2034
    %v2036 = vrcp.pop %v2026
    %v2037 = vmul.f32 1.0, %v2036
    %v2038 = vrcp.pop %v2027
    %v2039 = vmul.f32 1.0, %v2038
    %v2040 = vrcp.pop %v2028
    %v2041 = vmul.f32 1.0, %v2040
    %v2042 = vrcp.pop %v2029
    %v2043 = vmul.f32 1.0, %v2042
    %v2044 = vrcp.pop %v2030
    %v2045 = vmul.f32 1.0, %v2044
    %v2046 = vrcp.pop %v2031
    %v2047 = vmul.f32 1.0, %v2046
    %v2048 = vmul.f32 %v1962, %v2033
    %v2049 = vmul.f32 %v1967, %v2035
    %v2050 = vmul.f32 %v1972, %v2037
    %v2051 = vmul.f32 %v1977, %v2039
    %v2052 = vmul.f32 %v1982, %v2041
    %v2053 = vmul.f32 %v1987, %v2043
    %v2054 = vmul.f32 %v1992, %v2045
    %v2055 = vmul.f32 %v1997, %v2047
    %v2056 = vadd.f32 %v1662, %v2048
    %v2057 = vadd.f32 %v1663, %v2049
    %v2058 = vadd.f32 %v1664, %v2050
    %v2059 = vadd.f32 %v1665, %v2051
    %v2060 = vadd.f32 %v1666, %v2052
    %v2061 = vadd.f32 %v1667, %v2053
    %v2062 = vadd.f32 %v1668, %v2054
    %v2063 = vadd.f32 %v1669, %v2055
    %v2064 = vld [vmem:[%s6] sm:$0xff]
    %v2065 = vld [vmem:[%s6 + $0x8] sm:$0xff]
    %v2066 = vld [vmem:[%s6 + $0x10] sm:$0xff]
    %v2067 = vld [vmem:[%s6 + $0x18] sm:$0xff]
    %v2068 = vlaneseq
    %v2069 = vshrl.u32 %v2068, 7
    %v2070 = vsub.s32 2, %v2069
    %v2071 = vrot.slane %v52, %v2070
    %v2073 = vsel %vm58, %v2056, 0
    %v2076 = vsel %vm58, %v2057, 0
    %v2079 = vsel %vm58, %v2058, 0
    %v2082 = vsel %vm58, %v2059, 0
    %v2085 = vsel %vm58, %v2060, 0
    %v2088 = vsel %vm58, %v2061, 0
    %v2091 = vsel %vm58, %v2062, 0
    %v2094 = vsel %vm58, %v2063, 0
    %2096 = vmatprep.subr.mxu0 0.0
    %2097 = vmatpush1.msra.mxu0 0.0
    %2098 = vmatprep.subr.mxu0 0.0
    %2099 = vmatpush1.msra.mxu0 0.0
    %2100 = vmatprep.subr.mxu0 0.0
    %2101 = vmatpush1.msra.mxu0 0.0
    %2102 = vmatprep.subr.mxu0 0.0
    %2103 = vmatpush1.msra.mxu0 0.0
    %2104 = vmatprep.subr.mxu0 0.0
    %2105 = vmatpush1.msra.mxu0 0.0
    %2106 = vmatprep.subr.mxu0 0.0
    %2107 = vmatpush1.msra.mxu0 0.0
    %2108 = vmatprep.subr.mxu0 0.0
    %2109 = vmatpush1.msra.mxu0 0.0
    %2110 = vmatprep.subr.mxu0 0.0
    %2111 = vmatpush1.msra.mxu0 0.0
    %2112 = vmatprep.subr.mxu0 0.0
    %2113 = vmatpush1.msra.mxu0 0.0
    %2114 = vmatprep.subr.mxu0 0.0
    %2115 = vmatpush1.msra.mxu0 0.0
    %2116 = vmatprep.subr.mxu0 0.0
    %2117 = vmatpush1.msra.mxu0 0.0
    %2118 = vmatprep.subr.mxu0 0.0
    %2119 = vmatpush1.msra.mxu0 0.0
    %2120 = vmatprep.subr.mxu0 0.0
    %2121 = vmatpush1.msra.mxu0 %v2067
    %2122 = vmatprep.subr.mxu0 0.0
    %2123 = vmatpush1.msra.mxu0 %v2066
    %2124 = vmatprep.subr.mxu0 0.0
    %2125 = vmatpush1.msra.mxu0 %v2065
    %2126 = vmatprep.subr.mxu0 0.0
    %2127 = vmatpush1.msra.mxu0 %v2064
    %2128 = vmatprep.subr.mxu0 0.0
    %2129 = vmatpush2.msra.mxu0 0.0
    %2130 = vmatprep.subr.mxu0 0.0
    %2131 = vmatpush2.msra.mxu0 0.0
    %2132 = vmatprep.subr.mxu0 0.0
    %2133 = vmatpush2.msra.mxu0 0.0
    %2134 = vmatprep.subr.mxu0 0.0
    %2135 = vmatpush2.msra.mxu0 0.0
    %2136 = vmatprep.subr.mxu0 0.0
    %2137 = vmatpush2.msra.mxu0 0.0
    %2138 = vmatprep.subr.mxu0 0.0
    %2139 = vmatpush2.msra.mxu0 0.0
    %2140 = vmatprep.subr.mxu0 0.0
    %2141 = vmatpush2.msra.mxu0 0.0
    %2142 = vmatprep.subr.mxu0 0.0
    %2143 = vmatpush2.msra.mxu0 0.0
    %2144 = vmatprep.subr.mxu0 0.0
    %2145 = vmatpush2.msra.mxu0 0.0
    %2146 = vmatprep.subr.mxu0 0.0
    %2147 = vmatpush2.msra.mxu0 0.0
    %2148 = vmatprep.subr.mxu0 0.0
    %2149 = vmatpush2.msra.mxu0 0.0
    %2150 = vmatprep.subr.mxu0 0.0
    %2151 = vmatpush2.msra.mxu0 0.0
    %2152 = vmatprep.subr.mxu0 0.0
    %2153 = vmatpush2.msra.mxu0 0.0
    %2154 = vmatprep.subr.mxu0 0.0
    %2155 = vmatpush2.msra.mxu0 0.0
    %2156 = vmatprep.subr.mxu0 0.0
    %2157 = vmatpush2.msra.mxu0 0.0
    %2158 = vmatprep.subr.mxu0 0.0
    %2159 = vmatpush2.msra.mxu0 0.0
    %2160 = vmatprep.mubr.f32.mxu0 0.0
    %2161 = vmatmul.mubr.f32.gmra.mxu0 %v2073
    %v2162 = vpop.f32.mrf.mxu0
    %v2163 = vadd.f32 %v2071, %v2162
    %v2164 = vpop.f32.mrf.mxu0
    %2165 = vmatprep.mubr.f32.mxu0 0.0
    %2166 = vmatmul.mubr.f32.gmra.mxu0 %v2076
    %v2167 = vpop.f32.mrf.mxu0
    %v2168 = vadd.f32 %v2071, %v2167
    %v2169 = vpop.f32.mrf.mxu0
    %2170 = vmatprep.mubr.f32.mxu0 0.0
    %2171 = vmatmul.mubr.f32.gmra.mxu0 %v2079
    %v2172 = vpop.f32.mrf.mxu0
    %v2173 = vadd.f32 %v2071, %v2172
    %v2174 = vpop.f32.mrf.mxu0
    %2175 = vmatprep.mubr.f32.mxu0 0.0
    %2176 = vmatmul.mubr.f32.gmra.mxu0 %v2082
    %v2177 = vpop.f32.mrf.mxu0
    %v2178 = vadd.f32 %v2071, %v2177
    %v2179 = vpop.f32.mrf.mxu0
    %2180 = vmatprep.mubr.f32.mxu0 0.0
    %2181 = vmatmul.mubr.f32.gmra.mxu0 %v2085
    %v2182 = vpop.f32.mrf.mxu0
    %v2183 = vadd.f32 %v2071, %v2182
    %v2184 = vpop.f32.mrf.mxu0
    %2185 = vmatprep.mubr.f32.mxu0 0.0
    %2186 = vmatmul.mubr.f32.gmra.mxu0 %v2088
    %v2187 = vpop.f32.mrf.mxu0
    %v2188 = vadd.f32 %v2071, %v2187
    %v2189 = vpop.f32.mrf.mxu0
    %2190 = vmatprep.mubr.f32.mxu0 0.0
    %2191 = vmatmul.mubr.f32.gmra.mxu0 %v2091
    %v2192 = vpop.f32.mrf.mxu0
    %v2193 = vadd.f32 %v2071, %v2192
    %v2194 = vpop.f32.mrf.mxu0
    %2195 = vmatprep.mubr.f32.mxu0 0.0
    %2196 = vmatmul.mubr.f32.gmra.mxu0 %v2094
    %v2197 = vpop.f32.mrf.mxu0
    %v2198 = vadd.f32 %v2071, %v2197
    %v2199 = vpop.f32.mrf.mxu0
    %2200 = vdwg.mxu0
    %v2201 = vxor.u32 %v2163, 2147483648
    %v2202 = vxor.u32 %v2168, 2147483648
    %v2203 = vxor.u32 %v2173, 2147483648
    %v2204 = vxor.u32 %v2178, 2147483648
    %v2205 = vxor.u32 %v2183, 2147483648
    %v2206 = vxor.u32 %v2188, 2147483648
    %v2207 = vxor.u32 %v2193, 2147483648
    %v2208 = vxor.u32 %v2198, 2147483648
    %v2209 = vmul.f32 %v2201, 1.442695
    %v2210 = vpow.pop %v2209
    %v2211 = vmul.f32 %v2202, 1.442695
    %v2212 = vpow.pop %v2211
    %v2213 = vmul.f32 %v2203, 1.442695
    %v2214 = vpow.pop %v2213
    %v2215 = vmul.f32 %v2204, 1.442695
    %v2216 = vpow.pop %v2215
    %v2217 = vmul.f32 %v2205, 1.442695
    %v2218 = vpow.pop %v2217
    %v2219 = vmul.f32 %v2206, 1.442695
    %v2220 = vpow.pop %v2219
    %v2221 = vmul.f32 %v2207, 1.442695
    %v2222 = vpow.pop %v2221
    %v2223 = vmul.f32 %v2208, 1.442695
    %v2224 = vpow.pop %v2223
    %v2225 = vadd.f32 %v2210, 1.0
    %v2226 = vadd.f32 %v2212, 1.0
    %v2227 = vadd.f32 %v2214, 1.0
    %v2228 = vadd.f32 %v2216, 1.0
    %v2229 = vadd.f32 %v2218, 1.0
    %v2230 = vadd.f32 %v2220, 1.0
    %v2231 = vadd.f32 %v2222, 1.0
    %v2232 = vadd.f32 %v2224, 1.0
    %v2233 = vrcp.pop %v2225
    %v2234 = vmul.f32 1.0, %v2233
    %v2235 = vrcp.pop %v2226
    %v2236 = vmul.f32 1.0, %v2235
    %v2237 = vrcp.pop %v2227
    %v2238 = vmul.f32 1.0, %v2237
    %v2239 = vrcp.pop %v2228
    %v2240 = vmul.f32 1.0, %v2239
    %v2241 = vrcp.pop %v2229
    %v2242 = vmul.f32 1.0, %v2241
    %v2243 = vrcp.pop %v2230
    %v2244 = vmul.f32 1.0, %v2243
    %v2245 = vrcp.pop %v2231
    %v2246 = vmul.f32 1.0, %v2245
    %v2247 = vrcp.pop %v2232
    %v2248 = vmul.f32 1.0, %v2247
    %v2249 = vmul.f32 %v2163, %v2234
    %v2250 = vmul.f32 %v2168, %v2236
    %v2251 = vmul.f32 %v2173, %v2238
    %v2252 = vmul.f32 %v2178, %v2240
    %v2253 = vmul.f32 %v2183, %v2242
    %v2254 = vmul.f32 %v2188, %v2244
    %v2255 = vmul.f32 %v2193, %v2246
    %v2256 = vmul.f32 %v2198, %v2248
    %v2257 = vadd.f32 %v2249, %v36
    %v2258 = vadd.f32 %v2250, %v37
    %v2259 = vadd.f32 %v2251, %v38
    %v2260 = vadd.f32 %v2252, %v39
    %v2261 = vadd.f32 %v2253, %v40
    %v2262 = vadd.f32 %v2254, %v41
    %v2263 = vadd.f32 %v2255, %v42
    %v2264 = vadd.f32 %v2256, %v43
    %v2265 = vld [vmem:[%s6 + $0x70] sm:$0xff]
    %v2266 = vld [vmem:[%s6 + $0x78] sm:$0xff]
    %v2267 = vld [vmem:[%s6 + $0x80] sm:$0xff]
    %v2268 = vld [vmem:[%s6 + $0x88] sm:$0xff]
    %v2269 = vld [vmem:[%s6 + $0x90] sm:$0xff]
    %v2270 = vld [vmem:[%s6 + $0x98] sm:$0xff]
    %v2271 = vld [vmem:[%s6 + $0xa0] sm:$0xff]
    %v2272 = vld [vmem:[%s6 + $0xa8] sm:$0xff]
    %v2273 = vlaneseq
    %v2274 = vshrl.u32 %v2273, 7
    %v2275 = vsub.s32 1, %v2274
    %v2276 = vrot.slane %v53, %v2275
    %v2278 = vsel %vm58, %v2257, 0
    %v2281 = vsel %vm58, %v2258, 0
    %v2284 = vsel %vm58, %v2259, 0
    %v2287 = vsel %vm58, %v2260, 0
    %v2290 = vsel %vm58, %v2261, 0
    %v2293 = vsel %vm58, %v2262, 0
    %v2296 = vsel %vm58, %v2263, 0
    %v2299 = vsel %vm58, %v2264, 0
    %2301 = vmatprep.subr.mxu0 0.0
    %2302 = vmatpush1.msra.mxu0 0.0
    %2303 = vmatprep.subr.mxu0 0.0
    %2304 = vmatpush1.msra.mxu0 0.0
    %2305 = vmatprep.subr.mxu0 0.0
    %2306 = vmatpush1.msra.mxu0 0.0
    %2307 = vmatprep.subr.mxu0 0.0
    %2308 = vmatpush1.msra.mxu0 0.0
    %2309 = vmatprep.subr.mxu0 0.0
    %2310 = vmatpush1.msra.mxu0 0.0
    %2311 = vmatprep.subr.mxu0 0.0
    %2312 = vmatpush1.msra.mxu0 0.0
    %2313 = vmatprep.subr.mxu0 0.0
    %2314 = vmatpush1.msra.mxu0 0.0
    %2315 = vmatprep.subr.mxu0 0.0
    %2316 = vmatpush1.msra.mxu0 0.0
    %2317 = vmatprep.subr.mxu0 0.0
    %2318 = vmatpush1.msra.mxu0 0.0
    %2319 = vmatprep.subr.mxu0 0.0
    %2320 = vmatpush1.msra.mxu0 0.0
    %2321 = vmatprep.subr.mxu0 0.0
    %2322 = vmatpush1.msra.mxu0 0.0
    %2323 = vmatprep.subr.mxu0 0.0
    %2324 = vmatpush1.msra.mxu0 0.0
    %2325 = vmatprep.subr.mxu0 0.0
    %2326 = vmatpush1.msra.mxu0 %v2268
    %2327 = vmatprep.subr.mxu0 0.0
    %2328 = vmatpush1.msra.mxu0 %v2267
    %2329 = vmatprep.subr.mxu0 0.0
    %2330 = vmatpush1.msra.mxu0 %v2266
    %2331 = vmatprep.subr.mxu0 0.0
    %2332 = vmatpush1.msra.mxu0 %v2265
    %2333 = vmatprep.subr.mxu0 0.0
    %2334 = vmatpush2.msra.mxu0 0.0
    %2335 = vmatprep.subr.mxu0 0.0
    %2336 = vmatpush2.msra.mxu0 0.0
    %2337 = vmatprep.subr.mxu0 0.0
    %2338 = vmatpush2.msra.mxu0 0.0
    %2339 = vmatprep.subr.mxu0 0.0
    %2340 = vmatpush2.msra.mxu0 0.0
    %2341 = vmatprep.subr.mxu0 0.0
    %2342 = vmatpush2.msra.mxu0 0.0
    %2343 = vmatprep.subr.mxu0 0.0
    %2344 = vmatpush2.msra.mxu0 0.0
    %2345 = vmatprep.subr.mxu0 0.0
    %2346 = vmatpush2.msra.mxu0 0.0
    %2347 = vmatprep.subr.mxu0 0.0
    %2348 = vmatpush2.msra.mxu0 0.0
    %2349 = vmatprep.subr.mxu0 0.0
    %2350 = vmatpush2.msra.mxu0 0.0
    %2351 = vmatprep.subr.mxu0 0.0
    %2352 = vmatpush2.msra.mxu0 0.0
    %2353 = vmatprep.subr.mxu0 0.0
    %2354 = vmatpush2.msra.mxu0 0.0
    %2355 = vmatprep.subr.mxu0 0.0
    %2356 = vmatpush2.msra.mxu0 0.0
    %2357 = vmatprep.subr.mxu0 0.0
    %2358 = vmatpush2.msra.mxu0 0.0
    %2359 = vmatprep.subr.mxu0 0.0
    %2360 = vmatpush2.msra.mxu0 0.0
    %2361 = vmatprep.subr.mxu0 0.0
    %2362 = vmatpush2.msra.mxu0 0.0
    %2363 = vmatprep.subr.mxu0 0.0
    %2364 = vmatpush2.msra.mxu0 0.0
    %2365 = vmatprep.mubr.f32.mxu0 0.0
    %2366 = vmatmul.mubr.f32.gmra.mxu0 %v2278
    %v2367 = vpop.f32.mrf.mxu0
    %v2368 = vadd.f32 %v2276, %v2367
    %v2369 = vpop.f32.mrf.mxu0
    %2370 = vmatprep.mubr.f32.mxu0 0.0
    %2371 = vmatmul.mubr.f32.gmra.mxu0 %v2281
    %v2372 = vpop.f32.mrf.mxu0
    %v2373 = vadd.f32 %v2276, %v2372
    %v2374 = vpop.f32.mrf.mxu0
    %2375 = vmatprep.mubr.f32.mxu0 0.0
    %2376 = vmatmul.mubr.f32.gmra.mxu0 %v2284
    %v2377 = vpop.f32.mrf.mxu0
    %v2378 = vadd.f32 %v2276, %v2377
    %v2379 = vpop.f32.mrf.mxu0
    %2380 = vmatprep.mubr.f32.mxu0 0.0
    %2381 = vmatmul.mubr.f32.gmra.mxu0 %v2287
    %v2382 = vpop.f32.mrf.mxu0
    %v2383 = vadd.f32 %v2276, %v2382
    %v2384 = vpop.f32.mrf.mxu0
    %2385 = vmatprep.mubr.f32.mxu0 0.0
    %2386 = vmatmul.mubr.f32.gmra.mxu0 %v2290
    %v2387 = vpop.f32.mrf.mxu0
    %v2388 = vadd.f32 %v2276, %v2387
    %v2389 = vpop.f32.mrf.mxu0
    %2390 = vmatprep.mubr.f32.mxu0 0.0
    %2391 = vmatmul.mubr.f32.gmra.mxu0 %v2293
    %v2392 = vpop.f32.mrf.mxu0
    %v2393 = vadd.f32 %v2276, %v2392
    %v2394 = vpop.f32.mrf.mxu0
    %2395 = vmatprep.mubr.f32.mxu0 0.0
    %2396 = vmatmul.mubr.f32.gmra.mxu0 %v2296
    %v2397 = vpop.f32.mrf.mxu0
    %v2398 = vadd.f32 %v2276, %v2397
    %v2399 = vpop.f32.mrf.mxu0
    %2400 = vmatprep.mubr.f32.mxu0 0.0
    %2401 = vmatmul.mubr.f32.gmra.mxu0 %v2299
    %v2402 = vpop.f32.mrf.mxu0
    %v2403 = vadd.f32 %v2276, %v2402
    %v2404 = vpop.f32.mrf.mxu0
    %2405 = vdwg.mxu0
    %v2406 = vxor.u32 %v2368, 2147483648
    %v2407 = vxor.u32 %v2373, 2147483648
    %v2408 = vxor.u32 %v2378, 2147483648
    %v2409 = vxor.u32 %v2383, 2147483648
    %v2410 = vxor.u32 %v2388, 2147483648
    %v2411 = vxor.u32 %v2393, 2147483648
    %v2412 = vxor.u32 %v2398, 2147483648
    %v2413 = vxor.u32 %v2403, 2147483648
    %v2414 = vmul.f32 %v2406, 1.442695
    %v2415 = vpow.pop %v2414
    %v2416 = vmul.f32 %v2407, 1.442695
    %v2417 = vpow.pop %v2416
    %v2418 = vmul.f32 %v2408, 1.442695
    %v2419 = vpow.pop %v2418
    %v2420 = vmul.f32 %v2409, 1.442695
    %v2421 = vpow.pop %v2420
    %v2422 = vmul.f32 %v2410, 1.442695
    %v2423 = vpow.pop %v2422
    %v2424 = vmul.f32 %v2411, 1.442695
    %v2425 = vpow.pop %v2424
    %v2426 = vmul.f32 %v2412, 1.442695
    %v2427 = vpow.pop %v2426
    %v2428 = vmul.f32 %v2413, 1.442695
    %v2429 = vpow.pop %v2428
    %v2430 = vadd.f32 %v2415, 1.0
    %v2431 = vadd.f32 %v2417, 1.0
    %v2432 = vadd.f32 %v2419, 1.0
    %v2433 = vadd.f32 %v2421, 1.0
    %v2434 = vadd.f32 %v2423, 1.0
    %v2435 = vadd.f32 %v2425, 1.0
    %v2436 = vadd.f32 %v2427, 1.0
    %v2437 = vadd.f32 %v2429, 1.0
    %v2438 = vrcp.pop %v2430
    %v2439 = vmul.f32 1.0, %v2438
    %v2440 = vrcp.pop %v2431
    %v2441 = vmul.f32 1.0, %v2440
    %v2442 = vrcp.pop %v2432
    %v2443 = vmul.f32 1.0, %v2442
    %v2444 = vrcp.pop %v2433
    %v2445 = vmul.f32 1.0, %v2444
    %v2446 = vrcp.pop %v2434
    %v2447 = vmul.f32 1.0, %v2446
    %v2448 = vrcp.pop %v2435
    %v2449 = vmul.f32 1.0, %v2448
    %v2450 = vrcp.pop %v2436
    %v2451 = vmul.f32 1.0, %v2450
    %v2452 = vrcp.pop %v2437
    %v2453 = vmul.f32 1.0, %v2452
    %v2454 = vmul.f32 %v2368, %v2439
    %v2455 = vmul.f32 %v2373, %v2441
    %v2456 = vmul.f32 %v2378, %v2443
    %v2457 = vmul.f32 %v2383, %v2445
    %v2458 = vmul.f32 %v2388, %v2447
    %v2459 = vmul.f32 %v2393, %v2449
    %v2460 = vmul.f32 %v2398, %v2451
    %v2461 = vmul.f32 %v2403, %v2453
    %v2462 = vlaneseq
    %v2463 = vshrl.u32 %v2462, 7
    %v2464 = vsub.s32 2, %v2463
    %v2465 = vrot.slane %v53, %v2464
    %v2467 = vsel %vm58, %v2454, 0
    %v2470 = vsel %vm58, %v2455, 0
    %v2473 = vsel %vm58, %v2456, 0
    %v2476 = vsel %vm58, %v2457, 0
    %v2479 = vsel %vm58, %v2458, 0
    %v2482 = vsel %vm58, %v2459, 0
    %v2485 = vsel %vm58, %v2460, 0
    %v2488 = vsel %vm58, %v2461, 0
    %2490 = vmatprep.subr.mxu0 0.0
    %2491 = vmatpush1.msra.mxu0 0.0
    %2492 = vmatprep.subr.mxu0 0.0
    %2493 = vmatpush1.msra.mxu0 0.0
    %2494 = vmatprep.subr.mxu0 0.0
    %2495 = vmatpush1.msra.mxu0 0.0
    %2496 = vmatprep.subr.mxu0 0.0
    %2497 = vmatpush1.msra.mxu0 0.0
    %2498 = vmatprep.subr.mxu0 0.0
    %2499 = vmatpush1.msra.mxu0 0.0
    %2500 = vmatprep.subr.mxu0 0.0
    %2501 = vmatpush1.msra.mxu0 0.0
    %2502 = vmatprep.subr.mxu0 0.0
    %2503 = vmatpush1.msra.mxu0 0.0
    %2504 = vmatprep.subr.mxu0 0.0
    %2505 = vmatpush1.msra.mxu0 0.0
    %2506 = vmatprep.subr.mxu0 0.0
    %2507 = vmatpush1.msra.mxu0 0.0
    %2508 = vmatprep.subr.mxu0 0.0
    %2509 = vmatpush1.msra.mxu0 0.0
    %2510 = vmatprep.subr.mxu0 0.0
    %2511 = vmatpush1.msra.mxu0 0.0
    %2512 = vmatprep.subr.mxu0 0.0
    %2513 = vmatpush1.msra.mxu0 0.0
    %2514 = vmatprep.subr.mxu0 0.0
    %2515 = vmatpush1.msra.mxu0 %v2272
    %2516 = vmatprep.subr.mxu0 0.0
    %2517 = vmatpush1.msra.mxu0 %v2271
    %2518 = vmatprep.subr.mxu0 0.0
    %2519 = vmatpush1.msra.mxu0 %v2270
    %2520 = vmatprep.subr.mxu0 0.0
    %2521 = vmatpush1.msra.mxu0 %v2269
    %2522 = vmatprep.subr.mxu0 0.0
    %2523 = vmatpush2.msra.mxu0 0.0
    %2524 = vmatprep.subr.mxu0 0.0
    %2525 = vmatpush2.msra.mxu0 0.0
    %2526 = vmatprep.subr.mxu0 0.0
    %2527 = vmatpush2.msra.mxu0 0.0
    %2528 = vmatprep.subr.mxu0 0.0
    %2529 = vmatpush2.msra.mxu0 0.0
    %2530 = vmatprep.subr.mxu0 0.0
    %2531 = vmatpush2.msra.mxu0 0.0
    %2532 = vmatprep.subr.mxu0 0.0
    %2533 = vmatpush2.msra.mxu0 0.0
    %2534 = vmatprep.subr.mxu0 0.0
    %2535 = vmatpush2.msra.mxu0 0.0
    %2536 = vmatprep.subr.mxu0 0.0
    %2537 = vmatpush2.msra.mxu0 0.0
    %2538 = vmatprep.subr.mxu0 0.0
    %2539 = vmatpush2.msra.mxu0 0.0
    %2540 = vmatprep.subr.mxu0 0.0
    %2541 = vmatpush2.msra.mxu0 0.0
    %2542 = vmatprep.subr.mxu0 0.0
    %2543 = vmatpush2.msra.mxu0 0.0
    %2544 = vmatprep.subr.mxu0 0.0
    %2545 = vmatpush2.msra.mxu0 0.0
    %2546 = vmatprep.subr.mxu0 0.0
    %2547 = vmatpush2.msra.mxu0 0.0
    %2548 = vmatprep.subr.mxu0 0.0
    %2549 = vmatpush2.msra.mxu0 0.0
    %2550 = vmatprep.subr.mxu0 0.0
    %2551 = vmatpush2.msra.mxu0 0.0
    %2552 = vmatprep.subr.mxu0 0.0
    %2553 = vmatpush2.msra.mxu0 0.0
    %2554 = vmatprep.mubr.f32.mxu0 0.0
    %2555 = vmatmul.mubr.f32.gmra.mxu0 %v2467
    %v2556 = vpop.f32.mrf.mxu0
    %v2557 = vadd.f32 %v2465, %v2556
    %v2558 = vpop.f32.mrf.mxu0
    %2559 = vmatprep.mubr.f32.mxu0 0.0
    %2560 = vmatmul.mubr.f32.gmra.mxu0 %v2470
    %v2561 = vpop.f32.mrf.mxu0
    %v2562 = vadd.f32 %v2465, %v2561
    %v2563 = vpop.f32.mrf.mxu0
    %2564 = vmatprep.mubr.f32.mxu0 0.0
    %2565 = vmatmul.mubr.f32.gmra.mxu0 %v2473
    %v2566 = vpop.f32.mrf.mxu0
    %v2567 = vadd.f32 %v2465, %v2566
    %v2568 = vpop.f32.mrf.mxu0
    %2569 = vmatprep.mubr.f32.mxu0 0.0
    %2570 = vmatmul.mubr.f32.gmra.mxu0 %v2476
    %v2571 = vpop.f32.mrf.mxu0
    %v2572 = vadd.f32 %v2465, %v2571
    %v2573 = vpop.f32.mrf.mxu0
    %2574 = vmatprep.mubr.f32.mxu0 0.0
    %2575 = vmatmul.mubr.f32.gmra.mxu0 %v2479
    %v2576 = vpop.f32.mrf.mxu0
    %v2577 = vadd.f32 %v2465, %v2576
    %v2578 = vpop.f32.mrf.mxu0
    %2579 = vmatprep.mubr.f32.mxu0 0.0
    %2580 = vmatmul.mubr.f32.gmra.mxu0 %v2482
    %v2581 = vpop.f32.mrf.mxu0
    %v2582 = vadd.f32 %v2465, %v2581
    %v2583 = vpop.f32.mrf.mxu0
    %2584 = vmatprep.mubr.f32.mxu0 0.0
    %2585 = vmatmul.mubr.f32.gmra.mxu0 %v2485
    %v2586 = vpop.f32.mrf.mxu0
    %v2587 = vadd.f32 %v2465, %v2586
    %v2588 = vpop.f32.mrf.mxu0
    %2589 = vmatprep.mubr.f32.mxu0 0.0
    %2590 = vmatmul.mubr.f32.gmra.mxu0 %v2488
    %v2591 = vpop.f32.mrf.mxu0
    %v2592 = vadd.f32 %v2465, %v2591
    %v2593 = vpop.f32.mrf.mxu0
    %2594 = vdwg.mxu0
    %v2595 = vxor.u32 %v2557, 2147483648
    %v2596 = vxor.u32 %v2562, 2147483648
    %v2597 = vxor.u32 %v2567, 2147483648
    %v2598 = vxor.u32 %v2572, 2147483648
    %v2599 = vxor.u32 %v2577, 2147483648
    %v2600 = vxor.u32 %v2582, 2147483648
    %v2601 = vxor.u32 %v2587, 2147483648
    %v2602 = vxor.u32 %v2592, 2147483648
    %v2603 = vmul.f32 %v2595, 1.442695
    %v2604 = vpow.pop %v2603
    %v2605 = vmul.f32 %v2596, 1.442695
    %v2606 = vpow.pop %v2605
    %v2607 = vmul.f32 %v2597, 1.442695
    %v2608 = vpow.pop %v2607
    %v2609 = vmul.f32 %v2598, 1.442695
    %v2610 = vpow.pop %v2609
    %v2611 = vmul.f32 %v2599, 1.442695
    %v2612 = vpow.pop %v2611
    %v2613 = vmul.f32 %v2600, 1.442695
    %v2614 = vpow.pop %v2613
    %v2615 = vmul.f32 %v2601, 1.442695
    %v2616 = vpow.pop %v2615
    %v2617 = vmul.f32 %v2602, 1.442695
    %v2618 = vpow.pop %v2617
    %v2619 = vadd.f32 %v2604, 1.0
    %v2620 = vadd.f32 %v2606, 1.0
    %v2621 = vadd.f32 %v2608, 1.0
    %v2622 = vadd.f32 %v2610, 1.0
    %v2623 = vadd.f32 %v2612, 1.0
    %v2624 = vadd.f32 %v2614, 1.0
    %v2625 = vadd.f32 %v2616, 1.0
    %v2626 = vadd.f32 %v2618, 1.0
    %v2627 = vrcp.pop %v2619
    %v2628 = vmul.f32 1.0, %v2627
    %v2629 = vrcp.pop %v2620
    %v2630 = vmul.f32 1.0, %v2629
    %v2631 = vrcp.pop %v2621
    %v2632 = vmul.f32 1.0, %v2631
    %v2633 = vrcp.pop %v2622
    %v2634 = vmul.f32 1.0, %v2633
    %v2635 = vrcp.pop %v2623
    %v2636 = vmul.f32 1.0, %v2635
    %v2637 = vrcp.pop %v2624
    %v2638 = vmul.f32 1.0, %v2637
    %v2639 = vrcp.pop %v2625
    %v2640 = vmul.f32 1.0, %v2639
    %v2641 = vrcp.pop %v2626
    %v2642 = vmul.f32 1.0, %v2641
    %v2643 = vmul.f32 %v2557, %v2628
    %v2644 = vmul.f32 %v2562, %v2630
    %v2645 = vmul.f32 %v2567, %v2632
    %v2646 = vmul.f32 %v2572, %v2634
    %v2647 = vmul.f32 %v2577, %v2636
    %v2648 = vmul.f32 %v2582, %v2638
    %v2649 = vmul.f32 %v2587, %v2640
    %v2650 = vmul.f32 %v2592, %v2642
    %v2651 = vadd.f32 %v2257, %v2643
    %v2652 = vadd.f32 %v2258, %v2644
    %v2653 = vadd.f32 %v2259, %v2645
    %v2654 = vadd.f32 %v2260, %v2646
    %v2655 = vadd.f32 %v2261, %v2647
    %v2656 = vadd.f32 %v2262, %v2648
    %v2657 = vadd.f32 %v2263, %v2649
    %v2658 = vadd.f32 %v2264, %v2650
    %v2659 = vld [vmem:[%s6 + $0xb0] sm:$0xff]
    %v2660 = vld [vmem:[%s6 + $0xb8] sm:$0xff]
    %v2661 = vld [vmem:[%s6 + $0xc0] sm:$0xff]
    %v2662 = vld [vmem:[%s6 + $0xc8] sm:$0xff]
    %v2663 = vld [vmem:[%s6 + $0xd0] sm:$0xff]
    %v2664 = vld [vmem:[%s6 + $0xd8] sm:$0xff]
    %v2665 = vld [vmem:[%s6 + $0xe0] sm:$0xff]
    %v2666 = vld [vmem:[%s6 + $0xe8] sm:$0xff]
    %v2667 = vlaneseq
    %v2668 = vshrl.u32 %v2667, 7
    %v2669 = vsub.s32 3, %v2668
    %v2670 = vrot.slane %v53, %v2669
    %v2672 = vsel %vm58, %v2651, 0
    %v2675 = vsel %vm58, %v2652, 0
    %v2678 = vsel %vm58, %v2653, 0
    %v2681 = vsel %vm58, %v2654, 0
    %v2684 = vsel %vm58, %v2655, 0
    %v2687 = vsel %vm58, %v2656, 0
    %v2690 = vsel %vm58, %v2657, 0
    %v2693 = vsel %vm58, %v2658, 0
    %2695 = vmatprep.subr.mxu0 0.0
    %2696 = vmatpush1.msra.mxu0 0.0
    %2697 = vmatprep.subr.mxu0 0.0
    %2698 = vmatpush1.msra.mxu0 0.0
    %2699 = vmatprep.subr.mxu0 0.0
    %2700 = vmatpush1.msra.mxu0 0.0
    %2701 = vmatprep.subr.mxu0 0.0
    %2702 = vmatpush1.msra.mxu0 0.0
    %2703 = vmatprep.subr.mxu0 0.0
    %2704 = vmatpush1.msra.mxu0 0.0
    %2705 = vmatprep.subr.mxu0 0.0
    %2706 = vmatpush1.msra.mxu0 0.0
    %2707 = vmatprep.subr.mxu0 0.0
    %2708 = vmatpush1.msra.mxu0 0.0
    %2709 = vmatprep.subr.mxu0 0.0
    %2710 = vmatpush1.msra.mxu0 0.0
    %2711 = vmatprep.subr.mxu0 0.0
    %2712 = vmatpush1.msra.mxu0 0.0
    %2713 = vmatprep.subr.mxu0 0.0
    %2714 = vmatpush1.msra.mxu0 0.0
    %2715 = vmatprep.subr.mxu0 0.0
    %2716 = vmatpush1.msra.mxu0 0.0
    %2717 = vmatprep.subr.mxu0 0.0
    %2718 = vmatpush1.msra.mxu0 0.0
    %2719 = vmatprep.subr.mxu0 0.0
    %2720 = vmatpush1.msra.mxu0 %v2662
    %2721 = vmatprep.subr.mxu0 0.0
    %2722 = vmatpush1.msra.mxu0 %v2661
    %2723 = vmatprep.subr.mxu0 0.0
    %2724 = vmatpush1.msra.mxu0 %v2660
    %2725 = vmatprep.subr.mxu0 0.0
    %2726 = vmatpush1.msra.mxu0 %v2659
    %2727 = vmatprep.subr.mxu0 0.0
    %2728 = vmatpush2.msra.mxu0 0.0
    %2729 = vmatprep.subr.mxu0 0.0
    %2730 = vmatpush2.msra.mxu0 0.0
    %2731 = vmatprep.subr.mxu0 0.0
    %2732 = vmatpush2.msra.mxu0 0.0
    %2733 = vmatprep.subr.mxu0 0.0
    %2734 = vmatpush2.msra.mxu0 0.0
    %2735 = vmatprep.subr.mxu0 0.0
    %2736 = vmatpush2.msra.mxu0 0.0
    %2737 = vmatprep.subr.mxu0 0.0
    %2738 = vmatpush2.msra.mxu0 0.0
    %2739 = vmatprep.subr.mxu0 0.0
    %2740 = vmatpush2.msra.mxu0 0.0
    %2741 = vmatprep.subr.mxu0 0.0
    %2742 = vmatpush2.msra.mxu0 0.0
    %2743 = vmatprep.subr.mxu0 0.0
    %2744 = vmatpush2.msra.mxu0 0.0
    %2745 = vmatprep.subr.mxu0 0.0
    %2746 = vmatpush2.msra.mxu0 0.0
    %2747 = vmatprep.subr.mxu0 0.0
    %2748 = vmatpush2.msra.mxu0 0.0
    %2749 = vmatprep.subr.mxu0 0.0
    %2750 = vmatpush2.msra.mxu0 0.0
    %2751 = vmatprep.subr.mxu0 0.0
    %2752 = vmatpush2.msra.mxu0 0.0
    %2753 = vmatprep.subr.mxu0 0.0
    %2754 = vmatpush2.msra.mxu0 0.0
    %2755 = vmatprep.subr.mxu0 0.0
    %2756 = vmatpush2.msra.mxu0 0.0
    %2757 = vmatprep.subr.mxu0 0.0
    %2758 = vmatpush2.msra.mxu0 0.0
    %2759 = vmatprep.mubr.f32.mxu0 0.0
    %2760 = vmatmul.mubr.f32.gmra.mxu0 %v2672
    %v2761 = vpop.f32.mrf.mxu0
    %v2762 = vadd.f32 %v2670, %v2761
    %v2763 = vpop.f32.mrf.mxu0
    %2764 = vmatprep.mubr.f32.mxu0 0.0
    %2765 = vmatmul.mubr.f32.gmra.mxu0 %v2675
    %v2766 = vpop.f32.mrf.mxu0
    %v2767 = vadd.f32 %v2670, %v2766
    %v2768 = vpop.f32.mrf.mxu0
    %2769 = vmatprep.mubr.f32.mxu0 0.0
    %2770 = vmatmul.mubr.f32.gmra.mxu0 %v2678
    %v2771 = vpop.f32.mrf.mxu0
    %v2772 = vadd.f32 %v2670, %v2771
    %v2773 = vpop.f32.mrf.mxu0
    %2774 = vmatprep.mubr.f32.mxu0 0.0
    %2775 = vmatmul.mubr.f32.gmra.mxu0 %v2681
    %v2776 = vpop.f32.mrf.mxu0
    %v2777 = vadd.f32 %v2670, %v2776
    %v2778 = vpop.f32.mrf.mxu0
    %2779 = vmatprep.mubr.f32.mxu0 0.0
    %2780 = vmatmul.mubr.f32.gmra.mxu0 %v2684
    %v2781 = vpop.f32.mrf.mxu0
    %v2782 = vadd.f32 %v2670, %v2781
    %v2783 = vpop.f32.mrf.mxu0
    %2784 = vmatprep.mubr.f32.mxu0 0.0
    %2785 = vmatmul.mubr.f32.gmra.mxu0 %v2687
    %v2786 = vpop.f32.mrf.mxu0
    %v2787 = vadd.f32 %v2670, %v2786
    %v2788 = vpop.f32.mrf.mxu0
    %2789 = vmatprep.mubr.f32.mxu0 0.0
    %2790 = vmatmul.mubr.f32.gmra.mxu0 %v2690
    %v2791 = vpop.f32.mrf.mxu0
    %v2792 = vadd.f32 %v2670, %v2791
    %v2793 = vpop.f32.mrf.mxu0
    %2794 = vmatprep.mubr.f32.mxu0 0.0
    %2795 = vmatmul.mubr.f32.gmra.mxu0 %v2693
    %v2796 = vpop.f32.mrf.mxu0
    %v2797 = vadd.f32 %v2670, %v2796
    %v2798 = vpop.f32.mrf.mxu0
    %2799 = vdwg.mxu0
    %v2800 = vxor.u32 %v2762, 2147483648
    %v2801 = vxor.u32 %v2767, 2147483648
    %v2802 = vxor.u32 %v2772, 2147483648
    %v2803 = vxor.u32 %v2777, 2147483648
    %v2804 = vxor.u32 %v2782, 2147483648
    %v2805 = vxor.u32 %v2787, 2147483648
    %v2806 = vxor.u32 %v2792, 2147483648
    %v2807 = vxor.u32 %v2797, 2147483648
    %v2808 = vmul.f32 %v2800, 1.442695
    %v2809 = vpow.pop %v2808
    %v2810 = vmul.f32 %v2801, 1.442695
    %v2811 = vpow.pop %v2810
    %v2812 = vmul.f32 %v2802, 1.442695
    %v2813 = vpow.pop %v2812
    %v2814 = vmul.f32 %v2803, 1.442695
    %v2815 = vpow.pop %v2814
    %v2816 = vmul.f32 %v2804, 1.442695
    %v2817 = vpow.pop %v2816
    %v2818 = vmul.f32 %v2805, 1.442695
    %v2819 = vpow.pop %v2818
    %v2820 = vmul.f32 %v2806, 1.442695
    %v2821 = vpow.pop %v2820
    %v2822 = vmul.f32 %v2807, 1.442695
    %v2823 = vpow.pop %v2822
    %v2824 = vadd.f32 %v2809, 1.0
    %v2825 = vadd.f32 %v2811, 1.0
    %v2826 = vadd.f32 %v2813, 1.0
    %v2827 = vadd.f32 %v2815, 1.0
    %v2828 = vadd.f32 %v2817, 1.0
    %v2829 = vadd.f32 %v2819, 1.0
    %v2830 = vadd.f32 %v2821, 1.0
    %v2831 = vadd.f32 %v2823, 1.0
    %v2832 = vrcp.pop %v2824
    %v2833 = vmul.f32 1.0, %v2832
    %v2834 = vrcp.pop %v2825
    %v2835 = vmul.f32 1.0, %v2834
    %v2836 = vrcp.pop %v2826
    %v2837 = vmul.f32 1.0, %v2836
    %v2838 = vrcp.pop %v2827
    %v2839 = vmul.f32 1.0, %v2838
    %v2840 = vrcp.pop %v2828
    %v2841 = vmul.f32 1.0, %v2840
    %v2842 = vrcp.pop %v2829
    %v2843 = vmul.f32 1.0, %v2842
    %v2844 = vrcp.pop %v2830
    %v2845 = vmul.f32 1.0, %v2844
    %v2846 = vrcp.pop %v2831
    %v2847 = vmul.f32 1.0, %v2846
    %v2848 = vmul.f32 %v2762, %v2833
    %v2849 = vmul.f32 %v2767, %v2835
    %v2850 = vmul.f32 %v2772, %v2837
    %v2851 = vmul.f32 %v2777, %v2839
    %v2852 = vmul.f32 %v2782, %v2841
    %v2853 = vmul.f32 %v2787, %v2843
    %v2854 = vmul.f32 %v2792, %v2845
    %v2855 = vmul.f32 %v2797, %v2847
    %v2856 = vlaneseq
    %v2857 = vshrl.u32 %v2856, 7
    %v2858 = vsub.s32 4, %v2857
    %v2859 = vrot.slane %v53, %v2858
    %v2861 = vsel %vm58, %v2848, 0
    %v2864 = vsel %vm58, %v2849, 0
    %v2867 = vsel %vm58, %v2850, 0
    %v2870 = vsel %vm58, %v2851, 0
    %v2873 = vsel %vm58, %v2852, 0
    %v2876 = vsel %vm58, %v2853, 0
    %v2879 = vsel %vm58, %v2854, 0
    %v2882 = vsel %vm58, %v2855, 0
    %2884 = vmatprep.subr.mxu0 0.0
    %2885 = vmatpush1.msra.mxu0 0.0
    %2886 = vmatprep.subr.mxu0 0.0
    %2887 = vmatpush1.msra.mxu0 0.0
    %2888 = vmatprep.subr.mxu0 0.0
    %2889 = vmatpush1.msra.mxu0 0.0
    %2890 = vmatprep.subr.mxu0 0.0
    %2891 = vmatpush1.msra.mxu0 0.0
    %2892 = vmatprep.subr.mxu0 0.0
    %2893 = vmatpush1.msra.mxu0 0.0
    %2894 = vmatprep.subr.mxu0 0.0
    %2895 = vmatpush1.msra.mxu0 0.0
    %2896 = vmatprep.subr.mxu0 0.0
    %2897 = vmatpush1.msra.mxu0 0.0
    %2898 = vmatprep.subr.mxu0 0.0
    %2899 = vmatpush1.msra.mxu0 0.0
    %2900 = vmatprep.subr.mxu0 0.0
    %2901 = vmatpush1.msra.mxu0 0.0
    %2902 = vmatprep.subr.mxu0 0.0
    %2903 = vmatpush1.msra.mxu0 0.0
    %2904 = vmatprep.subr.mxu0 0.0
    %2905 = vmatpush1.msra.mxu0 0.0
    %2906 = vmatprep.subr.mxu0 0.0
    %2907 = vmatpush1.msra.mxu0 0.0
    %2908 = vmatprep.subr.mxu0 0.0
    %2909 = vmatpush1.msra.mxu0 %v2666
    %2910 = vmatprep.subr.mxu0 0.0
    %2911 = vmatpush1.msra.mxu0 %v2665
    %2912 = vmatprep.subr.mxu0 0.0
    %2913 = vmatpush1.msra.mxu0 %v2664
    %2914 = vmatprep.subr.mxu0 0.0
    %2915 = vmatpush1.msra.mxu0 %v2663
    %2916 = vmatprep.subr.mxu0 0.0
    %2917 = vmatpush2.msra.mxu0 0.0
    %2918 = vmatprep.subr.mxu0 0.0
    %2919 = vmatpush2.msra.mxu0 0.0
    %2920 = vmatprep.subr.mxu0 0.0
    %2921 = vmatpush2.msra.mxu0 0.0
    %2922 = vmatprep.subr.mxu0 0.0
    %2923 = vmatpush2.msra.mxu0 0.0
    %2924 = vmatprep.subr.mxu0 0.0
    %2925 = vmatpush2.msra.mxu0 0.0
    %2926 = vmatprep.subr.mxu0 0.0
    %2927 = vmatpush2.msra.mxu0 0.0
    %2928 = vmatprep.subr.mxu0 0.0
    %2929 = vmatpush2.msra.mxu0 0.0
    %2930 = vmatprep.subr.mxu0 0.0
    %2931 = vmatpush2.msra.mxu0 0.0
    %2932 = vmatprep.subr.mxu0 0.0
    %2933 = vmatpush2.msra.mxu0 0.0
    %2934 = vmatprep.subr.mxu0 0.0
    %2935 = vmatpush2.msra.mxu0 0.0
    %2936 = vmatprep.subr.mxu0 0.0
    %2937 = vmatpush2.msra.mxu0 0.0
    %2938 = vmatprep.subr.mxu0 0.0
    %2939 = vmatpush2.msra.mxu0 0.0
    %2940 = vmatprep.subr.mxu0 0.0
    %2941 = vmatpush2.msra.mxu0 0.0
    %2942 = vmatprep.subr.mxu0 0.0
    %2943 = vmatpush2.msra.mxu0 0.0
    %2944 = vmatprep.subr.mxu0 0.0
    %2945 = vmatpush2.msra.mxu0 0.0
    %2946 = vmatprep.subr.mxu0 0.0
    %2947 = vmatpush2.msra.mxu0 0.0
    %2948 = vmatprep.mubr.f32.mxu0 0.0
    %2949 = vmatmul.mubr.f32.gmra.mxu0 %v2861
    %v2950 = vpop.f32.mrf.mxu0
    %v2951 = vadd.f32 %v2859, %v2950
    %v2952 = vpop.f32.mrf.mxu0
    %2953 = vmatprep.mubr.f32.mxu0 0.0
    %2954 = vmatmul.mubr.f32.gmra.mxu0 %v2864
    %v2955 = vpop.f32.mrf.mxu0
    %v2956 = vadd.f32 %v2859, %v2955
    %v2957 = vpop.f32.mrf.mxu0
    %2958 = vmatprep.mubr.f32.mxu0 0.0
    %2959 = vmatmul.mubr.f32.gmra.mxu0 %v2867
    %v2960 = vpop.f32.mrf.mxu0
    %v2961 = vadd.f32 %v2859, %v2960
    %v2962 = vpop.f32.mrf.mxu0
    %2963 = vmatprep.mubr.f32.mxu0 0.0
    %2964 = vmatmul.mubr.f32.gmra.mxu0 %v2870
    %v2965 = vpop.f32.mrf.mxu0
    %v2966 = vadd.f32 %v2859, %v2965
    %v2967 = vpop.f32.mrf.mxu0
    %2968 = vmatprep.mubr.f32.mxu0 0.0
    %2969 = vmatmul.mubr.f32.gmra.mxu0 %v2873
    %v2970 = vpop.f32.mrf.mxu0
    %v2971 = vadd.f32 %v2859, %v2970
    %v2972 = vpop.f32.mrf.mxu0
    %2973 = vmatprep.mubr.f32.mxu0 0.0
    %2974 = vmatmul.mubr.f32.gmra.mxu0 %v2876
    %v2975 = vpop.f32.mrf.mxu0
    %v2976 = vadd.f32 %v2859, %v2975
    %v2977 = vpop.f32.mrf.mxu0
    %2978 = vmatprep.mubr.f32.mxu0 0.0
    %2979 = vmatmul.mubr.f32.gmra.mxu0 %v2879
    %v2980 = vpop.f32.mrf.mxu0
    %v2981 = vadd.f32 %v2859, %v2980
    %v2982 = vpop.f32.mrf.mxu0
    %2983 = vmatprep.mubr.f32.mxu0 0.0
    %2984 = vmatmul.mubr.f32.gmra.mxu0 %v2882
    %v2985 = vpop.f32.mrf.mxu0
    %v2986 = vadd.f32 %v2859, %v2985
    %v2987 = vpop.f32.mrf.mxu0
    %2988 = vdwg.mxu0
    %v2989 = vxor.u32 %v2951, 2147483648
    %v2990 = vxor.u32 %v2956, 2147483648
    %v2991 = vxor.u32 %v2961, 2147483648
    %v2992 = vxor.u32 %v2966, 2147483648
    %v2993 = vxor.u32 %v2971, 2147483648
    %v2994 = vxor.u32 %v2976, 2147483648
    %v2995 = vxor.u32 %v2981, 2147483648
    %v2996 = vxor.u32 %v2986, 2147483648
    %v2997 = vmul.f32 %v2989, 1.442695
    %v2998 = vpow.pop %v2997
    %v2999 = vmul.f32 %v2990, 1.442695
    %v3000 = vpow.pop %v2999
    %v3001 = vmul.f32 %v2991, 1.442695
    %v3002 = vpow.pop %v3001
    %v3003 = vmul.f32 %v2992, 1.442695
    %v3004 = vpow.pop %v3003
    %v3005 = vmul.f32 %v2993, 1.442695
    %v3006 = vpow.pop %v3005
    %v3007 = vmul.f32 %v2994, 1.442695
    %v3008 = vpow.pop %v3007
    %v3009 = vmul.f32 %v2995, 1.442695
    %v3010 = vpow.pop %v3009
    %v3011 = vmul.f32 %v2996, 1.442695
    %v3012 = vpow.pop %v3011
    %v3013 = vadd.f32 %v2998, 1.0
    %v3014 = vadd.f32 %v3000, 1.0
    %v3015 = vadd.f32 %v3002, 1.0
    %v3016 = vadd.f32 %v3004, 1.0
    %v3017 = vadd.f32 %v3006, 1.0
    %v3018 = vadd.f32 %v3008, 1.0
    %v3019 = vadd.f32 %v3010, 1.0
    %v3020 = vadd.f32 %v3012, 1.0
    %v3021 = vrcp.pop %v3013
    %v3022 = vmul.f32 1.0, %v3021
    %v3023 = vrcp.pop %v3014
    %v3024 = vmul.f32 1.0, %v3023
    %v3025 = vrcp.pop %v3015
    %v3026 = vmul.f32 1.0, %v3025
    %v3027 = vrcp.pop %v3016
    %v3028 = vmul.f32 1.0, %v3027
    %v3029 = vrcp.pop %v3017
    %v3030 = vmul.f32 1.0, %v3029
    %v3031 = vrcp.pop %v3018
    %v3032 = vmul.f32 1.0, %v3031
    %v3033 = vrcp.pop %v3019
    %v3034 = vmul.f32 1.0, %v3033
    %v3035 = vrcp.pop %v3020
    %v3036 = vmul.f32 1.0, %v3035
    %v3037 = vmul.f32 %v2951, %v3022
    %v3038 = vmul.f32 %v2956, %v3024
    %v3039 = vmul.f32 %v2961, %v3026
    %v3040 = vmul.f32 %v2966, %v3028
    %v3041 = vmul.f32 %v2971, %v3030
    %v3042 = vmul.f32 %v2976, %v3032
    %v3043 = vmul.f32 %v2981, %v3034
    %v3044 = vmul.f32 %v2986, %v3036
    %v3045 = vadd.f32 %v2651, %v3037
    %v3046 = vadd.f32 %v2652, %v3038
    %v3047 = vadd.f32 %v2653, %v3039
    %v3048 = vadd.f32 %v2654, %v3040
    %v3049 = vadd.f32 %v2655, %v3041
    %v3050 = vadd.f32 %v2656, %v3042
    %v3051 = vadd.f32 %v2657, %v3043
    %v3052 = vadd.f32 %v2658, %v3044
    %3061 = vrot.lane.b32.xlu0 %v3045, 32
    %v3062 = vpop.permute.xlu0 %3061
    %3063 = vrot.lane.b32.xlu0 %v3046, 32
    %v3064 = vpop.permute.xlu0 %3063
    %3065 = vrot.lane.b32.xlu0 %v3047, 32
    %v3066 = vpop.permute.xlu0 %3065
    %3067 = vrot.lane.b32.xlu0 %v3048, 32
    %v3068 = vpop.permute.xlu0 %3067
    %3069 = vrot.lane.b32.xlu0 %v3049, 32
    %v3070 = vpop.permute.xlu0 %3069
    %3071 = vrot.lane.b32.xlu0 %v3050, 32
    %v3072 = vpop.permute.xlu0 %3071
    %3073 = vrot.lane.b32.xlu0 %v3051, 32
    %v3074 = vpop.permute.xlu0 %3073
    %3075 = vrot.lane.b32.xlu0 %v3052, 32
    %v3076 = vpop.permute.xlu0 %3075
    %v3085 = vmul.f32 %v281, %v3062
    %v3086 = vmul.f32 %v286, %v3064
    %v3087 = vmul.f32 %v291, %v3066
    %v3088 = vmul.f32 %v296, %v3068
    %v3089 = vmul.f32 %v301, %v3070
    %v3090 = vmul.f32 %v306, %v3072
    %v3091 = vmul.f32 %v311, %v3074
    %v3092 = vmul.f32 %v316, %v3076
    %v3093 = vsel %vm58, %v3045, 0.0
    %3094 = vadd.xlane.f32.xlu0 %v3093
    %v3095 = vpop.xlane.xlu0 %3094
    %v3096 = vsel %vm58, %v3046, 0.0
    %3097 = vadd.xlane.f32.xlu0 %v3096
    %v3098 = vpop.xlane.xlu0 %3097
    %v3099 = vsel %vm58, %v3047, 0.0
    %3100 = vadd.xlane.f32.xlu0 %v3099
    %v3101 = vpop.xlane.xlu0 %3100
    %v3102 = vsel %vm58, %v3048, 0.0
    %3103 = vadd.xlane.f32.xlu0 %v3102
    %v3104 = vpop.xlane.xlu0 %3103
    %v3105 = vsel %vm58, %v3049, 0.0
    %3106 = vadd.xlane.f32.xlu0 %v3105
    %v3107 = vpop.xlane.xlu0 %3106
    %v3108 = vsel %vm58, %v3050, 0.0
    %3109 = vadd.xlane.f32.xlu0 %v3108
    %v3110 = vpop.xlane.xlu0 %3109
    %v3111 = vsel %vm58, %v3051, 0.0
    %3112 = vadd.xlane.f32.xlu0 %v3111
    %v3113 = vpop.xlane.xlu0 %3112
    %v3114 = vsel %vm58, %v3052, 0.0
    %3115 = vadd.xlane.f32.xlu0 %v3114
    %v3116 = vpop.xlane.xlu0 %3115
    %v3117 = vrcp.pop 32.0
    %v3118 = vmul.f32 %v3095, %v3117
    %v3119 = vmul.f32 %v3098, %v3117
    %v3120 = vmul.f32 %v3101, %v3117
    %v3121 = vmul.f32 %v3104, %v3117
    %v3122 = vmul.f32 %v3107, %v3117
    %v3123 = vmul.f32 %v3110, %v3117
    %v3124 = vmul.f32 %v3113, %v3117
    %v3125 = vmul.f32 %v3116, %v3117
    %v3126 = vsub.f32 %v3045, %v3118
    %v3127 = vsub.f32 %v3046, %v3119
    %v3128 = vsub.f32 %v3047, %v3120
    %v3129 = vsub.f32 %v3048, %v3121
    %v3130 = vsub.f32 %v3049, %v3122
    %v3131 = vsub.f32 %v3050, %v3123
    %v3132 = vsub.f32 %v3051, %v3124
    %v3133 = vsub.f32 %v3052, %v3125
    %v3134 = vmul.f32 %v3126, %v3126
    %v3135 = vmul.f32 %v3127, %v3127
    %v3136 = vmul.f32 %v3128, %v3128
    %v3137 = vmul.f32 %v3129, %v3129
    %v3138 = vmul.f32 %v3130, %v3130
    %v3139 = vmul.f32 %v3131, %v3131
    %v3140 = vmul.f32 %v3132, %v3132
    %v3141 = vmul.f32 %v3133, %v3133
    %v3142 = vsel %vm58, %v3134, 0.0
    %3143 = vadd.xlane.f32.xlu0 %v3142
    %v3144 = vpop.xlane.xlu0 %3143
    %v3145 = vsel %vm58, %v3135, 0.0
    %3146 = vadd.xlane.f32.xlu0 %v3145
    %v3147 = vpop.xlane.xlu0 %3146
    %v3148 = vsel %vm58, %v3136, 0.0
    %3149 = vadd.xlane.f32.xlu0 %v3148
    %v3150 = vpop.xlane.xlu0 %3149
    %v3151 = vsel %vm58, %v3137, 0.0
    %3152 = vadd.xlane.f32.xlu0 %v3151
    %v3153 = vpop.xlane.xlu0 %3152
    %v3154 = vsel %vm58, %v3138, 0.0
    %3155 = vadd.xlane.f32.xlu0 %v3154
    %v3156 = vpop.xlane.xlu0 %3155
    %v3157 = vsel %vm58, %v3139, 0.0
    %3158 = vadd.xlane.f32.xlu0 %v3157
    %v3159 = vpop.xlane.xlu0 %3158
    %v3160 = vsel %vm58, %v3140, 0.0
    %3161 = vadd.xlane.f32.xlu0 %v3160
    %v3162 = vpop.xlane.xlu0 %3161
    %v3163 = vsel %vm58, %v3141, 0.0
    %3164 = vadd.xlane.f32.xlu0 %v3163
    %v3165 = vpop.xlane.xlu0 %3164
    %v3166 = vmul.f32 %v3144, %v3117
    %v3167 = vmul.f32 %v3147, %v3117
    %v3168 = vmul.f32 %v3150, %v3117
    %v3169 = vmul.f32 %v3153, %v3117
    %v3170 = vmul.f32 %v3156, %v3117
    %v3171 = vmul.f32 %v3159, %v3117
    %v3172 = vmul.f32 %v3162, %v3117
    %v3173 = vmul.f32 %v3165, %v3117
    %v3174 = vadd.f32 %v3166, 1e-05
    %v3175 = vadd.f32 %v3167, 1e-05
    %v3176 = vadd.f32 %v3168, 1e-05
    %v3177 = vadd.f32 %v3169, 1e-05
    %v3178 = vadd.f32 %v3170, 1e-05
    %v3179 = vadd.f32 %v3171, 1e-05
    %v3180 = vadd.f32 %v3172, 1e-05
    %v3181 = vadd.f32 %v3173, 1e-05
    %v3182 = vrsqrt.pop %v3174
    %v3183 = vrsqrt.pop %v3175
    %v3184 = vrsqrt.pop %v3176
    %v3185 = vrsqrt.pop %v3177
    %v3186 = vrsqrt.pop %v3178
    %v3187 = vrsqrt.pop %v3179
    %v3188 = vrsqrt.pop %v3180
    %v3189 = vrsqrt.pop %v3181
    %v3190 = vmul.f32 %v3126, %v3182
    %v3191 = vmul.f32 %v3127, %v3183
    %v3192 = vmul.f32 %v3128, %v3184
    %v3193 = vmul.f32 %v3129, %v3185
    %v3194 = vmul.f32 %v3130, %v3186
    %v3195 = vmul.f32 %v3131, %v3187
    %v3196 = vmul.f32 %v3132, %v3188
    %v3197 = vmul.f32 %v3133, %v3189
    %v3198 = vlaneseq
    %v3199 = vshrl.u32 %v3198, 7
    %v3200 = vsub.s32 3, %v3199
    %v3201 = vrot.slane %v52, %v3200
    %v3202 = vmul.f32 %v3190, %v3201
    %v3203 = vmul.f32 %v3191, %v3201
    %v3204 = vmul.f32 %v3192, %v3201
    %v3205 = vmul.f32 %v3193, %v3201
    %v3206 = vmul.f32 %v3194, %v3201
    %v3207 = vmul.f32 %v3195, %v3201
    %v3208 = vmul.f32 %v3196, %v3201
    %v3209 = vmul.f32 %v3197, %v3201
    %v3210 = vlaneseq
    %v3211 = vshrl.u32 %v3210, 7
    %v3212 = vsub.s32 4, %v3211
    %v3213 = vrot.slane %v52, %v3212
    %v3214 = vadd.f32 %v3202, %v3213
    %v3215 = vadd.f32 %v3203, %v3213
    %v3216 = vadd.f32 %v3204, %v3213
    %v3217 = vadd.f32 %v3205, %v3213
    %v3218 = vadd.f32 %v3206, %v3213
    %v3219 = vadd.f32 %v3207, %v3213
    %v3220 = vadd.f32 %v3208, %v3213
    %v3221 = vadd.f32 %v3209, %v3213
    %3230 = vrot.lane.b32.xlu0 %v3085, 96
    %v3231 = vpop.permute.xlu0 %3230
    %3232 = vrot.lane.b32.xlu0 %v3086, 96
    %v3233 = vpop.permute.xlu0 %3232
    %3234 = vrot.lane.b32.xlu0 %v3087, 96
    %v3235 = vpop.permute.xlu0 %3234
    %3236 = vrot.lane.b32.xlu0 %v3088, 96
    %v3237 = vpop.permute.xlu0 %3236
    %3238 = vrot.lane.b32.xlu0 %v3089, 96
    %v3239 = vpop.permute.xlu0 %3238
    %3240 = vrot.lane.b32.xlu0 %v3090, 96
    %v3241 = vpop.permute.xlu0 %3240
    %3242 = vrot.lane.b32.xlu0 %v3091, 96
    %v3243 = vpop.permute.xlu0 %3242
    %3244 = vrot.lane.b32.xlu0 %v3092, 96
    %v3245 = vpop.permute.xlu0 %3244
    %v3254 = vsel %vm58, %v3231, 0.0
    %3255 = vadd.xlane.f32.xlu0 %v3254
    %v3256 = vpop.xlane.xlu0 %3255
    %v3257 = vsel %vm58, %v3233, 0.0
    %3258 = vadd.xlane.f32.xlu0 %v3257
    %v3259 = vpop.xlane.xlu0 %3258
    %v3260 = vsel %vm58, %v3235, 0.0
    %3261 = vadd.xlane.f32.xlu0 %v3260
    %v3262 = vpop.xlane.xlu0 %3261
    %v3263 = vsel %vm58, %v3237, 0.0
    %3264 = vadd.xlane.f32.xlu0 %v3263
    %v3265 = vpop.xlane.xlu0 %3264
    %v3266 = vsel %vm58, %v3239, 0.0
    %3267 = vadd.xlane.f32.xlu0 %v3266
    %v3268 = vpop.xlane.xlu0 %3267
    %v3269 = vsel %vm58, %v3241, 0.0
    %3270 = vadd.xlane.f32.xlu0 %v3269
    %v3271 = vpop.xlane.xlu0 %3270
    %v3272 = vsel %vm58, %v3243, 0.0
    %3273 = vadd.xlane.f32.xlu0 %v3272
    %v3274 = vpop.xlane.xlu0 %3273
    %v3275 = vsel %vm58, %v3245, 0.0
    %3276 = vadd.xlane.f32.xlu0 %v3275
    %v3277 = vpop.xlane.xlu0 %3276
    %v3278 = vmul.f32 %v3256, %v3117
    %v3279 = vmul.f32 %v3259, %v3117
    %v3280 = vmul.f32 %v3262, %v3117
    %v3281 = vmul.f32 %v3265, %v3117
    %v3282 = vmul.f32 %v3268, %v3117
    %v3283 = vmul.f32 %v3271, %v3117
    %v3284 = vmul.f32 %v3274, %v3117
    %v3285 = vmul.f32 %v3277, %v3117
    %v3286 = vsub.f32 %v3085, %v3278
    %v3287 = vsub.f32 %v3086, %v3279
    %v3288 = vsub.f32 %v3087, %v3280
    %v3289 = vsub.f32 %v3088, %v3281
    %v3290 = vsub.f32 %v3089, %v3282
    %v3291 = vsub.f32 %v3090, %v3283
    %v3292 = vsub.f32 %v3091, %v3284
    %v3293 = vsub.f32 %v3092, %v3285
    %v3294 = vmul.f32 %v3286, %v3286
    %v3295 = vmul.f32 %v3287, %v3287
    %v3296 = vmul.f32 %v3288, %v3288
    %v3297 = vmul.f32 %v3289, %v3289
    %v3298 = vmul.f32 %v3290, %v3290
    %v3299 = vmul.f32 %v3291, %v3291
    %v3300 = vmul.f32 %v3292, %v3292
    %v3301 = vmul.f32 %v3293, %v3293
    %3310 = vrot.lane.b32.xlu0 %v3294, 96
    %v3311 = vpop.permute.xlu0 %3310
    %3312 = vrot.lane.b32.xlu0 %v3295, 96
    %v3313 = vpop.permute.xlu0 %3312
    %3314 = vrot.lane.b32.xlu0 %v3296, 96
    %v3315 = vpop.permute.xlu0 %3314
    %3316 = vrot.lane.b32.xlu0 %v3297, 96
    %v3317 = vpop.permute.xlu0 %3316
    %3318 = vrot.lane.b32.xlu0 %v3298, 96
    %v3319 = vpop.permute.xlu0 %3318
    %3320 = vrot.lane.b32.xlu0 %v3299, 96
    %v3321 = vpop.permute.xlu0 %3320
    %3322 = vrot.lane.b32.xlu0 %v3300, 96
    %v3323 = vpop.permute.xlu0 %3322
    %3324 = vrot.lane.b32.xlu0 %v3301, 96
    %v3325 = vpop.permute.xlu0 %3324
    %v3334 = vsel %vm58, %v3311, 0.0
    %3335 = vadd.xlane.f32.xlu0 %v3334
    %v3336 = vpop.xlane.xlu0 %3335
    %v3337 = vsel %vm58, %v3313, 0.0
    %3338 = vadd.xlane.f32.xlu0 %v3337
    %v3339 = vpop.xlane.xlu0 %3338
    %v3340 = vsel %vm58, %v3315, 0.0
    %3341 = vadd.xlane.f32.xlu0 %v3340
    %v3342 = vpop.xlane.xlu0 %3341
    %v3343 = vsel %vm58, %v3317, 0.0
    %3344 = vadd.xlane.f32.xlu0 %v3343
    %v3345 = vpop.xlane.xlu0 %3344
    %v3346 = vsel %vm58, %v3319, 0.0
    %3347 = vadd.xlane.f32.xlu0 %v3346
    %v3348 = vpop.xlane.xlu0 %3347
    %v3349 = vsel %vm58, %v3321, 0.0
    %3350 = vadd.xlane.f32.xlu0 %v3349
    %v3351 = vpop.xlane.xlu0 %3350
    %v3352 = vsel %vm58, %v3323, 0.0
    %3353 = vadd.xlane.f32.xlu0 %v3352
    %v3354 = vpop.xlane.xlu0 %3353
    %v3355 = vsel %vm58, %v3325, 0.0
    %3356 = vadd.xlane.f32.xlu0 %v3355
    %v3357 = vpop.xlane.xlu0 %3356
    %v3358 = vmul.f32 %v3336, %v3117
    %v3359 = vmul.f32 %v3339, %v3117
    %v3360 = vmul.f32 %v3342, %v3117
    %v3361 = vmul.f32 %v3345, %v3117
    %v3362 = vmul.f32 %v3348, %v3117
    %v3363 = vmul.f32 %v3351, %v3117
    %v3364 = vmul.f32 %v3354, %v3117
    %v3365 = vmul.f32 %v3357, %v3117
    %v3366 = vadd.f32 %v3358, 1e-05
    %v3367 = vadd.f32 %v3359, 1e-05
    %v3368 = vadd.f32 %v3360, 1e-05
    %v3369 = vadd.f32 %v3361, 1e-05
    %v3370 = vadd.f32 %v3362, 1e-05
    %v3371 = vadd.f32 %v3363, 1e-05
    %v3372 = vadd.f32 %v3364, 1e-05
    %v3373 = vadd.f32 %v3365, 1e-05
    %v3374 = vrsqrt.pop %v3366
    %v3375 = vrsqrt.pop %v3367
    %v3376 = vrsqrt.pop %v3368
    %v3377 = vrsqrt.pop %v3369
    %v3378 = vrsqrt.pop %v3370
    %v3379 = vrsqrt.pop %v3371
    %v3380 = vrsqrt.pop %v3372
    %v3381 = vrsqrt.pop %v3373
    %v3382 = vmul.f32 %v3286, %v3374
    %v3383 = vmul.f32 %v3287, %v3375
    %v3384 = vmul.f32 %v3288, %v3376
    %v3385 = vmul.f32 %v3289, %v3377
    %v3386 = vmul.f32 %v3290, %v3378
    %v3387 = vmul.f32 %v3291, %v3379
    %v3388 = vmul.f32 %v3292, %v3380
    %v3389 = vmul.f32 %v3293, %v3381
    %v3390 = vlaneseq
    %v3391 = vshrl.u32 %v3390, 7
    %v3392 = vsub.s32 5, %v3391
    %v3393 = vrot.slane %v52, %v3392
    %3395 = vrot.lane.b32.xlu0 %v3393, 32
    %v3396 = vpop.permute.xlu0 %3395
    %v3398 = vmul.f32 %v3382, %v3396
    %v3399 = vmul.f32 %v3383, %v3396
    %v3400 = vmul.f32 %v3384, %v3396
    %v3401 = vmul.f32 %v3385, %v3396
    %v3402 = vmul.f32 %v3386, %v3396
    %v3403 = vmul.f32 %v3387, %v3396
    %v3404 = vmul.f32 %v3388, %v3396
    %v3405 = vmul.f32 %v3389, %v3396
    %v3406 = vlaneseq
    %v3407 = vshrl.u32 %v3406, 7
    %v3408 = vsub.s32 6, %v3407
    %v3409 = vrot.slane %v52, %v3408
    %3411 = vrot.lane.b32.xlu0 %v3409, 32
    %v3412 = vpop.permute.xlu0 %3411
    %v3414 = vadd.f32 %v3398, %v3412
    %v3415 = vadd.f32 %v3399, %v3412
    %v3416 = vadd.f32 %v3400, %v3412
    %v3417 = vadd.f32 %v3401, %v3412
    %v3418 = vadd.f32 %v3402, %v3412
    %v3419 = vadd.f32 %v3403, %v3412
    %v3420 = vadd.f32 %v3404, %v3412
    %v3421 = vadd.f32 %v3405, %v3412
    %v3422 = vsel %vm58, %v3214, %v3414
    %v3423 = vsel %vm58, %v3215, %v3415
    %v3424 = vsel %vm58, %v3216, %v3416
    %v3425 = vsel %vm58, %v3217, %v3417
    %v3426 = vsel %vm58, %v3218, %v3418
    %v3427 = vsel %vm58, %v3219, %v3419
    %v3428 = vsel %vm58, %v3220, %v3420
    %v3429 = vsel %vm58, %v3221, %v3421
    %3430 = vst.msk [vmem:[#allocation2] sm:$0xff] %vm1132, %v3422
    %3431 = vst.msk [vmem:[#allocation2 + $0x8] sm:$0xff] %vm1132, %v3423
    %3432 = vst.msk [vmem:[#allocation2 + $0x10] sm:$0xff] %vm1132, %v3424
    %3433 = vst.msk [vmem:[#allocation2 + $0x18] sm:$0xff] %vm1132, %v3425
    %3434 = vst.msk [vmem:[#allocation2 + $0x20] sm:$0xff] %vm1132, %v3426
    %3435 = vst.msk [vmem:[#allocation2 + $0x28] sm:$0xff] %vm1132, %v3427
    %3436 = vst.msk [vmem:[#allocation2 + $0x30] sm:$0xff] %vm1132, %v3428
    %3437 = vst.msk [vmem:[#allocation2 + $0x38] sm:$0xff] %vm1132, %v3429
    // Predicated region
    $region42: #{tpu_custom_call.1} parent=1 // pred_check
      _
    $region43: #{tpu_custom_call.1} parent=1 // pred_check_branch
      %3439 = sbr.rel (0) target = $region45
    $region44: #{tpu_custom_call.1} parent=1 // pred_region
      %s3441 = ssub.s32 1024, 1024
      %3442 = vsyncadd [#allocation3], %s3441
      %s3443 = sshll.u32 [#allocation2], 4
      %s3444 = int_to_ptr.vmem [resolvable:$true] %s3443
      %3449 = dma.vmem_to_hbm [thread:$0]  %s3444, 1024, %s10, [#allocation3], 128, 128, 8
    $region45: #{tpu_custom_call.1} parent=1 // pred_fallthru
      _
    // Predicated region
    $region46: #{tpu_custom_call.1} parent=1 // pred_check
      _
    $region47: #{tpu_custom_call.1} parent=1 // pred_check_branch
      %3451 = sbr.rel (0) target = $region49
    $region48: #{tpu_custom_call.1} parent=1 // pred_region
      %3452 = dma.done [#allocation3], 1024
    $region49: #{tpu_custom_call.1} parent=1 // pred_fallthru
      _
    %3453 = vsyncpa [#allocation3], 1

</llo_original>
